<compile_context>
chip_gen: v5e
topology: v5e:2x2
jax: 0.10.0
libtpu: 0.0.40
codegen_flags: <defaults>
</compile_context>

<pallas_src>
import jax
import jax.numpy as jnp
from jax.experimental import pallas as pl
from jax.experimental.pallas import tpu as pltpu

# ----------------------------- configuration --------------------------------
BATCH = 512          # benchmark batch (multiple of batch_tile)
BATCH_TILE = 128     # rows per grid step: fills MXU M dim, 4 grid steps
INPUT_DIM = 16
HIDDEN = 32          # d_model
FFN = HIDDEN * 2     # dim_feedforward
NUM_LAYERS = 2
NUM_HEADS = 4        # unused in math (seq_len == 1), kept for parameter shapes
HEAD_HIDDEN = 64
LN_EPS = 1e-5

VEC_W = max(HIDDEN, FFN, HEAD_HIDDEN)      # 64: lane width of packed vec buffer
VEC_ROWS = 1 + 7 * NUM_LAYERS + 3          # bemb + 7/layer + (bh1, wh2_row, bh2)
HEAD_BASE = 1 + 7 * NUM_LAYERS


# ------------------------------- kernel --------------------------------------
def _layernorm(x, gamma, beta):
    mu = jnp.mean(x, axis=-1, keepdims=True)
    xc = x - mu
    var = jnp.mean(xc * xc, axis=-1, keepdims=True)
    inv = jax.lax.rsqrt(var + LN_EPS)
    return xc * inv * gamma + beta


def _gelu_exact(x):
    # PyTorch activation='gelu' uses the exact erf formulation.
    return 0.5 * x * (1.0 + jax.lax.erf(x * 0.7071067811865476))


def tab_transformer_kernel(
    x_ref,        # (TB, INPUT_DIM)
    wemb_ref,     # (INPUT_DIM, H)
    wattn_ref,    # (L, H, H)   folded Wv @ Wo
    w1_ref,       # (L, H, FFN)
    w2_ref,       # (L, FFN, H)
    wh1_ref,      # (H, HEAD_HIDDEN)
    vecs_ref,     # (VEC_ROWS, VEC_W)  packed biases / LN params / head-2
    out_ref,      # (1, TB)  batch on lanes (lane-dense store)
):
    def vec(row, width):
        return vecs_ref[row:row + 1, 0:width]          # (1, width), static slice

    # embedding
    h = (
        jnp.dot(x_ref[...], wemb_ref[...], preferred_element_type=jnp.float32)
        + vec(0, HIDDEN)
    )

    # transformer encoder layers (post-norm, seq_len == 1)
    for l in range(NUM_LAYERS):
        base = 1 + 7 * l
        b_attn = vec(base + 0, HIDDEN)
        ln1g = vec(base + 1, HIDDEN)
        ln1b = vec(base + 2, HIDDEN)
        b1 = vec(base + 3, FFN)
        b2 = vec(base + 4, HIDDEN)
        ln2g = vec(base + 5, HIDDEN)
        ln2b = vec(base + 6, HIDDEN)

        # --- self attention (seq_len == 1): out_proj(V) with folded weights
        attn = jnp.dot(h, wattn_ref[l], preferred_element_type=jnp.float32) + b_attn
        h = _layernorm(h + attn, ln1g, ln1b)

        # --- feed forward: linear2(gelu(linear1(x)))
        ff = jnp.dot(h, w1_ref[l], preferred_element_type=jnp.float32) + b1
        ff = _gelu_exact(ff)
        ff = jnp.dot(ff, w2_ref[l], preferred_element_type=jnp.float32) + b2
        h = _layernorm(h + ff, ln2g, ln2b)

    # head: Linear(H, 64) -> ReLU -> Dropout(identity) -> Linear(64, 1)
    bh1 = vec(HEAD_BASE + 0, HEAD_HIDDEN)
    wh2_row = vec(HEAD_BASE + 1, HEAD_HIDDEN)          # (1, 64) transposed weight
    bh2 = vecs_ref[HEAD_BASE + 2:HEAD_BASE + 3, 0:1]   # (1, 1) scalar bias

    hh = jnp.maximum(
        jnp.dot(h, wh1_ref[...], preferred_element_type=jnp.float32) + bh1, 0.0
    )
    # lane-dense epilogue: (1, 64) x (TB, 64) contracting last dims -> (1, TB)
    out_ref[...] = (
        jnp.einsum("od,td->ot", wh2_row, hh, preferred_element_type=jnp.float32)
        + bh2
    )


# -------------------------- host-side param packing ---------------------------
def pack_params(params):
    (wemb, bemb, wv, bv, wo, bo, ln1g, ln1b,
     w1, b1, w2, b2, ln2g, ln2b, wh1, bh1, wh2, bh2) = params

    # Fold attention pair: out = (h @ Wv + bv) @ Wo + bo == h @ (Wv@Wo) + (bv@Wo + bo)
    w_attn = jnp.einsum("lij,ljk->lik", wv, wo)                    # (L, H, H)
    b_attn = jnp.einsum("lij,ljk->lik", bv, wo) + bo               # (L, 1, H)

    def pad_row(v):
        v = jnp.asarray(v, jnp.float32).reshape(1, -1)
        return jnp.pad(v, ((0, 0), (0, VEC_W - v.shape[1])))

    rows = [pad_row(bemb)]
    for l in range(NUM_LAYERS):
        rows += [pad_row(b_attn[l]), pad_row(ln1g[l]), pad_row(ln1b[l]),
                 pad_row(b1[l]), pad_row(b2[l]), pad_row(ln2g[l]), pad_row(ln2b[l])]
    rows += [pad_row(bh1), pad_row(wh2.reshape(1, -1)), pad_row(bh2)]
    vecs = jnp.concatenate(rows, axis=0)                           # (VEC_ROWS, VEC_W)
    assert vecs.shape == (VEC_ROWS, VEC_W)

    return wemb, w_attn, w1, w2, wh1, vecs


# ------------------------------- wrapper --------------------------------------
def tab_transformer_forward(x, params, *, batch_tile=BATCH_TILE):
    B, _ = x.shape
    assert B % batch_tile == 0 and batch_tile % 8 == 0

    wemb, w_attn, w1, w2, wh1, vecs = pack_params(params)

    def rep(shape):
        # weight blocks: full array, constant block index (no re-DMA across steps)
        return pl.BlockSpec(shape, lambda i, s=len(shape): (0,) * s)

    in_specs = [
        pl.BlockSpec((batch_tile, INPUT_DIM), lambda i: (i, 0)),   # x
        rep((INPUT_DIM, HIDDEN)),                                  # embedding W
        rep((NUM_LAYERS, HIDDEN, HIDDEN)),                         # folded attn W
        rep((NUM_LAYERS, HIDDEN, FFN)),                            # FFN W1
        rep((NUM_LAYERS, FFN, HIDDEN)),                            # FFN W2
        rep((HIDDEN, HEAD_HIDDEN)),                                # head W1
        rep((VEC_ROWS, VEC_W)),                                    # packed vectors
    ]
    # lane-dense output: (1, B) with batch on lanes, full-width vst per block
    out_spec = pl.BlockSpec((1, batch_tile), lambda i: (0, i))

    fn = pl.pallas_call(
        tab_transformer_kernel,
        out_shape=jax.ShapeDtypeStruct((1, B), jnp.float32),
        grid_spec=pltpu.PrefetchScalarGridSpec(
            num_scalar_prefetch=0,
            grid=(B // batch_tile,),
            in_specs=in_specs,
            out_specs=out_spec,
        ),
        compiler_params=pltpu.CompilerParams(dimension_semantics=("parallel",)),
    )
    out_row = fn(x, wemb, w_attn, w1, w2, wh1, vecs)               # (1, B)
    return out_row.reshape(B, 1)


# ---------------------- deterministic parameter init --------------------------
def init_params(key):
    ks = iter(jax.random.split(key, 64))

    def w(shape, scale=0.05):
        return (scale * jax.random.normal(next(ks), shape)).astype(jnp.float32)

    wemb = w((INPUT_DIM, HIDDEN))
    bemb = w((1, HIDDEN))

    wv = w((NUM_LAYERS, HIDDEN, HIDDEN))
    bv = w((NUM_LAYERS, 1, HIDDEN))
    wo = w((NUM_LAYERS, HIDDEN, HIDDEN))
    bo = w((NUM_LAYERS, 1, HIDDEN))
    ln1g = jnp.ones((NUM_LAYERS, 1, HIDDEN), jnp.float32)
    ln1b = jnp.zeros((NUM_LAYERS, 1, HIDDEN), jnp.float32)
    w1 = w((NUM_LAYERS, HIDDEN, FFN))
    b1 = w((NUM_LAYERS, 1, FFN))
    w2 = w((NUM_LAYERS, FFN, HIDDEN))
    b2 = w((NUM_LAYERS, 1, HIDDEN))
    ln2g = jnp.ones((NUM_LAYERS, 1, HIDDEN), jnp.float32)
    ln2b = jnp.zeros((NUM_LAYERS, 1, HIDDEN), jnp.float32)

    wh1 = w((HIDDEN, HEAD_HIDDEN))
    bh1 = w((1, HEAD_HIDDEN))
    wh2 = w((HEAD_HIDDEN, 1))
    bh2 = w((1, 1))

    return (wemb, bemb, wv, bv, wo, bo, ln1g, ln1b,
            w1, b1, w2, b2, ln2g, ln2b, wh1, bh1, wh2, bh2)


# ------------------------------ pure-JAX reference -----------------------------
def reference_forward(x, params):
    (wemb, bemb, wv, bv, wo, bo, ln1g, ln1b,
     w1, b1, w2, b2, ln2g, ln2b, wh1, bh1, wh2, bh2) = params

    def ln(x, g, b):
        mu = jnp.mean(x, -1, keepdims=True)
        var = jnp.mean((x - mu) ** 2, -1, keepdims=True)
        return (x - mu) / jnp.sqrt(var + LN_EPS) * g + b

    h = x @ wemb + bemb
    for l in range(NUM_LAYERS):
        v = h @ wv[l] + bv[l]
        attn = v @ wo[l] + bo[l]
        h = ln(h + attn, ln1g[l], ln1b[l])
        ff = h @ w1[l] + b1[l]
        ff = 0.5 * ff * (1.0 + jax.lax.erf(ff * 0.7071067811865476))
        ff = ff @ w2[l] + b2[l]
        h = ln(h + ff, ln2g[l], ln2b[l])
    hh = jnp.maximum(h @ wh1 + bh1, 0.0)
    return hh @ wh2 + bh2


# ----------------------------------- main --------------------------------------
if __name__ == "__main__":
    key = jax.random.PRNGKey(0)
    kx, kp = jax.random.split(key)
    x = jax.random.normal(kx, (BATCH, INPUT_DIM), dtype=jnp.float32)
    params = init_params(kp)

    out = tab_transformer_forward(x, params)
    out = jax.block_until_ready(out)

    ref = reference_forward(x, params)
    assert out.shape == (BATCH, 1)
    # slightly relaxed rtol vs 1e-5: Wv@Wo folding reassociates f32 sums
    assert jnp.allclose(out, ref, rtol=1e-4, atol=1e-5), (
        float(jnp.max(jnp.abs(out - ref))))

    print("KERNEL_OK")
</pallas_src>

<mosaic_0001>
module attributes {stable_mosaic.version = 11 : i64} {
  func.func @tab_transformer_kernel(%arg0: i32, %arg1: memref<128x16xf32, #tpu.memory_space<vmem>>, %arg2: memref<16x32xf32, #tpu.memory_space<vmem>>, %arg3: memref<2x32x32xf32, #tpu.memory_space<vmem>>, %arg4: memref<2x32x64xf32, #tpu.memory_space<vmem>>, %arg5: memref<2x64x32xf32, #tpu.memory_space<vmem>>, %arg6: memref<32x64xf32, #tpu.memory_space<vmem>>, %arg7: memref<18x64xf32, #tpu.memory_space<vmem>>, %arg8: memref<1x128xf32, #tpu.memory_space<vmem>>) attributes {dimension_semantics = [#tpu.dimension_semantics<parallel>], iteration_bounds = array<i64: 4>, scalar_prefetch = 0 : i64, scratch_operands = 0 : i64, tpu.core_type = #tpu.core_type<tc>, window_params = [{transform_indices = @transform_0, window_bounds = array<i64: 128, 16>}, {pipeline_mode = #tpu.pipeline_mode<synchronous>, transform_indices = @transform_1, window_bounds = array<i64: 16, 32>}, {pipeline_mode = #tpu.pipeline_mode<synchronous>, transform_indices = @transform_2, window_bounds = array<i64: 2, 32, 32>}, {pipeline_mode = #tpu.pipeline_mode<synchronous>, transform_indices = @transform_3, window_bounds = array<i64: 2, 32, 64>}, {pipeline_mode = #tpu.pipeline_mode<synchronous>, transform_indices = @transform_4, window_bounds = array<i64: 2, 64, 32>}, {pipeline_mode = #tpu.pipeline_mode<synchronous>, transform_indices = @transform_5, window_bounds = array<i64: 32, 64>}, {pipeline_mode = #tpu.pipeline_mode<synchronous>, transform_indices = @transform_6, window_bounds = array<i64: 18, 64>}, {transform_indices = @transform_7, window_bounds = array<i64: 1, 128>}]} {
    %c0 = arith.constant 0 : index
    %c0_0 = arith.constant 0 : index
    %0 = vector.load %arg1[%c0, %c0_0] : memref<128x16xf32, #tpu.memory_space<vmem>>, vector<128x16xf32>
    %c0_1 = arith.constant 0 : index
    %c0_2 = arith.constant 0 : index
    %1 = vector.load %arg2[%c0_1, %c0_2] : memref<16x32xf32, #tpu.memory_space<vmem>>, vector<16x32xf32>
    %cst = arith.constant dense<0.000000e+00> : vector<128x32xf32>
    %2 = tpu.matmul %0, %1, %cst {dimension_numbers = #tpu.dot_dimension_numbers<[1], [0], [0], [1], [0, 0, 1, 1], [], []>} : vector<128x16xf32>, vector<16x32xf32>, vector<128x32xf32> -> vector<128x32xf32>
    %c0_3 = arith.constant 0 : index
    %c0_4 = arith.constant 0 : index
    %3 = vector.load %arg7[%c0_3, %c0_4] : memref<18x64xf32, #tpu.memory_space<vmem>>, vector<1x32xf32>
    %4 = vector.broadcast %3 : vector<1x32xf32> to vector<128x32xf32>
    %5 = arith.addf %2, %4 : vector<128x32xf32>
    %c1 = arith.constant 1 : index
    %c0_5 = arith.constant 0 : index
    %6 = vector.load %arg7[%c1, %c0_5] : memref<18x64xf32, #tpu.memory_space<vmem>>, vector<1x32xf32>
    %c2 = arith.constant 2 : index
    %c0_6 = arith.constant 0 : index
    %7 = vector.load %arg7[%c2, %c0_6] : memref<18x64xf32, #tpu.memory_space<vmem>>, vector<1x32xf32>
    %c3 = arith.constant 3 : index
    %c0_7 = arith.constant 0 : index
    %8 = vector.load %arg7[%c3, %c0_7] : memref<18x64xf32, #tpu.memory_space<vmem>>, vector<1x32xf32>
    %c4 = arith.constant 4 : index
    %c0_8 = arith.constant 0 : index
    %9 = vector.load %arg7[%c4, %c0_8] : memref<18x64xf32, #tpu.memory_space<vmem>>, vector<1x64xf32>
    %c5 = arith.constant 5 : index
    %c0_9 = arith.constant 0 : index
    %10 = vector.load %arg7[%c5, %c0_9] : memref<18x64xf32, #tpu.memory_space<vmem>>, vector<1x32xf32>
    %c6 = arith.constant 6 : index
    %c0_10 = arith.constant 0 : index
    %11 = vector.load %arg7[%c6, %c0_10] : memref<18x64xf32, #tpu.memory_space<vmem>>, vector<1x32xf32>
    %c7 = arith.constant 7 : index
    %c0_11 = arith.constant 0 : index
    %12 = vector.load %arg7[%c7, %c0_11] : memref<18x64xf32, #tpu.memory_space<vmem>>, vector<1x32xf32>
    %c0_12 = arith.constant 0 : index
    %c0_13 = arith.constant 0 : index
    %c0_14 = arith.constant 0 : index
    %13 = vector.load %arg3[%c0_12, %c0_13, %c0_14] : memref<2x32x32xf32, #tpu.memory_space<vmem>>, vector<1x32x32xf32>
    %14 = vector.shape_cast %13 : vector<1x32x32xf32> to vector<32x32xf32>
    %cst_15 = arith.constant dense<0.000000e+00> : vector<128x32xf32>
    %15 = tpu.matmul %5, %14, %cst_15 {dimension_numbers = #tpu.dot_dimension_numbers<[1], [0], [0], [1], [0, 0, 1, 1], [], []>} : vector<128x32xf32>, vector<32x32xf32>, vector<128x32xf32> -> vector<128x32xf32>
    %16 = vector.broadcast %6 : vector<1x32xf32> to vector<128x32xf32>
    %17 = arith.addf %15, %16 : vector<128x32xf32>
    %18 = arith.addf %5, %17 : vector<128x32xf32>
    %cst_16 = arith.constant dense<0.000000e+00> : vector<128xf32>
    %19 = vector.multi_reduction <add>, %18, %cst_16 [1] : vector<128x32xf32> to vector<128xf32>
    %20 = vector.shape_cast %19 : vector<128xf32> to vector<128x1xf32>
    %cst_17 = arith.constant 3.200000e+01 : f32
    %21 = vector.broadcast %cst_17 : f32 to vector<128x1xf32>
    %22 = arith.divf %20, %21 : vector<128x1xf32>
    %23 = vector.broadcast %22 : vector<128x1xf32> to vector<128x32xf32>
    %24 = arith.subf %18, %23 : vector<128x32xf32>
    %25 = arith.mulf %24, %24 : vector<128x32xf32>
    %cst_18 = arith.constant dense<0.000000e+00> : vector<128xf32>
    %26 = vector.multi_reduction <add>, %25, %cst_18 [1] : vector<128x32xf32> to vector<128xf32>
    %27 = vector.shape_cast %26 : vector<128xf32> to vector<128x1xf32>
    %cst_19 = arith.constant 3.200000e+01 : f32
    %28 = vector.broadcast %cst_19 : f32 to vector<128x1xf32>
    %29 = arith.divf %27, %28 : vector<128x1xf32>
    %cst_20 = arith.constant 9.99999974E-6 : f32
    %30 = vector.broadcast %cst_20 : f32 to vector<128x1xf32>
    %31 = arith.addf %29, %30 : vector<128x1xf32>
    %32 = math.rsqrt %31 : vector<128x1xf32>
    %33 = vector.broadcast %32 : vector<128x1xf32> to vector<128x32xf32>
    %34 = arith.mulf %24, %33 : vector<128x32xf32>
    %35 = vector.broadcast %7 : vector<1x32xf32> to vector<128x32xf32>
    %36 = arith.mulf %34, %35 : vector<128x32xf32>
    %37 = vector.broadcast %8 : vector<1x32xf32> to vector<128x32xf32>
    %38 = arith.addf %36, %37 : vector<128x32xf32>
    %c0_21 = arith.constant 0 : index
    %c0_22 = arith.constant 0 : index
    %c0_23 = arith.constant 0 : index
    %39 = vector.load %arg4[%c0_21, %c0_22, %c0_23] : memref<2x32x64xf32, #tpu.memory_space<vmem>>, vector<1x32x64xf32>
    %40 = vector.shape_cast %39 : vector<1x32x64xf32> to vector<32x64xf32>
    %cst_24 = arith.constant dense<0.000000e+00> : vector<128x64xf32>
    %41 = tpu.matmul %38, %40, %cst_24 {dimension_numbers = #tpu.dot_dimension_numbers<[1], [0], [0], [1], [0, 0, 1, 1], [], []>} : vector<128x32xf32>, vector<32x64xf32>, vector<128x64xf32> -> vector<128x64xf32>
    %42 = vector.broadcast %9 : vector<1x64xf32> to vector<128x64xf32>
    %43 = arith.addf %41, %42 : vector<128x64xf32>
    %cst_25 = arith.constant 5.000000e-01 : f32
    %44 = vector.broadcast %cst_25 : f32 to vector<128x64xf32>
    %45 = arith.mulf %44, %43 : vector<128x64xf32>
    %cst_26 = arith.constant 0.707106769 : f32
    %46 = vector.broadcast %cst_26 : f32 to vector<128x64xf32>
    %47 = arith.mulf %43, %46 : vector<128x64xf32>
    %48 = math.erf %47 : vector<128x64xf32>
    %cst_27 = arith.constant 1.000000e+00 : f32
    %49 = vector.broadcast %cst_27 : f32 to vector<128x64xf32>
    %50 = arith.addf %49, %48 : vector<128x64xf32>
    %51 = arith.mulf %45, %50 : vector<128x64xf32>
    %c0_28 = arith.constant 0 : index
    %c0_29 = arith.constant 0 : index
    %c0_30 = arith.constant 0 : index
    %52 = vector.load %arg5[%c0_28, %c0_29, %c0_30] : memref<2x64x32xf32, #tpu.memory_space<vmem>>, vector<1x64x32xf32>
    %53 = vector.shape_cast %52 : vector<1x64x32xf32> to vector<64x32xf32>
    %cst_31 = arith.constant dense<0.000000e+00> : vector<128x32xf32>
    %54 = tpu.matmul %51, %53, %cst_31 {dimension_numbers = #tpu.dot_dimension_numbers<[1], [0], [0], [1], [0, 0, 1, 1], [], []>} : vector<128x64xf32>, vector<64x32xf32>, vector<128x32xf32> -> vector<128x32xf32>
    %55 = vector.broadcast %10 : vector<1x32xf32> to vector<128x32xf32>
    %56 = arith.addf %54, %55 : vector<128x32xf32>
    %57 = arith.addf %38, %56 : vector<128x32xf32>
    %cst_32 = arith.constant dense<0.000000e+00> : vector<128xf32>
    %58 = vector.multi_reduction <add>, %57, %cst_32 [1] : vector<128x32xf32> to vector<128xf32>
    %59 = vector.shape_cast %58 : vector<128xf32> to vector<128x1xf32>
    %cst_33 = arith.constant 3.200000e+01 : f32
    %60 = vector.broadcast %cst_33 : f32 to vector<128x1xf32>
    %61 = arith.divf %59, %60 : vector<128x1xf32>
    %62 = vector.broadcast %61 : vector<128x1xf32> to vector<128x32xf32>
    %63 = arith.subf %57, %62 : vector<128x32xf32>
    %64 = arith.mulf %63, %63 : vector<128x32xf32>
    %cst_34 = arith.constant dense<0.000000e+00> : vector<128xf32>
    %65 = vector.multi_reduction <add>, %64, %cst_34 [1] : vector<128x32xf32> to vector<128xf32>
    %66 = vector.shape_cast %65 : vector<128xf32> to vector<128x1xf32>
    %cst_35 = arith.constant 3.200000e+01 : f32
    %67 = vector.broadcast %cst_35 : f32 to vector<128x1xf32>
    %68 = arith.divf %66, %67 : vector<128x1xf32>
    %cst_36 = arith.constant 9.99999974E-6 : f32
    %69 = vector.broadcast %cst_36 : f32 to vector<128x1xf32>
    %70 = arith.addf %68, %69 : vector<128x1xf32>
    %71 = math.rsqrt %70 : vector<128x1xf32>
    %72 = vector.broadcast %71 : vector<128x1xf32> to vector<128x32xf32>
    %73 = arith.mulf %63, %72 : vector<128x32xf32>
    %74 = vector.broadcast %11 : vector<1x32xf32> to vector<128x32xf32>
    %75 = arith.mulf %73, %74 : vector<128x32xf32>
    %76 = vector.broadcast %12 : vector<1x32xf32> to vector<128x32xf32>
    %77 = arith.addf %75, %76 : vector<128x32xf32>
    %c8 = arith.constant 8 : index
    %c0_37 = arith.constant 0 : index
    %78 = vector.load %arg7[%c8, %c0_37] : memref<18x64xf32, #tpu.memory_space<vmem>>, vector<1x32xf32>
    %c9 = arith.constant 9 : index
    %c0_38 = arith.constant 0 : index
    %79 = vector.load %arg7[%c9, %c0_38] : memref<18x64xf32, #tpu.memory_space<vmem>>, vector<1x32xf32>
    %c10 = arith.constant 10 : index
    %c0_39 = arith.constant 0 : index
    %80 = vector.load %arg7[%c10, %c0_39] : memref<18x64xf32, #tpu.memory_space<vmem>>, vector<1x32xf32>
    %c11 = arith.constant 11 : index
    %c0_40 = arith.constant 0 : index
    %81 = vector.load %arg7[%c11, %c0_40] : memref<18x64xf32, #tpu.memory_space<vmem>>, vector<1x64xf32>
    %c12 = arith.constant 12 : index
    %c0_41 = arith.constant 0 : index
    %82 = vector.load %arg7[%c12, %c0_41] : memref<18x64xf32, #tpu.memory_space<vmem>>, vector<1x32xf32>
    %c13 = arith.constant 13 : index
    %c0_42 = arith.constant 0 : index
    %83 = vector.load %arg7[%c13, %c0_42] : memref<18x64xf32, #tpu.memory_space<vmem>>, vector<1x32xf32>
    %c14 = arith.constant 14 : index
    %c0_43 = arith.constant 0 : index
    %84 = vector.load %arg7[%c14, %c0_43] : memref<18x64xf32, #tpu.memory_space<vmem>>, vector<1x32xf32>
    %c1_44 = arith.constant 1 : index
    %c0_45 = arith.constant 0 : index
    %c0_46 = arith.constant 0 : index
    %85 = vector.load %arg3[%c1_44, %c0_45, %c0_46] : memref<2x32x32xf32, #tpu.memory_space<vmem>>, vector<1x32x32xf32>
    %86 = vector.shape_cast %85 : vector<1x32x32xf32> to vector<32x32xf32>
    %cst_47 = arith.constant dense<0.000000e+00> : vector<128x32xf32>
    %87 = tpu.matmul %77, %86, %cst_47 {dimension_numbers = #tpu.dot_dimension_numbers<[1], [0], [0], [1], [0, 0, 1, 1], [], []>} : vector<128x32xf32>, vector<32x32xf32>, vector<128x32xf32> -> vector<128x32xf32>
    %88 = vector.broadcast %78 : vector<1x32xf32> to vector<128x32xf32>
    %89 = arith.addf %87, %88 : vector<128x32xf32>
    %90 = arith.addf %77, %89 : vector<128x32xf32>
    %cst_48 = arith.constant dense<0.000000e+00> : vector<128xf32>
    %91 = vector.multi_reduction <add>, %90, %cst_48 [1] : vector<128x32xf32> to vector<128xf32>
    %92 = vector.shape_cast %91 : vector<128xf32> to vector<128x1xf32>
    %cst_49 = arith.constant 3.200000e+01 : f32
    %93 = vector.broadcast %cst_49 : f32 to vector<128x1xf32>
    %94 = arith.divf %92, %93 : vector<128x1xf32>
    %95 = vector.broadcast %94 : vector<128x1xf32> to vector<128x32xf32>
    %96 = arith.subf %90, %95 : vector<128x32xf32>
    %97 = arith.mulf %96, %96 : vector<128x32xf32>
    %cst_50 = arith.constant dense<0.000000e+00> : vector<128xf32>
    %98 = vector.multi_reduction <add>, %97, %cst_50 [1] : vector<128x32xf32> to vector<128xf32>
    %99 = vector.shape_cast %98 : vector<128xf32> to vector<128x1xf32>
    %cst_51 = arith.constant 3.200000e+01 : f32
    %100 = vector.broadcast %cst_51 : f32 to vector<128x1xf32>
    %101 = arith.divf %99, %100 : vector<128x1xf32>
    %cst_52 = arith.constant 9.99999974E-6 : f32
    %102 = vector.broadcast %cst_52 : f32 to vector<128x1xf32>
    %103 = arith.addf %101, %102 : vector<128x1xf32>
    %104 = math.rsqrt %103 : vector<128x1xf32>
    %105 = vector.broadcast %104 : vector<128x1xf32> to vector<128x32xf32>
    %106 = arith.mulf %96, %105 : vector<128x32xf32>
    %107 = vector.broadcast %79 : vector<1x32xf32> to vector<128x32xf32>
    %108 = arith.mulf %106, %107 : vector<128x32xf32>
    %109 = vector.broadcast %80 : vector<1x32xf32> to vector<128x32xf32>
    %110 = arith.addf %108, %109 : vector<128x32xf32>
    %c1_53 = arith.constant 1 : index
    %c0_54 = arith.constant 0 : index
    %c0_55 = arith.constant 0 : index
    %111 = vector.load %arg4[%c1_53, %c0_54, %c0_55] : memref<2x32x64xf32, #tpu.memory_space<vmem>>, vector<1x32x64xf32>
    %112 = vector.shape_cast %111 : vector<1x32x64xf32> to vector<32x64xf32>
    %cst_56 = arith.constant dense<0.000000e+00> : vector<128x64xf32>
    %113 = tpu.matmul %110, %112, %cst_56 {dimension_numbers = #tpu.dot_dimension_numbers<[1], [0], [0], [1], [0, 0, 1, 1], [], []>} : vector<128x32xf32>, vector<32x64xf32>, vector<128x64xf32> -> vector<128x64xf32>
    %114 = vector.broadcast %81 : vector<1x64xf32> to vector<128x64xf32>
    %115 = arith.addf %113, %114 : vector<128x64xf32>
    %cst_57 = arith.constant 5.000000e-01 : f32
    %116 = vector.broadcast %cst_57 : f32 to vector<128x64xf32>
    %117 = arith.mulf %116, %115 : vector<128x64xf32>
    %cst_58 = arith.constant 0.707106769 : f32
    %118 = vector.broadcast %cst_58 : f32 to vector<128x64xf32>
    %119 = arith.mulf %115, %118 : vector<128x64xf32>
    %120 = math.erf %119 : vector<128x64xf32>
    %cst_59 = arith.constant 1.000000e+00 : f32
    %121 = vector.broadcast %cst_59 : f32 to vector<128x64xf32>
    %122 = arith.addf %121, %120 : vector<128x64xf32>
    %123 = arith.mulf %117, %122 : vector<128x64xf32>
    %c1_60 = arith.constant 1 : index
    %c0_61 = arith.constant 0 : index
    %c0_62 = arith.constant 0 : index
    %124 = vector.load %arg5[%c1_60, %c0_61, %c0_62] : memref<2x64x32xf32, #tpu.memory_space<vmem>>, vector<1x64x32xf32>
    %125 = vector.shape_cast %124 : vector<1x64x32xf32> to vector<64x32xf32>
    %cst_63 = arith.constant dense<0.000000e+00> : vector<128x32xf32>
    %126 = tpu.matmul %123, %125, %cst_63 {dimension_numbers = #tpu.dot_dimension_numbers<[1], [0], [0], [1], [0, 0, 1, 1], [], []>} : vector<128x64xf32>, vector<64x32xf32>, vector<128x32xf32> -> vector<128x32xf32>
    %127 = vector.broadcast %82 : vector<1x32xf32> to vector<128x32xf32>
    %128 = arith.addf %126, %127 : vector<128x32xf32>
    %129 = arith.addf %110, %128 : vector<128x32xf32>
    %cst_64 = arith.constant dense<0.000000e+00> : vector<128xf32>
    %130 = vector.multi_reduction <add>, %129, %cst_64 [1] : vector<128x32xf32> to vector<128xf32>
    %131 = vector.shape_cast %130 : vector<128xf32> to vector<128x1xf32>
    %cst_65 = arith.constant 3.200000e+01 : f32
    %132 = vector.broadcast %cst_65 : f32 to vector<128x1xf32>
    %133 = arith.divf %131, %132 : vector<128x1xf32>
    %134 = vector.broadcast %133 : vector<128x1xf32> to vector<128x32xf32>
    %135 = arith.subf %129, %134 : vector<128x32xf32>
    %136 = arith.mulf %135, %135 : vector<128x32xf32>
    %cst_66 = arith.constant dense<0.000000e+00> : vector<128xf32>
    %137 = vector.multi_reduction <add>, %136, %cst_66 [1] : vector<128x32xf32> to vector<128xf32>
    %138 = vector.shape_cast %137 : vector<128xf32> to vector<128x1xf32>
    %cst_67 = arith.constant 3.200000e+01 : f32
    %139 = vector.broadcast %cst_67 : f32 to vector<128x1xf32>
    %140 = arith.divf %138, %139 : vector<128x1xf32>
    %cst_68 = arith.constant 9.99999974E-6 : f32
    %141 = vector.broadcast %cst_68 : f32 to vector<128x1xf32>
    %142 = arith.addf %140, %141 : vector<128x1xf32>
    %143 = math.rsqrt %142 : vector<128x1xf32>
    %144 = vector.broadcast %143 : vector<128x1xf32> to vector<128x32xf32>
    %145 = arith.mulf %135, %144 : vector<128x32xf32>
    %146 = vector.broadcast %83 : vector<1x32xf32> to vector<128x32xf32>
    %147 = arith.mulf %145, %146 : vector<128x32xf32>
    %148 = vector.broadcast %84 : vector<1x32xf32> to vector<128x32xf32>
    %149 = arith.addf %147, %148 : vector<128x32xf32>
    %c15 = arith.constant 15 : index
    %c0_69 = arith.constant 0 : index
    %150 = vector.load %arg7[%c15, %c0_69] : memref<18x64xf32, #tpu.memory_space<vmem>>, vector<1x64xf32>
    %c16 = arith.constant 16 : index
    %c0_70 = arith.constant 0 : index
    %151 = vector.load %arg7[%c16, %c0_70] : memref<18x64xf32, #tpu.memory_space<vmem>>, vector<1x64xf32>
    %c17 = arith.constant 17 : index
    %c0_71 = arith.constant 0 : index
    %152 = vector.load %arg7[%c17, %c0_71] : memref<18x64xf32, #tpu.memory_space<vmem>>, vector<1x1xf32>
    %c0_72 = arith.constant 0 : index
    %c0_73 = arith.constant 0 : index
    %153 = vector.load %arg6[%c0_72, %c0_73] : memref<32x64xf32, #tpu.memory_space<vmem>>, vector<32x64xf32>
    %cst_74 = arith.constant dense<0.000000e+00> : vector<128x64xf32>
    %154 = tpu.matmul %149, %153, %cst_74 {dimension_numbers = #tpu.dot_dimension_numbers<[1], [0], [0], [1], [0, 0, 1, 1], [], []>} : vector<128x32xf32>, vector<32x64xf32>, vector<128x64xf32> -> vector<128x64xf32>
    %155 = vector.broadcast %150 : vector<1x64xf32> to vector<128x64xf32>
    %156 = arith.addf %154, %155 : vector<128x64xf32>
    %cst_75 = arith.constant 0.000000e+00 : f32
    %157 = vector.broadcast %cst_75 : f32 to vector<128x64xf32>
    %158 = arith.maximumf %156, %157 : vector<128x64xf32>
    "tpu.trace_start"() <{level = 10 : i32, message = "od,td->ot"}> : () -> ()
    %cst_76 = arith.constant dense<0.000000e+00> : vector<1x128xf32>
    %159 = tpu.matmul %151, %158, %cst_76 {dimension_numbers = #tpu.dot_dimension_numbers<[1], [1], [0], [0], [0, 0, 1, 0], [], []>} : vector<1x64xf32>, vector<128x64xf32>, vector<1x128xf32> -> vector<1x128xf32>
    "tpu.trace_stop"() : () -> ()
    %160 = vector.broadcast %152 : vector<1x1xf32> to vector<1x128xf32>
    %161 = arith.addf %159, %160 : vector<1x128xf32>
    %c0_77 = arith.constant 0 : index
    %c0_78 = arith.constant 0 : index
    %162 = vector.load %arg8[%c0_77, %c0_78] : memref<1x128xf32, #tpu.memory_space<vmem>>, vector<1x128xf32>
    tpu.vector_store %arg8[%c0_77, %c0_78], %161 {strides = array<i32>} : memref<1x128xf32, #tpu.memory_space<vmem>>, vector<1x128xf32>,
    return
  }
  func.func @transform_0(%arg0: i32) -> (i32, i32) {
    %c0_i32 = arith.constant 0 : i32
    %c0_i32_0 = arith.constant 0 : i32
    return %arg0, %c0_i32 : i32, i32
  }
  func.func @transform_1(%arg0: i32) -> (i32, i32) {
    %c0_i32 = arith.constant 0 : i32
    %c0_i32_0 = arith.constant 0 : i32
    %c0_i32_1 = arith.constant 0 : i32
    return %c0_i32, %c0_i32_0 : i32, i32
  }
  func.func @transform_2(%arg0: i32) -> (i32, i32, i32) {
    %c0_i32 = arith.constant 0 : i32
    %c0_i32_0 = arith.constant 0 : i32
    %c0_i32_1 = arith.constant 0 : i32
    %c0_i32_2 = arith.constant 0 : i32
    return %c0_i32, %c0_i32_0, %c0_i32_1 : i32, i32, i32
  }
  func.func @transform_3(%arg0: i32) -> (i32, i32, i32) {
    %c0_i32 = arith.constant 0 : i32
    %c0_i32_0 = arith.constant 0 : i32
    %c0_i32_1 = arith.constant 0 : i32
    %c0_i32_2 = arith.constant 0 : i32
    return %c0_i32, %c0_i32_0, %c0_i32_1 : i32, i32, i32
  }
  func.func @transform_4(%arg0: i32) -> (i32, i32, i32) {
    %c0_i32 = arith.constant 0 : i32
    %c0_i32_0 = arith.constant 0 : i32
    %c0_i32_1 = arith.constant 0 : i32
    %c0_i32_2 = arith.constant 0 : i32
    return %c0_i32, %c0_i32_0, %c0_i32_1 : i32, i32, i32
  }
  func.func @transform_5(%arg0: i32) -> (i32, i32) {
    %c0_i32 = arith.constant 0 : i32
    %c0_i32_0 = arith.constant 0 : i32
    %c0_i32_1 = arith.constant 0 : i32
    return %c0_i32, %c0_i32_0 : i32, i32
  }
  func.func @transform_6(%arg0: i32) -> (i32, i32) {
    %c0_i32 = arith.constant 0 : i32
    %c0_i32_0 = arith.constant 0 : i32
    %c0_i32_1 = arith.constant 0 : i32
    return %c0_i32, %c0_i32_0 : i32, i32
  }
  func.func @transform_7(%arg0: i32) -> (i32, i32) {
    %c0_i32 = arith.constant 0 : i32
    %c0_i32_0 = arith.constant 0 : i32
    return %c0_i32, %arg0 : i32, i32
  }
}

</mosaic_0001>

<llo_original>
// kernel: tpu_custom_call.1
$region0: #{tpu_custom_call.1}
  #allocation0 [shape = 'u32[]', space=smem, size = 0x4, offset = 0x4, fixed_abs, tag = 'smem constant byte address 0x4 - core index']
  #allocation1 [shape = 'u32[72,128]{1,0:T(1,128)}', space=vmem, size = 0x9000, scoped, tag = 'internal scratch']
  %s0 = inlined_call_operand.vmem [shape: f32[512,16], index: 0, kind: input, shape index: {}]
  %s1 = inlined_call_operand.vmem [shape: f32[16,32], index: 1, kind: input, shape index: {}]
  %s2 = inlined_call_operand.vmem [shape: f32[2,32,32], index: 2, kind: input, shape index: {}]
  %s3 = inlined_call_operand.vmem [shape: f32[2,32,64], index: 3, kind: input, shape index: {}]
  %s4 = inlined_call_operand.vmem [shape: f32[2,64,32], index: 4, kind: input, shape index: {}]
  %s5 = inlined_call_operand.vmem [shape: f32[32,64], index: 5, kind: input, shape index: {}]
  %s6 = inlined_call_operand.vmem [shape: f32[18,64], index: 6, kind: input, shape index: {}]
  %s7 = inlined_call_operand.hbm [shape: f32[1,512], index: 7, kind: output, shape index: {}]
  %s8 = sld [smem:[#allocation0]]
  $region61: #{tpu_custom_call.1} parent=0
    _
  %s10 = ssub.s32 1, %s8
  %s11 = scalar_select 0, %s10, %s8
  $region1: #{tpu_custom_call.1} parent=0
    #allocation2 [shape = 'u8[1024]{0}', space=vmem, size = 0x400, scoped, tag = 'output window, operand 0']
    #allocation3 [shape = 's32[2]{0}', space=sflag, size = 0x8, scoped, tag = 'scoped memory for tpu_custom_call.1']
    %12 = vsyncpa [#allocation3], 0
    %s13 = scalar_lea.sflag [#allocation3], 1
    %14 = vsyncpa %s13, 0
    loop: start=0, step=1, limit=6
    $region2: #{tpu_custom_call.1} parent=1 // loop_pre_header
      _
    $region3: #{tpu_custom_call.1} parent=1 // loop_header
      %s16 = sphi 0, %s20
      %p17 = scmp.ge.s32.totalorder %s16, 6
      %s26 = sphi 0, %s28
      %s29 = sphi 0, %s26
      %s30 = sphi 0, %s29
      %s46 = sphi 0, %s30
      %s50 = sphi 0, %s50
      %s52 = sphi 0, %s50
      %s53 = sphi 0, %s52
      %s67 = sphi 0, %s53
      %s71 = sphi 0, %s71
      %s73 = sphi 0, %s71
      %s74 = sphi 0, %s73
      %s88 = sphi 0, %s74
      %s92 = sphi 0, %s92
      %s94 = sphi 0, %s92
      %s95 = sphi 0, %s94
      %s109 = sphi 0, %s95
      %s113 = sphi 0, %s113
      %s115 = sphi 0, %s113
      %s116 = sphi 0, %s115
      %s130 = sphi 0, %s116
      %s134 = sphi 0, %s134
      %s136 = sphi 0, %s134
      %s137 = sphi 0, %s136
      %s151 = sphi 0, %s137
      %s155 = sphi 0, %s155
      %s157 = sphi 0, %s155
      %s158 = sphi 0, %s157
      %s172 = sphi 0, %s158
      %s178 = sphi 0, %s180
      %s181 = sphi 0, %s178
      %s182 = sphi 0, %s181
      %s198 = sphi 0, %s182
    $region4: #{tpu_custom_call.1} parent=1 // loop_header_branch
      %19 = sbr.rel (%p17) target = $region8
    $region5: #{tpu_custom_call.1} parent=1 // loop_body
      %s21 = ssub.s32 %s16, 1
      %s22 = ssub.s32 %s16, 2
      %s23 = sadd.s32 %s16, 1
      %s24 = ssub.s32 %s16, %s23
      %p25 = scmp.eq.s32.totalorder %s24, 0
      %s27 = sadd.s32 %s26, 1
      %s28 = scalar_select %p25, %s26, %s27
      %p31 = pneg %p25
      %p32 = scmp.eq.s32.totalorder %s16, 3
      %p33 = por %p31, %p32
      %p34 = scmp.ne.s32.totalorder %s26, %s29
      %p35 = scmp.eq.s32.totalorder %s16, 0
      %p36 = por %p34, %p35
      %p37 = scmp.ne.s32.totalorder %s26, %s29
      %p38 = scmp.eq.s32.totalorder %s21, 3
      %p39 = por %p37, %p38
      %p40 = scmp.ne.s32.totalorder %s29, %s30
      %p41 = scmp.eq.s32.totalorder %s21, 0
      %p42 = por %p40, %p41
      %p43 = scmp.ne.s32.totalorder %s29, %s30
      %p44 = scmp.eq.s32.totalorder %s22, 3
      %p45 = por %p43, %p44
      %p47 = scmp.ne.s32.totalorder %s30, %s46
      %p48 = scmp.eq.s32.totalorder %s22, 0
      %p49 = por %p47, %p48
      %s51 = sadd.s32 %s50, 1
      %p54 = scmp.eq.s32.totalorder %s16, 3
      %p55 = scmp.ne.s32.totalorder %s50, %s52
      %p56 = scmp.eq.s32.totalorder %s16, 0
      %p57 = por %p55, %p56
      %p58 = scmp.ne.s32.totalorder %s50, %s52
      %p59 = scmp.eq.s32.totalorder %s21, 3
      %p60 = por %p58, %p59
      %p61 = scmp.ne.s32.totalorder %s52, %s53
      %p62 = scmp.eq.s32.totalorder %s21, 0
      %p63 = por %p61, %p62
      %p64 = scmp.ne.s32.totalorder %s52, %s53
      %p65 = scmp.eq.s32.totalorder %s22, 3
      %p66 = por %p64, %p65
      %p68 = scmp.ne.s32.totalorder %s53, %s67
      %p69 = scmp.eq.s32.totalorder %s22, 0
      %p70 = por %p68, %p69
      %s72 = sadd.s32 %s71, 1
      %p75 = scmp.eq.s32.totalorder %s16, 3
      %p76 = scmp.ne.s32.totalorder %s71, %s73
      %p77 = scmp.eq.s32.totalorder %s16, 0
      %p78 = por %p76, %p77
      %p79 = scmp.ne.s32.totalorder %s71, %s73
      %p80 = scmp.eq.s32.totalorder %s21, 3
      %p81 = por %p79, %p80
      %p82 = scmp.ne.s32.totalorder %s73, %s74
      %p83 = scmp.eq.s32.totalorder %s21, 0
      %p84 = por %p82, %p83
      %p85 = scmp.ne.s32.totalorder %s73, %s74
      %p86 = scmp.eq.s32.totalorder %s22, 3
      %p87 = por %p85, %p86
      %p89 = scmp.ne.s32.totalorder %s74, %s88
      %p90 = scmp.eq.s32.totalorder %s22, 0
      %p91 = por %p89, %p90
      %s93 = sadd.s32 %s92, 1
      %p96 = scmp.eq.s32.totalorder %s16, 3
      %p97 = scmp.ne.s32.totalorder %s92, %s94
      %p98 = scmp.eq.s32.totalorder %s16, 0
      %p99 = por %p97, %p98
      %p100 = scmp.ne.s32.totalorder %s92, %s94
      %p101 = scmp.eq.s32.totalorder %s21, 3
      %p102 = por %p100, %p101
      %p103 = scmp.ne.s32.totalorder %s94, %s95
      %p104 = scmp.eq.s32.totalorder %s21, 0
      %p105 = por %p103, %p104
      %p106 = scmp.ne.s32.totalorder %s94, %s95
      %p107 = scmp.eq.s32.totalorder %s22, 3
      %p108 = por %p106, %p107
      %p110 = scmp.ne.s32.totalorder %s95, %s109
      %p111 = scmp.eq.s32.totalorder %s22, 0
      %p112 = por %p110, %p111
      %s114 = sadd.s32 %s113, 1
      %p117 = scmp.eq.s32.totalorder %s16, 3
      %p118 = scmp.ne.s32.totalorder %s113, %s115
      %p119 = scmp.eq.s32.totalorder %s16, 0
      %p120 = por %p118, %p119
      %p121 = scmp.ne.s32.totalorder %s113, %s115
      %p122 = scmp.eq.s32.totalorder %s21, 3
      %p123 = por %p121, %p122
      %p124 = scmp.ne.s32.totalorder %s115, %s116
      %p125 = scmp.eq.s32.totalorder %s21, 0
      %p126 = por %p124, %p125
      %p127 = scmp.ne.s32.totalorder %s115, %s116
      %p128 = scmp.eq.s32.totalorder %s22, 3
      %p129 = por %p127, %p128
      %p131 = scmp.ne.s32.totalorder %s116, %s130
      %p132 = scmp.eq.s32.totalorder %s22, 0
      %p133 = por %p131, %p132
      %s135 = sadd.s32 %s134, 1
      %p138 = scmp.eq.s32.totalorder %s16, 3
      %p139 = scmp.ne.s32.totalorder %s134, %s136
      %p140 = scmp.eq.s32.totalorder %s16, 0
      %p141 = por %p139, %p140
      %p142 = scmp.ne.s32.totalorder %s134, %s136
      %p143 = scmp.eq.s32.totalorder %s21, 3
      %p144 = por %p142, %p143
      %p145 = scmp.ne.s32.totalorder %s136, %s137
      %p146 = scmp.eq.s32.totalorder %s21, 0
      %p147 = por %p145, %p146
      %p148 = scmp.ne.s32.totalorder %s136, %s137
      %p149 = scmp.eq.s32.totalorder %s22, 3
      %p150 = por %p148, %p149
      %p152 = scmp.ne.s32.totalorder %s137, %s151
      %p153 = scmp.eq.s32.totalorder %s22, 0
      %p154 = por %p152, %p153
      %s156 = sadd.s32 %s155, 1
      %p159 = scmp.eq.s32.totalorder %s16, 3
      %p160 = scmp.ne.s32.totalorder %s155, %s157
      %p161 = scmp.eq.s32.totalorder %s16, 0
      %p162 = por %p160, %p161
      %p163 = scmp.ne.s32.totalorder %s155, %s157
      %p164 = scmp.eq.s32.totalorder %s21, 3
      %p165 = por %p163, %p164
      %p166 = scmp.ne.s32.totalorder %s157, %s158
      %p167 = scmp.eq.s32.totalorder %s21, 0
      %p168 = por %p166, %p167
      %p169 = scmp.ne.s32.totalorder %s157, %s158
      %p170 = scmp.eq.s32.totalorder %s22, 3
      %p171 = por %p169, %p170
      %p173 = scmp.ne.s32.totalorder %s158, %s172
      %p174 = scmp.eq.s32.totalorder %s22, 0
      %p175 = por %p173, %p174
      %s176 = ssub.s32 %s16, %s23
      %p177 = scmp.eq.s32.totalorder %s176, 0
      %s179 = sadd.s32 %s178, 1
      %s180 = scalar_select %p177, %s178, %s179
      %p183 = pneg %p177
      %p184 = scmp.eq.s32.totalorder %s16, 3
      %p185 = por %p183, %p184
      %p186 = scmp.ne.s32.totalorder %s178, %s181
      %p187 = scmp.eq.s32.totalorder %s16, 0
      %p188 = por %p186, %p187
      %p189 = scmp.ne.s32.totalorder %s178, %s181
      %p190 = scmp.eq.s32.totalorder %s21, 3
      %p191 = por %p189, %p190
      %p192 = scmp.ne.s32.totalorder %s181, %s182
      %p193 = scmp.eq.s32.totalorder %s21, 0
      %p194 = por %p192, %p193
      %p195 = scmp.ne.s32.totalorder %s181, %s182
      %p196 = scmp.eq.s32.totalorder %s22, 3
      %p197 = por %p195, %p196
      %p199 = scmp.ne.s32.totalorder %s182, %s198
      %p200 = scmp.eq.s32.totalorder %s22, 0
      %p201 = por %p199, %p200
      %p202 = scmp.le.s32.totalorder 1, %s16
      %p203 = scmp.lt.s32.totalorder %s16, 5
      %p204 = pnand %p202, %p203
      %p205 = pneg %p204
      // Predicated region
      $region9: #{tpu_custom_call.1} parent=5 // pred_check
        _
      $region10: #{tpu_custom_call.1} parent=5 // pred_check_branch
        %207 = sbr.rel (%p204) target = $region12
      $region11: #{tpu_custom_call.1} parent=5 // pred_region
        %s208 = ssub.s32 %s16, 1
        // Predicated region
        $region13: #{tpu_custom_call.1} parent=11 // pred_check
          %p209 = pneg %p63
        $region14: #{tpu_custom_call.1} parent=11 // pred_check_branch
          %211 = sbr.rel (%p209) target = $region16
        $region15: #{tpu_custom_call.1} parent=11 // pred_region
          _
        $region16: #{tpu_custom_call.1} parent=11 // pred_fallthru
          _
        // Predicated region
        $region17: #{tpu_custom_call.1} parent=11 // pred_check
          %p212 = pneg %p84
        $region18: #{tpu_custom_call.1} parent=11 // pred_check_branch
          %214 = sbr.rel (%p212) target = $region20
        $region19: #{tpu_custom_call.1} parent=11 // pred_region
          _
        $region20: #{tpu_custom_call.1} parent=11 // pred_fallthru
          _
        // Predicated region
        $region21: #{tpu_custom_call.1} parent=11 // pred_check
          %p215 = pneg %p105
        $region22: #{tpu_custom_call.1} parent=11 // pred_check_branch
          %217 = sbr.rel (%p215) target = $region24
        $region23: #{tpu_custom_call.1} parent=11 // pred_region
          _
        $region24: #{tpu_custom_call.1} parent=11 // pred_fallthru
          _
        // Predicated region
        $region25: #{tpu_custom_call.1} parent=11 // pred_check
          %p218 = pneg %p126
        $region26: #{tpu_custom_call.1} parent=11 // pred_check_branch
          %220 = sbr.rel (%p218) target = $region28
        $region27: #{tpu_custom_call.1} parent=11 // pred_region
          _
        $region28: #{tpu_custom_call.1} parent=11 // pred_fallthru
          _
        // Predicated region
        $region29: #{tpu_custom_call.1} parent=11 // pred_check
          %p221 = pneg %p147
        $region30: #{tpu_custom_call.1} parent=11 // pred_check_branch
          %223 = sbr.rel (%p221) target = $region32
        $region31: #{tpu_custom_call.1} parent=11 // pred_region
          _
        $region32: #{tpu_custom_call.1} parent=11 // pred_fallthru
          _
        // Predicated region
        $region33: #{tpu_custom_call.1} parent=11 // pred_check
          %p224 = pneg %p168
        $region34: #{tpu_custom_call.1} parent=11 // pred_check_branch
          %226 = sbr.rel (%p224) target = $region36
        $region35: #{tpu_custom_call.1} parent=11 // pred_region
          _
        $region36: #{tpu_custom_call.1} parent=11 // pred_fallthru
          _
      $region12: #{tpu_custom_call.1} parent=5 // pred_fallthru
        _
      %p227 = scmp.lt.s32.totalorder %s16, 4
      // Predicated region
      $region37: #{tpu_custom_call.1} parent=5 // pred_check
        %p228 = pneg %p227
      $region38: #{tpu_custom_call.1} parent=5 // pred_check_branch
        %230 = sbr.rel (%p228) target = $region40
      $region39: #{tpu_custom_call.1} parent=5 // pred_region
        // Predicated region
        $region41: #{tpu_custom_call.1} parent=39 // pred_check
          %p231 = pneg %p36
        $region42: #{tpu_custom_call.1} parent=39 // pred_check_branch
          %233 = sbr.rel (%p231) target = $region44
        $region43: #{tpu_custom_call.1} parent=39 // pred_region
          %s234 = smul.u32 16, %s16
          %p235 = scmp.lt.s32.totalorder %s234, 63
          %s236 = scalar_select %p235, %s234, 63
          %s237 = smul.addr %s236, 8
          %s238 = scalar_lea.vmem %s0, %s237
          %s239 = smul.u32 16, %s16
        $region44: #{tpu_custom_call.1} parent=39 // pred_fallthru
          _
      $region40: #{tpu_custom_call.1} parent=5 // pred_fallthru
        _
      %p240 = scmp.le.s32.totalorder 1, %s16
      %p241 = scmp.lt.s32.totalorder %s16, 5
      %p242 = pnand %p240, %p241
      %p243 = pneg %p242
      // Predicated region
      $region45: #{tpu_custom_call.1} parent=5 // pred_check
        _
      $region46: #{tpu_custom_call.1} parent=5 // pred_check_branch
        %245 = sbr.rel (%p242) target = $region48
      $region47: #{tpu_custom_call.1} parent=5 // pred_region
        %s246 = ssub.s32 %s16, 1
        %s247 = smul.u32 16, %s21
        %p248 = scmp.lt.s32.totalorder %s247, 63
        %s249 = scalar_select %p248, %s247, 63
        %s250 = smul.addr %s249, 8
        %s251 = scalar_lea.vmem %s0, %s250
        %p252 = pneg %p42
        %p253 = pneg %p39
        %p254 = pneg %p63
        %p255 = pneg %p60
        %p256 = pneg %p84
        %p257 = pneg %p81
        %p258 = pneg %p105
        %p259 = pneg %p102
        %p260 = pneg %p126
        %p261 = pneg %p123
        %p262 = pneg %p147
        %p263 = pneg %p144
        %p264 = pneg %p168
        %p265 = pneg %p165
        %p266 = pneg %p194
        %p267 = pneg %p191
        %s268 = sand.u32 %s181, 1
        %s269 = scalar_lea.sflag [#allocation3], %s268
        %s270 = sand.u32 %s181, 1
        %s271 = scalar_lea.vmem [#allocation2], %s270
        %s272 = smul.u32 16, %s21
        %p273 = scmp.lt.s32.totalorder %s272, 63
        %s274 = scalar_select %p273, %s272, 63
        %s275 = smul.addr %s274, 8
        %s276 = scalar_lea.vmem %s0, %s275
        %s277 = smul.u32 16, %s21
        %v278 = vld [vmem:[%s276] sm:$0xff]
        %v279 = vld [vmem:[%s276 + $0x8] sm:$0xff]
        %v280 = vld [vmem:[%s276 + $0x10] sm:$0xff]
        %v281 = vld [vmem:[%s276 + $0x18] sm:$0xff]
        %v282 = vld [vmem:[%s276 + $0x20] sm:$0xff]
        %v283 = vld [vmem:[%s276 + $0x28] sm:$0xff]
        %v284 = vld [vmem:[%s276 + $0x30] sm:$0xff]
        %v285 = vld [vmem:[%s276 + $0x38] sm:$0xff]
        %v286 = vld [vmem:[%s276 + $0x40] sm:$0xff]
        %v287 = vld [vmem:[%s276 + $0x48] sm:$0xff]
        %v288 = vld [vmem:[%s276 + $0x50] sm:$0xff]
        %v289 = vld [vmem:[%s276 + $0x58] sm:$0xff]
        %v290 = vld [vmem:[%s276 + $0x60] sm:$0xff]
        %v291 = vld [vmem:[%s276 + $0x68] sm:$0xff]
        %v292 = vld [vmem:[%s276 + $0x70] sm:$0xff]
        %v293 = vld [vmem:[%s276 + $0x78] sm:$0xff]
        %v294 = vld [vmem:[%s1] sm:$0xff]
        %v295 = vld [vmem:[%s1 + $0x8] sm:$0xff]
        %v296 = vld [vmem:[%s6] sm:$0x1]
        %v297 = vperm.slane %v296, 0
        %vm298 = vcmask 130048
        %v300 = vsel %vm298, %v278, 0
        %v303 = vsel %vm298, %v279, 0
        %v306 = vsel %vm298, %v280, 0
        %v309 = vsel %vm298, %v281, 0
        %v312 = vsel %vm298, %v282, 0
        %v315 = vsel %vm298, %v283, 0
        %v318 = vsel %vm298, %v284, 0
        %v321 = vsel %vm298, %v285, 0
        %v324 = vsel %vm298, %v286, 0
        %v327 = vsel %vm298, %v287, 0
        %v330 = vsel %vm298, %v288, 0
        %v333 = vsel %vm298, %v289, 0
        %v336 = vsel %vm298, %v290, 0
        %v339 = vsel %vm298, %v291, 0
        %v342 = vsel %vm298, %v292, 0
        %v345 = vsel %vm298, %v293, 0
        %347 = vmatpush.msra.mxu0 0.0
        %348 = vmatpush.msra.mxu0 0.0
        %349 = vmatpush.msra.mxu0 0.0
        %350 = vmatpush.msra.mxu0 0.0
        %351 = vmatpush.msra.mxu0 0.0
        %352 = vmatpush.msra.mxu0 0.0
        %353 = vmatpush.msra.mxu0 0.0
        %354 = vmatpush.msra.mxu0 0.0
        %355 = vmatpush.msra.mxu0 0.0
        %356 = vmatpush.msra.mxu0 0.0
        %357 = vmatpush.msra.mxu0 0.0
        %358 = vmatpush.msra.mxu0 0.0
        %359 = vmatpush.msra.mxu0 0.0
        %360 = vmatpush.msra.mxu0 0.0
        %361 = vmatpush.msra.mxu0 %v295
        %362 = vmatpush.msra.mxu0 %v294
        %363 = vmatmul.f32.gmra.mxu0 %v300
        %v364 = vpop.f32.mrf.mxu0
        %v365 = vadd.f32 %v297, %v364
        %366 = vmatmul.f32.gmra.mxu0 %v303
        %v367 = vpop.f32.mrf.mxu0
        %v368 = vadd.f32 %v297, %v367
        %369 = vmatmul.f32.gmra.mxu0 %v306
        %v370 = vpop.f32.mrf.mxu0
        %v371 = vadd.f32 %v297, %v370
        %372 = vmatmul.f32.gmra.mxu0 %v309
        %v373 = vpop.f32.mrf.mxu0
        %v374 = vadd.f32 %v297, %v373
        %375 = vmatmul.f32.gmra.mxu0 %v312
        %v376 = vpop.f32.mrf.mxu0
        %v377 = vadd.f32 %v297, %v376
        %378 = vmatmul.f32.gmra.mxu0 %v315
        %v379 = vpop.f32.mrf.mxu0
        %v380 = vadd.f32 %v297, %v379
        %381 = vmatmul.f32.gmra.mxu0 %v318
        %v382 = vpop.f32.mrf.mxu0
        %v383 = vadd.f32 %v297, %v382
        %384 = vmatmul.f32.gmra.mxu0 %v321
        %v385 = vpop.f32.mrf.mxu0
        %v386 = vadd.f32 %v297, %v385
        %387 = vmatmul.f32.gmra.mxu0 %v324
        %v388 = vpop.f32.mrf.mxu0
        %v389 = vadd.f32 %v297, %v388
        %390 = vmatmul.f32.gmra.mxu0 %v327
        %v391 = vpop.f32.mrf.mxu0
        %v392 = vadd.f32 %v297, %v391
        %393 = vmatmul.f32.gmra.mxu0 %v330
        %v394 = vpop.f32.mrf.mxu0
        %v395 = vadd.f32 %v297, %v394
        %396 = vmatmul.f32.gmra.mxu0 %v333
        %v397 = vpop.f32.mrf.mxu0
        %v398 = vadd.f32 %v297, %v397
        %399 = vmatmul.f32.gmra.mxu0 %v336
        %v400 = vpop.f32.mrf.mxu0
        %v401 = vadd.f32 %v297, %v400
        %402 = vmatmul.f32.gmra.mxu0 %v339
        %v403 = vpop.f32.mrf.mxu0
        %v404 = vadd.f32 %v297, %v403
        %405 = vmatmul.f32.gmra.mxu0 %v342
        %v406 = vpop.f32.mrf.mxu0
        %v407 = vadd.f32 %v297, %v406
        %408 = vmatmul.f32.gmra.mxu0 %v345
        %v409 = vpop.f32.mrf.mxu0
        %v410 = vadd.f32 %v297, %v409
        %411 = vdwg.mxu0
        %v412 = vld [vmem:[%s6 + $0x1] sm:$0x1]
        %v413 = vld [vmem:[%s6 + $0x2] sm:$0x1]
        %v414 = vld [vmem:[%s6 + $0x3] sm:$0x1]
        %v415 = vld [vmem:[%s6 + $0x4] sm:$0x1]
        %v416 = vld [vmem:[%s6 + $0x5] sm:$0x1]
        %v417 = vld [vmem:[%s6 + $0x6] sm:$0x1]
        %v418 = vld [vmem:[%s6 + $0x7] sm:$0x1]
        %v419 = vld [vmem:[%s2] sm:$0xff]
        %v420 = vld [vmem:[%s2 + $0x8] sm:$0xff]
        %v421 = vld [vmem:[%s2 + $0x10] sm:$0xff]
        %v422 = vld [vmem:[%s2 + $0x18] sm:$0xff]
        %v423 = vperm.slane %v412, 0
        %vm424 = vcmask 261120
        %v426 = vsel %vm424, %v365, 0
        %v429 = vsel %vm424, %v368, 0
        %v432 = vsel %vm424, %v371, 0
        %v435 = vsel %vm424, %v374, 0
        %v438 = vsel %vm424, %v377, 0
        %v441 = vsel %vm424, %v380, 0
        %v444 = vsel %vm424, %v383, 0
        %v447 = vsel %vm424, %v386, 0
        %v450 = vsel %vm424, %v389, 0
        %v453 = vsel %vm424, %v392, 0
        %v456 = vsel %vm424, %v395, 0
        %v459 = vsel %vm424, %v398, 0
        %v462 = vsel %vm424, %v401, 0
        %v465 = vsel %vm424, %v404, 0
        %v468 = vsel %vm424, %v407, 0
        %v471 = vsel %vm424, %v410, 0
        %473 = vmatpush.msra.mxu0 0.0
        %474 = vmatpush.msra.mxu0 0.0
        %475 = vmatpush.msra.mxu0 0.0
        %476 = vmatpush.msra.mxu0 0.0
        %477 = vmatpush.msra.mxu0 0.0
        %478 = vmatpush.msra.mxu0 0.0
        %479 = vmatpush.msra.mxu0 0.0
        %480 = vmatpush.msra.mxu0 0.0
        %481 = vmatpush.msra.mxu0 0.0
        %482 = vmatpush.msra.mxu0 0.0
        %483 = vmatpush.msra.mxu0 0.0
        %484 = vmatpush.msra.mxu0 0.0
        %485 = vmatpush.msra.mxu0 %v422
        %486 = vmatpush.msra.mxu0 %v421
        %487 = vmatpush.msra.mxu0 %v420
        %488 = vmatpush.msra.mxu0 %v419
        %489 = vmatmul.f32.gmra.mxu0 %v426
        %v490 = vpop.f32.mrf.mxu0
        %v491 = vadd.f32 %v423, %v490
        %492 = vmatmul.f32.gmra.mxu0 %v429
        %v493 = vpop.f32.mrf.mxu0
        %v494 = vadd.f32 %v423, %v493
        %495 = vmatmul.f32.gmra.mxu0 %v432
        %v496 = vpop.f32.mrf.mxu0
        %v497 = vadd.f32 %v423, %v496
        %498 = vmatmul.f32.gmra.mxu0 %v435
        %v499 = vpop.f32.mrf.mxu0
        %v500 = vadd.f32 %v423, %v499
        %501 = vmatmul.f32.gmra.mxu0 %v438
        %v502 = vpop.f32.mrf.mxu0
        %v503 = vadd.f32 %v423, %v502
        %504 = vmatmul.f32.gmra.mxu0 %v441
        %v505 = vpop.f32.mrf.mxu0
        %v506 = vadd.f32 %v423, %v505
        %507 = vmatmul.f32.gmra.mxu0 %v444
        %v508 = vpop.f32.mrf.mxu0
        %v509 = vadd.f32 %v423, %v508
        %510 = vmatmul.f32.gmra.mxu0 %v447
        %v511 = vpop.f32.mrf.mxu0
        %v512 = vadd.f32 %v423, %v511
        %513 = vmatmul.f32.gmra.mxu0 %v450
        %v514 = vpop.f32.mrf.mxu0
        %v515 = vadd.f32 %v423, %v514
        %516 = vmatmul.f32.gmra.mxu0 %v453
        %v517 = vpop.f32.mrf.mxu0
        %v518 = vadd.f32 %v423, %v517
        %519 = vmatmul.f32.gmra.mxu0 %v456
        %v520 = vpop.f32.mrf.mxu0
        %v521 = vadd.f32 %v423, %v520
        %522 = vmatmul.f32.gmra.mxu0 %v459
        %v523 = vpop.f32.mrf.mxu0
        %v524 = vadd.f32 %v423, %v523
        %525 = vmatmul.f32.gmra.mxu0 %v462
        %v526 = vpop.f32.mrf.mxu0
        %v527 = vadd.f32 %v423, %v526
        %528 = vmatmul.f32.gmra.mxu0 %v465
        %v529 = vpop.f32.mrf.mxu0
        %v530 = vadd.f32 %v423, %v529
        %531 = vmatmul.f32.gmra.mxu0 %v468
        %v532 = vpop.f32.mrf.mxu0
        %v533 = vadd.f32 %v423, %v532
        %534 = vmatmul.f32.gmra.mxu0 %v471
        %v535 = vpop.f32.mrf.mxu0
        %v536 = vadd.f32 %v423, %v535
        %537 = vdwg.mxu0
        %v538 = vadd.f32 %v365, %v491
        %v539 = vadd.f32 %v368, %v494
        %v540 = vadd.f32 %v371, %v497
        %v541 = vadd.f32 %v374, %v500
        %v542 = vadd.f32 %v377, %v503
        %v543 = vadd.f32 %v380, %v506
        %v544 = vadd.f32 %v383, %v509
        %v545 = vadd.f32 %v386, %v512
        %v546 = vadd.f32 %v389, %v515
        %v547 = vadd.f32 %v392, %v518
        %v548 = vadd.f32 %v395, %v521
        %v549 = vadd.f32 %v398, %v524
        %v550 = vadd.f32 %v401, %v527
        %v551 = vadd.f32 %v404, %v530
        %v552 = vadd.f32 %v407, %v533
        %v553 = vadd.f32 %v410, %v536
        %v554 = vsel %vm424, %v538, 0.0
        %555 = vadd.xlane.f32.xlu0 %v554
        %v556 = vpop.xlane.xlu0 %555
        %v557 = vsel %vm424, %v539, 0.0
        %558 = vadd.xlane.f32.xlu0 %v557
        %v559 = vpop.xlane.xlu0 %558
        %v560 = vsel %vm424, %v540, 0.0
        %561 = vadd.xlane.f32.xlu0 %v560
        %v562 = vpop.xlane.xlu0 %561
        %v563 = vsel %vm424, %v541, 0.0
        %564 = vadd.xlane.f32.xlu0 %v563
        %v565 = vpop.xlane.xlu0 %564
        %v566 = vsel %vm424, %v542, 0.0
        %567 = vadd.xlane.f32.xlu0 %v566
        %v568 = vpop.xlane.xlu0 %567
        %v569 = vsel %vm424, %v543, 0.0
        %570 = vadd.xlane.f32.xlu0 %v569
        %v571 = vpop.xlane.xlu0 %570
        %v572 = vsel %vm424, %v544, 0.0
        %573 = vadd.xlane.f32.xlu0 %v572
        %v574 = vpop.xlane.xlu0 %573
        %v575 = vsel %vm424, %v545, 0.0
        %576 = vadd.xlane.f32.xlu0 %v575
        %v577 = vpop.xlane.xlu0 %576
        %v578 = vsel %vm424, %v546, 0.0
        %579 = vadd.xlane.f32.xlu0 %v578
        %v580 = vpop.xlane.xlu0 %579
        %v581 = vsel %vm424, %v547, 0.0
        %582 = vadd.xlane.f32.xlu0 %v581
        %v583 = vpop.xlane.xlu0 %582
        %v584 = vsel %vm424, %v548, 0.0
        %585 = vadd.xlane.f32.xlu0 %v584
        %v586 = vpop.xlane.xlu0 %585
        %v587 = vsel %vm424, %v549, 0.0
        %588 = vadd.xlane.f32.xlu0 %v587
        %v589 = vpop.xlane.xlu0 %588
        %v590 = vsel %vm424, %v550, 0.0
        %591 = vadd.xlane.f32.xlu0 %v590
        %v592 = vpop.xlane.xlu0 %591
        %v593 = vsel %vm424, %v551, 0.0
        %594 = vadd.xlane.f32.xlu0 %v593
        %v595 = vpop.xlane.xlu0 %594
        %v596 = vsel %vm424, %v552, 0.0
        %597 = vadd.xlane.f32.xlu0 %v596
        %v598 = vpop.xlane.xlu0 %597
        %v599 = vsel %vm424, %v553, 0.0
        %600 = vadd.xlane.f32.xlu0 %v599
        %v601 = vpop.xlane.xlu0 %600
        %v602 = vrcp.pop 32.0
        %v603 = vmul.f32 32.0, %v602
        %v604 = vsub.f32 1.0, %v603
        %v605 = vmul.f32 %v602, %v604
        %v606 = vadd.f32 %v602, %v605
        %vm607 = vweird.f32 %v602
        %v608 = vsel %vm607, %v602, %v606
        %v609 = vmul.f32 %v556, %v608
        %v610 = vmul.f32 %v559, %v608
        %v611 = vmul.f32 %v562, %v608
        %v612 = vmul.f32 %v565, %v608
        %v613 = vmul.f32 %v568, %v608
        %v614 = vmul.f32 %v571, %v608
        %v615 = vmul.f32 %v574, %v608
        %v616 = vmul.f32 %v577, %v608
        %v617 = vmul.f32 %v580, %v608
        %v618 = vmul.f32 %v583, %v608
        %v619 = vmul.f32 %v586, %v608
        %v620 = vmul.f32 %v589, %v608
        %v621 = vmul.f32 %v592, %v608
        %v622 = vmul.f32 %v595, %v608
        %v623 = vmul.f32 %v598, %v608
        %v624 = vmul.f32 %v601, %v608
        %v625 = vsub.f32 %v538, %v609
        %v626 = vsub.f32 %v539, %v610
        %v627 = vsub.f32 %v540, %v611
        %v628 = vsub.f32 %v541, %v612
        %v629 = vsub.f32 %v542, %v613
        %v630 = vsub.f32 %v543, %v614
        %v631 = vsub.f32 %v544, %v615
        %v632 = vsub.f32 %v545, %v616
        %v633 = vsub.f32 %v546, %v617
        %v634 = vsub.f32 %v547, %v618
        %v635 = vsub.f32 %v548, %v619
        %v636 = vsub.f32 %v549, %v620
        %v637 = vsub.f32 %v550, %v621
        %v638 = vsub.f32 %v551, %v622
        %v639 = vsub.f32 %v552, %v623
        %v640 = vsub.f32 %v553, %v624
        %v641 = vmul.f32 %v625, %v625
        %v642 = vmul.f32 %v626, %v626
        %v643 = vmul.f32 %v627, %v627
        %v644 = vmul.f32 %v628, %v628
        %v645 = vmul.f32 %v629, %v629
        %v646 = vmul.f32 %v630, %v630
        %v647 = vmul.f32 %v631, %v631
        %v648 = vmul.f32 %v632, %v632
        %v649 = vmul.f32 %v633, %v633
        %v650 = vmul.f32 %v634, %v634
        %v651 = vmul.f32 %v635, %v635
        %v652 = vmul.f32 %v636, %v636
        %v653 = vmul.f32 %v637, %v637
        %v654 = vmul.f32 %v638, %v638
        %v655 = vmul.f32 %v639, %v639
        %v656 = vmul.f32 %v640, %v640
        %v657 = vsel %vm424, %v641, 0.0
        %658 = vadd.xlane.f32.xlu0 %v657
        %v659 = vpop.xlane.xlu0 %658
        %v660 = vsel %vm424, %v642, 0.0
        %661 = vadd.xlane.f32.xlu0 %v660
        %v662 = vpop.xlane.xlu0 %661
        %v663 = vsel %vm424, %v643, 0.0
        %664 = vadd.xlane.f32.xlu0 %v663
        %v665 = vpop.xlane.xlu0 %664
        %v666 = vsel %vm424, %v644, 0.0
        %667 = vadd.xlane.f32.xlu0 %v666
        %v668 = vpop.xlane.xlu0 %667
        %v669 = vsel %vm424, %v645, 0.0
        %670 = vadd.xlane.f32.xlu0 %v669
        %v671 = vpop.xlane.xlu0 %670
        %v672 = vsel %vm424, %v646, 0.0
        %673 = vadd.xlane.f32.xlu0 %v672
        %v674 = vpop.xlane.xlu0 %673
        %v675 = vsel %vm424, %v647, 0.0
        %676 = vadd.xlane.f32.xlu0 %v675
        %v677 = vpop.xlane.xlu0 %676
        %v678 = vsel %vm424, %v648, 0.0
        %679 = vadd.xlane.f32.xlu0 %v678
        %v680 = vpop.xlane.xlu0 %679
        %v681 = vsel %vm424, %v649, 0.0
        %682 = vadd.xlane.f32.xlu0 %v681
        %v683 = vpop.xlane.xlu0 %682
        %v684 = vsel %vm424, %v650, 0.0
        %685 = vadd.xlane.f32.xlu0 %v684
        %v686 = vpop.xlane.xlu0 %685
        %v687 = vsel %vm424, %v651, 0.0
        %688 = vadd.xlane.f32.xlu0 %v687
        %v689 = vpop.xlane.xlu0 %688
        %v690 = vsel %vm424, %v652, 0.0
        %691 = vadd.xlane.f32.xlu0 %v690
        %v692 = vpop.xlane.xlu0 %691
        %v693 = vsel %vm424, %v653, 0.0
        %694 = vadd.xlane.f32.xlu0 %v693
        %v695 = vpop.xlane.xlu0 %694
        %v696 = vsel %vm424, %v654, 0.0
        %697 = vadd.xlane.f32.xlu0 %v696
        %v698 = vpop.xlane.xlu0 %697
        %v699 = vsel %vm424, %v655, 0.0
        %700 = vadd.xlane.f32.xlu0 %v699
        %v701 = vpop.xlane.xlu0 %700
        %v702 = vsel %vm424, %v656, 0.0
        %703 = vadd.xlane.f32.xlu0 %v702
        %v704 = vpop.xlane.xlu0 %703
        %v705 = vmul.f32 %v659, %v608
        %v706 = vmul.f32 %v662, %v608
        %v707 = vmul.f32 %v665, %v608
        %v708 = vmul.f32 %v668, %v608
        %v709 = vmul.f32 %v671, %v608
        %v710 = vmul.f32 %v674, %v608
        %v711 = vmul.f32 %v677, %v608
        %v712 = vmul.f32 %v680, %v608
        %v713 = vmul.f32 %v683, %v608
        %v714 = vmul.f32 %v686, %v608
        %v715 = vmul.f32 %v689, %v608
        %v716 = vmul.f32 %v692, %v608
        %v717 = vmul.f32 %v695, %v608
        %v718 = vmul.f32 %v698, %v608
        %v719 = vmul.f32 %v701, %v608
        %v720 = vmul.f32 %v704, %v608
        %v721 = vadd.f32 %v705, 1e-05
        %v722 = vadd.f32 %v706, 1e-05
        %v723 = vadd.f32 %v707, 1e-05
        %v724 = vadd.f32 %v708, 1e-05
        %v725 = vadd.f32 %v709, 1e-05
        %v726 = vadd.f32 %v710, 1e-05
        %v727 = vadd.f32 %v711, 1e-05
        %v728 = vadd.f32 %v712, 1e-05
        %v729 = vadd.f32 %v713, 1e-05
        %v730 = vadd.f32 %v714, 1e-05
        %v731 = vadd.f32 %v715, 1e-05
        %v732 = vadd.f32 %v716, 1e-05
        %v733 = vadd.f32 %v717, 1e-05
        %v734 = vadd.f32 %v718, 1e-05
        %v735 = vadd.f32 %v719, 1e-05
        %v736 = vadd.f32 %v720, 1e-05
        %v737 = vrsqrt.pop %v721
        %v738 = vmul.f32 %v737, %v721
        %v739 = vmul.f32 %v738, %v737
        %v740 = vmul.f32 0.5, %v739
        %v741 = vsub.f32 1.5, %v740
        %v742 = vmul.f32 %v737, %v741
        %vm743 = vweird.f32 %v721
        %vm744 = vweird.f32 %v737
        %vm745 = vmor %vm743, %vm744
        %v746 = vsel %vm745, %v737, %v742
        %v747 = vrsqrt.pop %v722
        %v748 = vmul.f32 %v747, %v722
        %v749 = vmul.f32 %v748, %v747
        %v750 = vmul.f32 0.5, %v749
        %v751 = vsub.f32 1.5, %v750
        %v752 = vmul.f32 %v747, %v751
        %vm753 = vweird.f32 %v722
        %vm754 = vweird.f32 %v747
        %vm755 = vmor %vm753, %vm754
        %v756 = vsel %vm755, %v747, %v752
        %v757 = vrsqrt.pop %v723
        %v758 = vmul.f32 %v757, %v723
        %v759 = vmul.f32 %v758, %v757
        %v760 = vmul.f32 0.5, %v759
        %v761 = vsub.f32 1.5, %v760
        %v762 = vmul.f32 %v757, %v761
        %vm763 = vweird.f32 %v723
        %vm764 = vweird.f32 %v757
        %vm765 = vmor %vm763, %vm764
        %v766 = vsel %vm765, %v757, %v762
        %v767 = vrsqrt.pop %v724
        %v768 = vmul.f32 %v767, %v724
        %v769 = vmul.f32 %v768, %v767
        %v770 = vmul.f32 0.5, %v769
        %v771 = vsub.f32 1.5, %v770
        %v772 = vmul.f32 %v767, %v771
        %vm773 = vweird.f32 %v724
        %vm774 = vweird.f32 %v767
        %vm775 = vmor %vm773, %vm774
        %v776 = vsel %vm775, %v767, %v772
        %v777 = vrsqrt.pop %v725
        %v778 = vmul.f32 %v777, %v725
        %v779 = vmul.f32 %v778, %v777
        %v780 = vmul.f32 0.5, %v779
        %v781 = vsub.f32 1.5, %v780
        %v782 = vmul.f32 %v777, %v781
        %vm783 = vweird.f32 %v725
        %vm784 = vweird.f32 %v777
        %vm785 = vmor %vm783, %vm784
        %v786 = vsel %vm785, %v777, %v782
        %v787 = vrsqrt.pop %v726
        %v788 = vmul.f32 %v787, %v726
        %v789 = vmul.f32 %v788, %v787
        %v790 = vmul.f32 0.5, %v789
        %v791 = vsub.f32 1.5, %v790
        %v792 = vmul.f32 %v787, %v791
        %vm793 = vweird.f32 %v726
        %vm794 = vweird.f32 %v787
        %vm795 = vmor %vm793, %vm794
        %v796 = vsel %vm795, %v787, %v792
        %v797 = vrsqrt.pop %v727
        %v798 = vmul.f32 %v797, %v727
        %v799 = vmul.f32 %v798, %v797
        %v800 = vmul.f32 0.5, %v799
        %v801 = vsub.f32 1.5, %v800
        %v802 = vmul.f32 %v797, %v801
        %vm803 = vweird.f32 %v727
        %vm804 = vweird.f32 %v797
        %vm805 = vmor %vm803, %vm804
        %v806 = vsel %vm805, %v797, %v802
        %v807 = vrsqrt.pop %v728
        %v808 = vmul.f32 %v807, %v728
        %v809 = vmul.f32 %v808, %v807
        %v810 = vmul.f32 0.5, %v809
        %v811 = vsub.f32 1.5, %v810
        %v812 = vmul.f32 %v807, %v811
        %vm813 = vweird.f32 %v728
        %vm814 = vweird.f32 %v807
        %vm815 = vmor %vm813, %vm814
        %v816 = vsel %vm815, %v807, %v812
        %v817 = vrsqrt.pop %v729
        %v818 = vmul.f32 %v817, %v729
        %v819 = vmul.f32 %v818, %v817
        %v820 = vmul.f32 0.5, %v819
        %v821 = vsub.f32 1.5, %v820
        %v822 = vmul.f32 %v817, %v821
        %vm823 = vweird.f32 %v729
        %vm824 = vweird.f32 %v817
        %vm825 = vmor %vm823, %vm824
        %v826 = vsel %vm825, %v817, %v822
        %v827 = vrsqrt.pop %v730
        %v828 = vmul.f32 %v827, %v730
        %v829 = vmul.f32 %v828, %v827
        %v830 = vmul.f32 0.5, %v829
        %v831 = vsub.f32 1.5, %v830
        %v832 = vmul.f32 %v827, %v831
        %vm833 = vweird.f32 %v730
        %vm834 = vweird.f32 %v827
        %vm835 = vmor %vm833, %vm834
        %v836 = vsel %vm835, %v827, %v832
        %v837 = vrsqrt.pop %v731
        %v838 = vmul.f32 %v837, %v731
        %v839 = vmul.f32 %v838, %v837
        %v840 = vmul.f32 0.5, %v839
        %v841 = vsub.f32 1.5, %v840
        %v842 = vmul.f32 %v837, %v841
        %vm843 = vweird.f32 %v731
        %vm844 = vweird.f32 %v837
        %vm845 = vmor %vm843, %vm844
        %v846 = vsel %vm845, %v837, %v842
        %v847 = vrsqrt.pop %v732
        %v848 = vmul.f32 %v847, %v732
        %v849 = vmul.f32 %v848, %v847
        %v850 = vmul.f32 0.5, %v849
        %v851 = vsub.f32 1.5, %v850
        %v852 = vmul.f32 %v847, %v851
        %vm853 = vweird.f32 %v732
        %vm854 = vweird.f32 %v847
        %vm855 = vmor %vm853, %vm854
        %v856 = vsel %vm855, %v847, %v852
        %v857 = vrsqrt.pop %v733
        %v858 = vmul.f32 %v857, %v733
        %v859 = vmul.f32 %v858, %v857
        %v860 = vmul.f32 0.5, %v859
        %v861 = vsub.f32 1.5, %v860
        %v862 = vmul.f32 %v857, %v861
        %vm863 = vweird.f32 %v733
        %vm864 = vweird.f32 %v857
        %vm865 = vmor %vm863, %vm864
        %v866 = vsel %vm865, %v857, %v862
        %v867 = vrsqrt.pop %v734
        %v868 = vmul.f32 %v867, %v734
        %v869 = vmul.f32 %v868, %v867
        %v870 = vmul.f32 0.5, %v869
        %v871 = vsub.f32 1.5, %v870
        %v872 = vmul.f32 %v867, %v871
        %vm873 = vweird.f32 %v734
        %vm874 = vweird.f32 %v867
        %vm875 = vmor %vm873, %vm874
        %v876 = vsel %vm875, %v867, %v872
        %v877 = vrsqrt.pop %v735
        %v878 = vmul.f32 %v877, %v735
        %v879 = vmul.f32 %v878, %v877
        %v880 = vmul.f32 0.5, %v879
        %v881 = vsub.f32 1.5, %v880
        %v882 = vmul.f32 %v877, %v881
        %vm883 = vweird.f32 %v735
        %vm884 = vweird.f32 %v877
        %vm885 = vmor %vm883, %vm884
        %v886 = vsel %vm885, %v877, %v882
        %v887 = vrsqrt.pop %v736
        %v888 = vmul.f32 %v887, %v736
        %v889 = vmul.f32 %v888, %v887
        %v890 = vmul.f32 0.5, %v889
        %v891 = vsub.f32 1.5, %v890
        %v892 = vmul.f32 %v887, %v891
        %vm893 = vweird.f32 %v736
        %vm894 = vweird.f32 %v887
        %vm895 = vmor %vm893, %vm894
        %v896 = vsel %vm895, %v887, %v892
        %v897 = vmul.f32 %v625, %v746
        %v898 = vmul.f32 %v626, %v756
        %v899 = vmul.f32 %v627, %v766
        %v900 = vmul.f32 %v628, %v776
        %v901 = vmul.f32 %v629, %v786
        %v902 = vmul.f32 %v630, %v796
        %v903 = vmul.f32 %v631, %v806
        %v904 = vmul.f32 %v632, %v816
        %v905 = vmul.f32 %v633, %v826
        %v906 = vmul.f32 %v634, %v836
        %v907 = vmul.f32 %v635, %v846
        %v908 = vmul.f32 %v636, %v856
        %v909 = vmul.f32 %v637, %v866
        %v910 = vmul.f32 %v638, %v876
        %v911 = vmul.f32 %v639, %v886
        %v912 = vmul.f32 %v640, %v896
        %v913 = vperm.slane %v413, 0
        %v914 = vmul.f32 %v897, %v913
        %v915 = vmul.f32 %v898, %v913
        %v916 = vmul.f32 %v899, %v913
        %v917 = vmul.f32 %v900, %v913
        %v918 = vmul.f32 %v901, %v913
        %v919 = vmul.f32 %v902, %v913
        %v920 = vmul.f32 %v903, %v913
        %v921 = vmul.f32 %v904, %v913
        %v922 = vmul.f32 %v905, %v913
        %v923 = vmul.f32 %v906, %v913
        %v924 = vmul.f32 %v907, %v913
        %v925 = vmul.f32 %v908, %v913
        %v926 = vmul.f32 %v909, %v913
        %v927 = vmul.f32 %v910, %v913
        %v928 = vmul.f32 %v911, %v913
        %v929 = vmul.f32 %v912, %v913
        %v930 = vperm.slane %v414, 0
        %v931 = vadd.f32 %v914, %v930
        %v932 = vadd.f32 %v915, %v930
        %v933 = vadd.f32 %v916, %v930
        %v934 = vadd.f32 %v917, %v930
        %v935 = vadd.f32 %v918, %v930
        %v936 = vadd.f32 %v919, %v930
        %v937 = vadd.f32 %v920, %v930
        %v938 = vadd.f32 %v921, %v930
        %v939 = vadd.f32 %v922, %v930
        %v940 = vadd.f32 %v923, %v930
        %v941 = vadd.f32 %v924, %v930
        %v942 = vadd.f32 %v925, %v930
        %v943 = vadd.f32 %v926, %v930
        %v944 = vadd.f32 %v927, %v930
        %v945 = vadd.f32 %v928, %v930
        %v946 = vadd.f32 %v929, %v930
        %v947 = vld [vmem:[%s3] sm:$0xff]
        %v948 = vld [vmem:[%s3 + $0x8] sm:$0xff]
        %v949 = vld [vmem:[%s3 + $0x10] sm:$0xff]
        %v950 = vld [vmem:[%s3 + $0x18] sm:$0xff]
        %v951 = vperm.slane %v415, 0
        %v953 = vsel %vm424, %v931, 0
        %v956 = vsel %vm424, %v932, 0
        %v959 = vsel %vm424, %v933, 0
        %v962 = vsel %vm424, %v934, 0
        %v965 = vsel %vm424, %v935, 0
        %v968 = vsel %vm424, %v936, 0
        %v971 = vsel %vm424, %v937, 0
        %v974 = vsel %vm424, %v938, 0
        %v977 = vsel %vm424, %v939, 0
        %v980 = vsel %vm424, %v940, 0
        %v983 = vsel %vm424, %v941, 0
        %v986 = vsel %vm424, %v942, 0
        %v989 = vsel %vm424, %v943, 0
        %v992 = vsel %vm424, %v944, 0
        %v995 = vsel %vm424, %v945, 0
        %v998 = vsel %vm424, %v946, 0
        %1000 = vmatpush.msra.mxu0 0.0
        %1001 = vmatpush.msra.mxu0 0.0
        %1002 = vmatpush.msra.mxu0 0.0
        %1003 = vmatpush.msra.mxu0 0.0
        %1004 = vmatpush.msra.mxu0 0.0
        %1005 = vmatpush.msra.mxu0 0.0
        %1006 = vmatpush.msra.mxu0 0.0
        %1007 = vmatpush.msra.mxu0 0.0
        %1008 = vmatpush.msra.mxu0 0.0
        %1009 = vmatpush.msra.mxu0 0.0
        %1010 = vmatpush.msra.mxu0 0.0
        %1011 = vmatpush.msra.mxu0 0.0
        %1012 = vmatpush.msra.mxu0 %v950
        %1013 = vmatpush.msra.mxu0 %v949
        %1014 = vmatpush.msra.mxu0 %v948
        %1015 = vmatpush.msra.mxu0 %v947
        %1016 = vmatmul.f32.gmra.mxu0 %v953
        %v1017 = vpop.f32.mrf.mxu0
        %v1018 = vadd.f32 %v951, %v1017
        %1019 = vmatmul.f32.gmra.mxu0 %v956
        %v1020 = vpop.f32.mrf.mxu0
        %v1021 = vadd.f32 %v951, %v1020
        %1022 = vmatmul.f32.gmra.mxu0 %v959
        %v1023 = vpop.f32.mrf.mxu0
        %v1024 = vadd.f32 %v951, %v1023
        %1025 = vmatmul.f32.gmra.mxu0 %v962
        %v1026 = vpop.f32.mrf.mxu0
        %v1027 = vadd.f32 %v951, %v1026
        %1028 = vmatmul.f32.gmra.mxu0 %v965
        %v1029 = vpop.f32.mrf.mxu0
        %v1030 = vadd.f32 %v951, %v1029
        %1031 = vmatmul.f32.gmra.mxu0 %v968
        %v1032 = vpop.f32.mrf.mxu0
        %v1033 = vadd.f32 %v951, %v1032
        %1034 = vmatmul.f32.gmra.mxu0 %v971
        %v1035 = vpop.f32.mrf.mxu0
        %v1036 = vadd.f32 %v951, %v1035
        %1037 = vmatmul.f32.gmra.mxu0 %v974
        %v1038 = vpop.f32.mrf.mxu0
        %v1039 = vadd.f32 %v951, %v1038
        %1040 = vmatmul.f32.gmra.mxu0 %v977
        %v1041 = vpop.f32.mrf.mxu0
        %v1042 = vadd.f32 %v951, %v1041
        %1043 = vmatmul.f32.gmra.mxu0 %v980
        %v1044 = vpop.f32.mrf.mxu0
        %v1045 = vadd.f32 %v951, %v1044
        %1046 = vmatmul.f32.gmra.mxu0 %v983
        %v1047 = vpop.f32.mrf.mxu0
        %v1048 = vadd.f32 %v951, %v1047
        %1049 = vmatmul.f32.gmra.mxu0 %v986
        %v1050 = vpop.f32.mrf.mxu0
        %v1051 = vadd.f32 %v951, %v1050
        %1052 = vmatmul.f32.gmra.mxu0 %v989
        %v1053 = vpop.f32.mrf.mxu0
        %v1054 = vadd.f32 %v951, %v1053
        %1055 = vmatmul.f32.gmra.mxu0 %v992
        %v1056 = vpop.f32.mrf.mxu0
        %v1057 = vadd.f32 %v951, %v1056
        %1058 = vmatmul.f32.gmra.mxu0 %v995
        %v1059 = vpop.f32.mrf.mxu0
        %v1060 = vadd.f32 %v951, %v1059
        %1061 = vmatmul.f32.gmra.mxu0 %v998
        %v1062 = vpop.f32.mrf.mxu0
        %v1063 = vadd.f32 %v951, %v1062
        %1064 = vdwg.mxu0
        %v1065 = vmul.f32 %v1018, 0.5
        %v1066 = vmul.f32 %v1021, 0.5
        %v1067 = vmul.f32 %v1024, 0.5
        %v1068 = vmul.f32 %v1027, 0.5
        %v1069 = vmul.f32 %v1030, 0.5
        %v1070 = vmul.f32 %v1033, 0.5
        %v1071 = vmul.f32 %v1036, 0.5
        %v1072 = vmul.f32 %v1039, 0.5
        %v1073 = vmul.f32 %v1042, 0.5
        %v1074 = vmul.f32 %v1045, 0.5
        %v1075 = vmul.f32 %v1048, 0.5
        %v1076 = vmul.f32 %v1051, 0.5
        %v1077 = vmul.f32 %v1054, 0.5
        %v1078 = vmul.f32 %v1057, 0.5
        %v1079 = vmul.f32 %v1060, 0.5
        %v1080 = vmul.f32 %v1063, 0.5
        %v1081 = vmul.f32 %v1018, 0.70710677
        %v1082 = vmul.f32 %v1021, 0.70710677
        %v1083 = vmul.f32 %v1024, 0.70710677
        %v1084 = vmul.f32 %v1027, 0.70710677
        %v1085 = vmul.f32 %v1030, 0.70710677
        %v1086 = vmul.f32 %v1033, 0.70710677
        %v1087 = vmul.f32 %v1036, 0.70710677
        %v1088 = vmul.f32 %v1039, 0.70710677
        %v1089 = vmul.f32 %v1042, 0.70710677
        %v1090 = vmul.f32 %v1045, 0.70710677
        %v1091 = vmul.f32 %v1048, 0.70710677
        %v1092 = vmul.f32 %v1051, 0.70710677
        %v1093 = vmul.f32 %v1054, 0.70710677
        %v1094 = vmul.f32 %v1057, 0.70710677
        %v1095 = vmul.f32 %v1060, 0.70710677
        %v1096 = vmul.f32 %v1063, 0.70710677
        %v1097 = vmul.f32 %v1081, %v1081
        %v1098 = vmin.f32 16.0, %v1097
        %v1099 = vmul.f32 %v1098, 2.1237322e-06
        %v1100 = vadd.f32 %v1099, 0.00028619796
        %v1101 = vmul.f32 %v1098, %v1100
        %v1102 = vadd.f32 %v1101, 0.0036580483
        %v1103 = vmul.f32 %v1098, %v1102
        %v1104 = vadd.f32 %v1103, 0.05243302
        %v1105 = vmul.f32 %v1098, %v1104
        %v1106 = vadd.f32 %v1105, 0.18741608
        %v1107 = vmul.f32 %v1098, %v1106
        %v1108 = vadd.f32 %v1107, 1.1283791
        %v1109 = vmul.f32 %v1081, %v1108
        %v1110 = vmul.f32 %v1098, 3.8918573e-05
        %v1111 = vadd.f32 %v1110, 0.001143296
        %v1112 = vmul.f32 %v1098, %v1111
        %v1113 = vadd.f32 %v1112, 0.014752088
        %v1114 = vmul.f32 %v1098, %v1113
        %v1115 = vadd.f32 %v1114, 0.112945676
        %v1116 = vmul.f32 %v1098, %v1115
        %v1117 = vadd.f32 %v1116, 0.4994258
        %v1118 = vmul.f32 %v1098, %v1117
        %v1119 = vadd.f32 %v1118, 1.0
        %v1120 = vrcp.pop %v1119
        %v1121 = vmul.f32 %v1119, %v1120
        %v1122 = vsub.f32 1.0, %v1121
        %v1123 = vmul.f32 %v1120, %v1122
        %v1124 = vadd.f32 %v1120, %v1123
        %vm1125 = vweird.f32 %v1119
        %vm1126 = vweird.f32 %v1120
        %vm1127 = vmor %vm1125, %vm1126
        %v1128 = vsel %vm1127, %v1120, %v1124
        %v1129 = vand.u32 2147483647, %v1119
        %vm1130 = vcmp.eq.f32.partialorder %v1129, 8.507059e+37
        %v1131 = vand.u32 %v1119, 2147483648
        %v1132 = vor.u32 1.1754944e-38, %v1131
        %v1133 = vsel %vm1130, %v1132, %v1128
        %v1134 = vmul.f32 %v1109, %v1133
        %v1135 = vmin.f32 %v1134, 1.0
        %v1136 = vmax.f32 %v1135, -1.0
        %v1137 = vmul.f32 %v1082, %v1082
        %v1138 = vmin.f32 16.0, %v1137
        %v1139 = vmul.f32 %v1138, 2.1237322e-06
        %v1140 = vadd.f32 %v1139, 0.00028619796
        %v1141 = vmul.f32 %v1138, %v1140
        %v1142 = vadd.f32 %v1141, 0.0036580483
        %v1143 = vmul.f32 %v1138, %v1142
        %v1144 = vadd.f32 %v1143, 0.05243302
        %v1145 = vmul.f32 %v1138, %v1144
        %v1146 = vadd.f32 %v1145, 0.18741608
        %v1147 = vmul.f32 %v1138, %v1146
        %v1148 = vadd.f32 %v1147, 1.1283791
        %v1149 = vmul.f32 %v1082, %v1148
        %v1150 = vmul.f32 %v1138, 3.8918573e-05
        %v1151 = vadd.f32 %v1150, 0.001143296
        %v1152 = vmul.f32 %v1138, %v1151
        %v1153 = vadd.f32 %v1152, 0.014752088
        %v1154 = vmul.f32 %v1138, %v1153
        %v1155 = vadd.f32 %v1154, 0.112945676
        %v1156 = vmul.f32 %v1138, %v1155
        %v1157 = vadd.f32 %v1156, 0.4994258
        %v1158 = vmul.f32 %v1138, %v1157
        %v1159 = vadd.f32 %v1158, 1.0
        %v1160 = vrcp.pop %v1159
        %v1161 = vmul.f32 %v1159, %v1160
        %v1162 = vsub.f32 1.0, %v1161
        %v1163 = vmul.f32 %v1160, %v1162
        %v1164 = vadd.f32 %v1160, %v1163
        %vm1165 = vweird.f32 %v1159
        %vm1166 = vweird.f32 %v1160
        %vm1167 = vmor %vm1165, %vm1166
        %v1168 = vsel %vm1167, %v1160, %v1164
        %v1169 = vand.u32 2147483647, %v1159
        %vm1170 = vcmp.eq.f32.partialorder %v1169, 8.507059e+37
        %v1171 = vand.u32 %v1159, 2147483648
        %v1172 = vor.u32 1.1754944e-38, %v1171
        %v1173 = vsel %vm1170, %v1172, %v1168
        %v1174 = vmul.f32 %v1149, %v1173
        %v1175 = vmin.f32 %v1174, 1.0
        %v1176 = vmax.f32 %v1175, -1.0
        %v1177 = vmul.f32 %v1083, %v1083
        %v1178 = vmin.f32 16.0, %v1177
        %v1179 = vmul.f32 %v1178, 2.1237322e-06
        %v1180 = vadd.f32 %v1179, 0.00028619796
        %v1181 = vmul.f32 %v1178, %v1180
        %v1182 = vadd.f32 %v1181, 0.0036580483
        %v1183 = vmul.f32 %v1178, %v1182
        %v1184 = vadd.f32 %v1183, 0.05243302
        %v1185 = vmul.f32 %v1178, %v1184
        %v1186 = vadd.f32 %v1185, 0.18741608
        %v1187 = vmul.f32 %v1178, %v1186
        %v1188 = vadd.f32 %v1187, 1.1283791
        %v1189 = vmul.f32 %v1083, %v1188
        %v1190 = vmul.f32 %v1178, 3.8918573e-05
        %v1191 = vadd.f32 %v1190, 0.001143296
        %v1192 = vmul.f32 %v1178, %v1191
        %v1193 = vadd.f32 %v1192, 0.014752088
        %v1194 = vmul.f32 %v1178, %v1193
        %v1195 = vadd.f32 %v1194, 0.112945676
        %v1196 = vmul.f32 %v1178, %v1195
        %v1197 = vadd.f32 %v1196, 0.4994258
        %v1198 = vmul.f32 %v1178, %v1197
        %v1199 = vadd.f32 %v1198, 1.0
        %v1200 = vrcp.pop %v1199
        %v1201 = vmul.f32 %v1199, %v1200
        %v1202 = vsub.f32 1.0, %v1201
        %v1203 = vmul.f32 %v1200, %v1202
        %v1204 = vadd.f32 %v1200, %v1203
        %vm1205 = vweird.f32 %v1199
        %vm1206 = vweird.f32 %v1200
        %vm1207 = vmor %vm1205, %vm1206
        %v1208 = vsel %vm1207, %v1200, %v1204
        %v1209 = vand.u32 2147483647, %v1199
        %vm1210 = vcmp.eq.f32.partialorder %v1209, 8.507059e+37
        %v1211 = vand.u32 %v1199, 2147483648
        %v1212 = vor.u32 1.1754944e-38, %v1211
        %v1213 = vsel %vm1210, %v1212, %v1208
        %v1214 = vmul.f32 %v1189, %v1213
        %v1215 = vmin.f32 %v1214, 1.0
        %v1216 = vmax.f32 %v1215, -1.0
        %v1217 = vmul.f32 %v1084, %v1084
        %v1218 = vmin.f32 16.0, %v1217
        %v1219 = vmul.f32 %v1218, 2.1237322e-06
        %v1220 = vadd.f32 %v1219, 0.00028619796
        %v1221 = vmul.f32 %v1218, %v1220
        %v1222 = vadd.f32 %v1221, 0.0036580483
        %v1223 = vmul.f32 %v1218, %v1222
        %v1224 = vadd.f32 %v1223, 0.05243302
        %v1225 = vmul.f32 %v1218, %v1224
        %v1226 = vadd.f32 %v1225, 0.18741608
        %v1227 = vmul.f32 %v1218, %v1226
        %v1228 = vadd.f32 %v1227, 1.1283791
        %v1229 = vmul.f32 %v1084, %v1228
        %v1230 = vmul.f32 %v1218, 3.8918573e-05
        %v1231 = vadd.f32 %v1230, 0.001143296
        %v1232 = vmul.f32 %v1218, %v1231
        %v1233 = vadd.f32 %v1232, 0.014752088
        %v1234 = vmul.f32 %v1218, %v1233
        %v1235 = vadd.f32 %v1234, 0.112945676
        %v1236 = vmul.f32 %v1218, %v1235
        %v1237 = vadd.f32 %v1236, 0.4994258
        %v1238 = vmul.f32 %v1218, %v1237
        %v1239 = vadd.f32 %v1238, 1.0
        %v1240 = vrcp.pop %v1239
        %v1241 = vmul.f32 %v1239, %v1240
        %v1242 = vsub.f32 1.0, %v1241
        %v1243 = vmul.f32 %v1240, %v1242
        %v1244 = vadd.f32 %v1240, %v1243
        %vm1245 = vweird.f32 %v1239
        %vm1246 = vweird.f32 %v1240
        %vm1247 = vmor %vm1245, %vm1246
        %v1248 = vsel %vm1247, %v1240, %v1244
        %v1249 = vand.u32 2147483647, %v1239
        %vm1250 = vcmp.eq.f32.partialorder %v1249, 8.507059e+37
        %v1251 = vand.u32 %v1239, 2147483648
        %v1252 = vor.u32 1.1754944e-38, %v1251
        %v1253 = vsel %vm1250, %v1252, %v1248
        %v1254 = vmul.f32 %v1229, %v1253
        %v1255 = vmin.f32 %v1254, 1.0
        %v1256 = vmax.f32 %v1255, -1.0
        %v1257 = vmul.f32 %v1085, %v1085
        %v1258 = vmin.f32 16.0, %v1257
        %v1259 = vmul.f32 %v1258, 2.1237322e-06
        %v1260 = vadd.f32 %v1259, 0.00028619796
        %v1261 = vmul.f32 %v1258, %v1260
        %v1262 = vadd.f32 %v1261, 0.0036580483
        %v1263 = vmul.f32 %v1258, %v1262
        %v1264 = vadd.f32 %v1263, 0.05243302
        %v1265 = vmul.f32 %v1258, %v1264
        %v1266 = vadd.f32 %v1265, 0.18741608
        %v1267 = vmul.f32 %v1258, %v1266
        %v1268 = vadd.f32 %v1267, 1.1283791
        %v1269 = vmul.f32 %v1085, %v1268
        %v1270 = vmul.f32 %v1258, 3.8918573e-05
        %v1271 = vadd.f32 %v1270, 0.001143296
        %v1272 = vmul.f32 %v1258, %v1271
        %v1273 = vadd.f32 %v1272, 0.014752088
        %v1274 = vmul.f32 %v1258, %v1273
        %v1275 = vadd.f32 %v1274, 0.112945676
        %v1276 = vmul.f32 %v1258, %v1275
        %v1277 = vadd.f32 %v1276, 0.4994258
        %v1278 = vmul.f32 %v1258, %v1277
        %v1279 = vadd.f32 %v1278, 1.0
        %v1280 = vrcp.pop %v1279
        %v1281 = vmul.f32 %v1279, %v1280
        %v1282 = vsub.f32 1.0, %v1281
        %v1283 = vmul.f32 %v1280, %v1282
        %v1284 = vadd.f32 %v1280, %v1283
        %vm1285 = vweird.f32 %v1279
        %vm1286 = vweird.f32 %v1280
        %vm1287 = vmor %vm1285, %vm1286
        %v1288 = vsel %vm1287, %v1280, %v1284
        %v1289 = vand.u32 2147483647, %v1279
        %vm1290 = vcmp.eq.f32.partialorder %v1289, 8.507059e+37
        %v1291 = vand.u32 %v1279, 2147483648
        %v1292 = vor.u32 1.1754944e-38, %v1291
        %v1293 = vsel %vm1290, %v1292, %v1288
        %v1294 = vmul.f32 %v1269, %v1293
        %v1295 = vmin.f32 %v1294, 1.0
        %v1296 = vmax.f32 %v1295, -1.0
        %v1297 = vmul.f32 %v1086, %v1086
        %v1298 = vmin.f32 16.0, %v1297
        %v1299 = vmul.f32 %v1298, 2.1237322e-06
        %v1300 = vadd.f32 %v1299, 0.00028619796
        %v1301 = vmul.f32 %v1298, %v1300
        %v1302 = vadd.f32 %v1301, 0.0036580483
        %v1303 = vmul.f32 %v1298, %v1302
        %v1304 = vadd.f32 %v1303, 0.05243302
        %v1305 = vmul.f32 %v1298, %v1304
        %v1306 = vadd.f32 %v1305, 0.18741608
        %v1307 = vmul.f32 %v1298, %v1306
        %v1308 = vadd.f32 %v1307, 1.1283791
        %v1309 = vmul.f32 %v1086, %v1308
        %v1310 = vmul.f32 %v1298, 3.8918573e-05
        %v1311 = vadd.f32 %v1310, 0.001143296
        %v1312 = vmul.f32 %v1298, %v1311
        %v1313 = vadd.f32 %v1312, 0.014752088
        %v1314 = vmul.f32 %v1298, %v1313
        %v1315 = vadd.f32 %v1314, 0.112945676
        %v1316 = vmul.f32 %v1298, %v1315
        %v1317 = vadd.f32 %v1316, 0.4994258
        %v1318 = vmul.f32 %v1298, %v1317
        %v1319 = vadd.f32 %v1318, 1.0
        %v1320 = vrcp.pop %v1319
        %v1321 = vmul.f32 %v1319, %v1320
        %v1322 = vsub.f32 1.0, %v1321
        %v1323 = vmul.f32 %v1320, %v1322
        %v1324 = vadd.f32 %v1320, %v1323
        %vm1325 = vweird.f32 %v1319
        %vm1326 = vweird.f32 %v1320
        %vm1327 = vmor %vm1325, %vm1326
        %v1328 = vsel %vm1327, %v1320, %v1324
        %v1329 = vand.u32 2147483647, %v1319
        %vm1330 = vcmp.eq.f32.partialorder %v1329, 8.507059e+37
        %v1331 = vand.u32 %v1319, 2147483648
        %v1332 = vor.u32 1.1754944e-38, %v1331
        %v1333 = vsel %vm1330, %v1332, %v1328
        %v1334 = vmul.f32 %v1309, %v1333
        %v1335 = vmin.f32 %v1334, 1.0
        %v1336 = vmax.f32 %v1335, -1.0
        %v1337 = vmul.f32 %v1087, %v1087
        %v1338 = vmin.f32 16.0, %v1337
        %v1339 = vmul.f32 %v1338, 2.1237322e-06
        %v1340 = vadd.f32 %v1339, 0.00028619796
        %v1341 = vmul.f32 %v1338, %v1340
        %v1342 = vadd.f32 %v1341, 0.0036580483
        %v1343 = vmul.f32 %v1338, %v1342
        %v1344 = vadd.f32 %v1343, 0.05243302
        %v1345 = vmul.f32 %v1338, %v1344
        %v1346 = vadd.f32 %v1345, 0.18741608
        %v1347 = vmul.f32 %v1338, %v1346
        %v1348 = vadd.f32 %v1347, 1.1283791
        %v1349 = vmul.f32 %v1087, %v1348
        %v1350 = vmul.f32 %v1338, 3.8918573e-05
        %v1351 = vadd.f32 %v1350, 0.001143296
        %v1352 = vmul.f32 %v1338, %v1351
        %v1353 = vadd.f32 %v1352, 0.014752088
        %v1354 = vmul.f32 %v1338, %v1353
        %v1355 = vadd.f32 %v1354, 0.112945676
        %v1356 = vmul.f32 %v1338, %v1355
        %v1357 = vadd.f32 %v1356, 0.4994258
        %v1358 = vmul.f32 %v1338, %v1357
        %v1359 = vadd.f32 %v1358, 1.0
        %v1360 = vrcp.pop %v1359
        %v1361 = vmul.f32 %v1359, %v1360
        %v1362 = vsub.f32 1.0, %v1361
        %v1363 = vmul.f32 %v1360, %v1362
        %v1364 = vadd.f32 %v1360, %v1363
        %vm1365 = vweird.f32 %v1359
        %vm1366 = vweird.f32 %v1360
        %vm1367 = vmor %vm1365, %vm1366
        %v1368 = vsel %vm1367, %v1360, %v1364
        %v1369 = vand.u32 2147483647, %v1359
        %vm1370 = vcmp.eq.f32.partialorder %v1369, 8.507059e+37
        %v1371 = vand.u32 %v1359, 2147483648
        %v1372 = vor.u32 1.1754944e-38, %v1371
        %v1373 = vsel %vm1370, %v1372, %v1368
        %v1374 = vmul.f32 %v1349, %v1373
        %v1375 = vmin.f32 %v1374, 1.0
        %v1376 = vmax.f32 %v1375, -1.0
        %v1377 = vmul.f32 %v1088, %v1088
        %v1378 = vmin.f32 16.0, %v1377
        %v1379 = vmul.f32 %v1378, 2.1237322e-06
        %v1380 = vadd.f32 %v1379, 0.00028619796
        %v1381 = vmul.f32 %v1378, %v1380
        %v1382 = vadd.f32 %v1381, 0.0036580483
        %v1383 = vmul.f32 %v1378, %v1382
        %v1384 = vadd.f32 %v1383, 0.05243302
        %v1385 = vmul.f32 %v1378, %v1384
        %v1386 = vadd.f32 %v1385, 0.18741608
        %v1387 = vmul.f32 %v1378, %v1386
        %v1388 = vadd.f32 %v1387, 1.1283791
        %v1389 = vmul.f32 %v1088, %v1388
        %v1390 = vmul.f32 %v1378, 3.8918573e-05
        %v1391 = vadd.f32 %v1390, 0.001143296
        %v1392 = vmul.f32 %v1378, %v1391
        %v1393 = vadd.f32 %v1392, 0.014752088
        %v1394 = vmul.f32 %v1378, %v1393
        %v1395 = vadd.f32 %v1394, 0.112945676
        %v1396 = vmul.f32 %v1378, %v1395
        %v1397 = vadd.f32 %v1396, 0.4994258
        %v1398 = vmul.f32 %v1378, %v1397
        %v1399 = vadd.f32 %v1398, 1.0
        %v1400 = vrcp.pop %v1399
        %v1401 = vmul.f32 %v1399, %v1400
        %v1402 = vsub.f32 1.0, %v1401
        %v1403 = vmul.f32 %v1400, %v1402
        %v1404 = vadd.f32 %v1400, %v1403
        %vm1405 = vweird.f32 %v1399
        %vm1406 = vweird.f32 %v1400
        %vm1407 = vmor %vm1405, %vm1406
        %v1408 = vsel %vm1407, %v1400, %v1404
        %v1409 = vand.u32 2147483647, %v1399
        %vm1410 = vcmp.eq.f32.partialorder %v1409, 8.507059e+37
        %v1411 = vand.u32 %v1399, 2147483648
        %v1412 = vor.u32 1.1754944e-38, %v1411
        %v1413 = vsel %vm1410, %v1412, %v1408
        %v1414 = vmul.f32 %v1389, %v1413
        %v1415 = vmin.f32 %v1414, 1.0
        %v1416 = vmax.f32 %v1415, -1.0
        %v1417 = vmul.f32 %v1089, %v1089
        %v1418 = vmin.f32 16.0, %v1417
        %v1419 = vmul.f32 %v1418, 2.1237322e-06
        %v1420 = vadd.f32 %v1419, 0.00028619796
        %v1421 = vmul.f32 %v1418, %v1420
        %v1422 = vadd.f32 %v1421, 0.0036580483
        %v1423 = vmul.f32 %v1418, %v1422
        %v1424 = vadd.f32 %v1423, 0.05243302
        %v1425 = vmul.f32 %v1418, %v1424
        %v1426 = vadd.f32 %v1425, 0.18741608
        %v1427 = vmul.f32 %v1418, %v1426
        %v1428 = vadd.f32 %v1427, 1.1283791
        %v1429 = vmul.f32 %v1089, %v1428
        %v1430 = vmul.f32 %v1418, 3.8918573e-05
        %v1431 = vadd.f32 %v1430, 0.001143296
        %v1432 = vmul.f32 %v1418, %v1431
        %v1433 = vadd.f32 %v1432, 0.014752088
        %v1434 = vmul.f32 %v1418, %v1433
        %v1435 = vadd.f32 %v1434, 0.112945676
        %v1436 = vmul.f32 %v1418, %v1435
        %v1437 = vadd.f32 %v1436, 0.4994258
        %v1438 = vmul.f32 %v1418, %v1437
        %v1439 = vadd.f32 %v1438, 1.0
        %v1440 = vrcp.pop %v1439
        %v1441 = vmul.f32 %v1439, %v1440
        %v1442 = vsub.f32 1.0, %v1441
        %v1443 = vmul.f32 %v1440, %v1442
        %v1444 = vadd.f32 %v1440, %v1443
        %vm1445 = vweird.f32 %v1439
        %vm1446 = vweird.f32 %v1440
        %vm1447 = vmor %vm1445, %vm1446
        %v1448 = vsel %vm1447, %v1440, %v1444
        %v1449 = vand.u32 2147483647, %v1439
        %vm1450 = vcmp.eq.f32.partialorder %v1449, 8.507059e+37
        %v1451 = vand.u32 %v1439, 2147483648
        %v1452 = vor.u32 1.1754944e-38, %v1451
        %v1453 = vsel %vm1450, %v1452, %v1448
        %v1454 = vmul.f32 %v1429, %v1453
        %v1455 = vmin.f32 %v1454, 1.0
        %v1456 = vmax.f32 %v1455, -1.0
        %v1457 = vmul.f32 %v1090, %v1090
        %v1458 = vmin.f32 16.0, %v1457
        %v1459 = vmul.f32 %v1458, 2.1237322e-06
        %v1460 = vadd.f32 %v1459, 0.00028619796
        %v1461 = vmul.f32 %v1458, %v1460
        %v1462 = vadd.f32 %v1461, 0.0036580483
        %v1463 = vmul.f32 %v1458, %v1462
        %v1464 = vadd.f32 %v1463, 0.05243302
        %v1465 = vmul.f32 %v1458, %v1464
        %v1466 = vadd.f32 %v1465, 0.18741608
        %v1467 = vmul.f32 %v1458, %v1466
        %v1468 = vadd.f32 %v1467, 1.1283791
        %v1469 = vmul.f32 %v1090, %v1468
        %v1470 = vmul.f32 %v1458, 3.8918573e-05
        %v1471 = vadd.f32 %v1470, 0.001143296
        %v1472 = vmul.f32 %v1458, %v1471
        %v1473 = vadd.f32 %v1472, 0.014752088
        %v1474 = vmul.f32 %v1458, %v1473
        %v1475 = vadd.f32 %v1474, 0.112945676
        %v1476 = vmul.f32 %v1458, %v1475
        %v1477 = vadd.f32 %v1476, 0.4994258
        %v1478 = vmul.f32 %v1458, %v1477
        %v1479 = vadd.f32 %v1478, 1.0
        %v1480 = vrcp.pop %v1479
        %v1481 = vmul.f32 %v1479, %v1480
        %v1482 = vsub.f32 1.0, %v1481
        %v1483 = vmul.f32 %v1480, %v1482
        %v1484 = vadd.f32 %v1480, %v1483
        %vm1485 = vweird.f32 %v1479
        %vm1486 = vweird.f32 %v1480
        %vm1487 = vmor %vm1485, %vm1486
        %v1488 = vsel %vm1487, %v1480, %v1484
        %v1489 = vand.u32 2147483647, %v1479
        %vm1490 = vcmp.eq.f32.partialorder %v1489, 8.507059e+37
        %v1491 = vand.u32 %v1479, 2147483648
        %v1492 = vor.u32 1.1754944e-38, %v1491
        %v1493 = vsel %vm1490, %v1492, %v1488
        %v1494 = vmul.f32 %v1469, %v1493
        %v1495 = vmin.f32 %v1494, 1.0
        %v1496 = vmax.f32 %v1495, -1.0
        %v1497 = vmul.f32 %v1091, %v1091
        %v1498 = vmin.f32 16.0, %v1497
        %v1499 = vmul.f32 %v1498, 2.1237322e-06
        %v1500 = vadd.f32 %v1499, 0.00028619796
        %v1501 = vmul.f32 %v1498, %v1500
        %v1502 = vadd.f32 %v1501, 0.0036580483
        %v1503 = vmul.f32 %v1498, %v1502
        %v1504 = vadd.f32 %v1503, 0.05243302
        %v1505 = vmul.f32 %v1498, %v1504
        %v1506 = vadd.f32 %v1505, 0.18741608
        %v1507 = vmul.f32 %v1498, %v1506
        %v1508 = vadd.f32 %v1507, 1.1283791
        %v1509 = vmul.f32 %v1091, %v1508
        %v1510 = vmul.f32 %v1498, 3.8918573e-05
        %v1511 = vadd.f32 %v1510, 0.001143296
        %v1512 = vmul.f32 %v1498, %v1511
        %v1513 = vadd.f32 %v1512, 0.014752088
        %v1514 = vmul.f32 %v1498, %v1513
        %v1515 = vadd.f32 %v1514, 0.112945676
        %v1516 = vmul.f32 %v1498, %v1515
        %v1517 = vadd.f32 %v1516, 0.4994258
        %v1518 = vmul.f32 %v1498, %v1517
        %v1519 = vadd.f32 %v1518, 1.0
        %v1520 = vrcp.pop %v1519
        %v1521 = vmul.f32 %v1519, %v1520
        %v1522 = vsub.f32 1.0, %v1521
        %v1523 = vmul.f32 %v1520, %v1522
        %v1524 = vadd.f32 %v1520, %v1523
        %vm1525 = vweird.f32 %v1519
        %vm1526 = vweird.f32 %v1520
        %vm1527 = vmor %vm1525, %vm1526
        %v1528 = vsel %vm1527, %v1520, %v1524
        %v1529 = vand.u32 2147483647, %v1519
        %vm1530 = vcmp.eq.f32.partialorder %v1529, 8.507059e+37
        %v1531 = vand.u32 %v1519, 2147483648
        %v1532 = vor.u32 1.1754944e-38, %v1531
        %v1533 = vsel %vm1530, %v1532, %v1528
        %v1534 = vmul.f32 %v1509, %v1533
        %v1535 = vmin.f32 %v1534, 1.0
        %v1536 = vmax.f32 %v1535, -1.0
        %v1537 = vmul.f32 %v1092, %v1092
        %v1538 = vmin.f32 16.0, %v1537
        %v1539 = vmul.f32 %v1538, 2.1237322e-06
        %v1540 = vadd.f32 %v1539, 0.00028619796
        %v1541 = vmul.f32 %v1538, %v1540
        %v1542 = vadd.f32 %v1541, 0.0036580483
        %v1543 = vmul.f32 %v1538, %v1542
        %v1544 = vadd.f32 %v1543, 0.05243302
        %v1545 = vmul.f32 %v1538, %v1544
        %v1546 = vadd.f32 %v1545, 0.18741608
        %v1547 = vmul.f32 %v1538, %v1546
        %v1548 = vadd.f32 %v1547, 1.1283791
        %v1549 = vmul.f32 %v1092, %v1548
        %v1550 = vmul.f32 %v1538, 3.8918573e-05
        %v1551 = vadd.f32 %v1550, 0.001143296
        %v1552 = vmul.f32 %v1538, %v1551
        %v1553 = vadd.f32 %v1552, 0.014752088
        %v1554 = vmul.f32 %v1538, %v1553
        %v1555 = vadd.f32 %v1554, 0.112945676
        %v1556 = vmul.f32 %v1538, %v1555
        %v1557 = vadd.f32 %v1556, 0.4994258
        %v1558 = vmul.f32 %v1538, %v1557
        %v1559 = vadd.f32 %v1558, 1.0
        %v1560 = vrcp.pop %v1559
        %v1561 = vmul.f32 %v1559, %v1560
        %v1562 = vsub.f32 1.0, %v1561
        %v1563 = vmul.f32 %v1560, %v1562
        %v1564 = vadd.f32 %v1560, %v1563
        %vm1565 = vweird.f32 %v1559
        %vm1566 = vweird.f32 %v1560
        %vm1567 = vmor %vm1565, %vm1566
        %v1568 = vsel %vm1567, %v1560, %v1564
        %v1569 = vand.u32 2147483647, %v1559
        %vm1570 = vcmp.eq.f32.partialorder %v1569, 8.507059e+37
        %v1571 = vand.u32 %v1559, 2147483648
        %v1572 = vor.u32 1.1754944e-38, %v1571
        %v1573 = vsel %vm1570, %v1572, %v1568
        %v1574 = vmul.f32 %v1549, %v1573
        %v1575 = vmin.f32 %v1574, 1.0
        %v1576 = vmax.f32 %v1575, -1.0
        %v1577 = vmul.f32 %v1093, %v1093
        %v1578 = vmin.f32 16.0, %v1577
        %v1579 = vmul.f32 %v1578, 2.1237322e-06
        %v1580 = vadd.f32 %v1579, 0.00028619796
        %v1581 = vmul.f32 %v1578, %v1580
        %v1582 = vadd.f32 %v1581, 0.0036580483
        %v1583 = vmul.f32 %v1578, %v1582
        %v1584 = vadd.f32 %v1583, 0.05243302
        %v1585 = vmul.f32 %v1578, %v1584
        %v1586 = vadd.f32 %v1585, 0.18741608
        %v1587 = vmul.f32 %v1578, %v1586
        %v1588 = vadd.f32 %v1587, 1.1283791
        %v1589 = vmul.f32 %v1093, %v1588
        %v1590 = vmul.f32 %v1578, 3.8918573e-05
        %v1591 = vadd.f32 %v1590, 0.001143296
        %v1592 = vmul.f32 %v1578, %v1591
        %v1593 = vadd.f32 %v1592, 0.014752088
        %v1594 = vmul.f32 %v1578, %v1593
        %v1595 = vadd.f32 %v1594, 0.112945676
        %v1596 = vmul.f32 %v1578, %v1595
        %v1597 = vadd.f32 %v1596, 0.4994258
        %v1598 = vmul.f32 %v1578, %v1597
        %v1599 = vadd.f32 %v1598, 1.0
        %v1600 = vrcp.pop %v1599
        %v1601 = vmul.f32 %v1599, %v1600
        %v1602 = vsub.f32 1.0, %v1601
        %v1603 = vmul.f32 %v1600, %v1602
        %v1604 = vadd.f32 %v1600, %v1603
        %vm1605 = vweird.f32 %v1599
        %vm1606 = vweird.f32 %v1600
        %vm1607 = vmor %vm1605, %vm1606
        %v1608 = vsel %vm1607, %v1600, %v1604
        %v1609 = vand.u32 2147483647, %v1599
        %vm1610 = vcmp.eq.f32.partialorder %v1609, 8.507059e+37
        %v1611 = vand.u32 %v1599, 2147483648
        %v1612 = vor.u32 1.1754944e-38, %v1611
        %v1613 = vsel %vm1610, %v1612, %v1608
        %v1614 = vmul.f32 %v1589, %v1613
        %v1615 = vmin.f32 %v1614, 1.0
        %v1616 = vmax.f32 %v1615, -1.0
        %v1617 = vmul.f32 %v1094, %v1094
        %v1618 = vmin.f32 16.0, %v1617
        %v1619 = vmul.f32 %v1618, 2.1237322e-06
        %v1620 = vadd.f32 %v1619, 0.00028619796
        %v1621 = vmul.f32 %v1618, %v1620
        %v1622 = vadd.f32 %v1621, 0.0036580483
        %v1623 = vmul.f32 %v1618, %v1622
        %v1624 = vadd.f32 %v1623, 0.05243302
        %v1625 = vmul.f32 %v1618, %v1624
        %v1626 = vadd.f32 %v1625, 0.18741608
        %v1627 = vmul.f32 %v1618, %v1626
        %v1628 = vadd.f32 %v1627, 1.1283791
        %v1629 = vmul.f32 %v1094, %v1628
        %v1630 = vmul.f32 %v1618, 3.8918573e-05
        %v1631 = vadd.f32 %v1630, 0.001143296
        %v1632 = vmul.f32 %v1618, %v1631
        %v1633 = vadd.f32 %v1632, 0.014752088
        %v1634 = vmul.f32 %v1618, %v1633
        %v1635 = vadd.f32 %v1634, 0.112945676
        %v1636 = vmul.f32 %v1618, %v1635
        %v1637 = vadd.f32 %v1636, 0.4994258
        %v1638 = vmul.f32 %v1618, %v1637
        %v1639 = vadd.f32 %v1638, 1.0
        %v1640 = vrcp.pop %v1639
        %v1641 = vmul.f32 %v1639, %v1640
        %v1642 = vsub.f32 1.0, %v1641
        %v1643 = vmul.f32 %v1640, %v1642
        %v1644 = vadd.f32 %v1640, %v1643
        %vm1645 = vweird.f32 %v1639
        %vm1646 = vweird.f32 %v1640
        %vm1647 = vmor %vm1645, %vm1646
        %v1648 = vsel %vm1647, %v1640, %v1644
        %v1649 = vand.u32 2147483647, %v1639
        %vm1650 = vcmp.eq.f32.partialorder %v1649, 8.507059e+37
        %v1651 = vand.u32 %v1639, 2147483648
        %v1652 = vor.u32 1.1754944e-38, %v1651
        %v1653 = vsel %vm1650, %v1652, %v1648
        %v1654 = vmul.f32 %v1629, %v1653
        %v1655 = vmin.f32 %v1654, 1.0
        %v1656 = vmax.f32 %v1655, -1.0
        %v1657 = vmul.f32 %v1095, %v1095
        %v1658 = vmin.f32 16.0, %v1657
        %v1659 = vmul.f32 %v1658, 2.1237322e-06
        %v1660 = vadd.f32 %v1659, 0.00028619796
        %v1661 = vmul.f32 %v1658, %v1660
        %v1662 = vadd.f32 %v1661, 0.0036580483
        %v1663 = vmul.f32 %v1658, %v1662
        %v1664 = vadd.f32 %v1663, 0.05243302
        %v1665 = vmul.f32 %v1658, %v1664
        %v1666 = vadd.f32 %v1665, 0.18741608
        %v1667 = vmul.f32 %v1658, %v1666
        %v1668 = vadd.f32 %v1667, 1.1283791
        %v1669 = vmul.f32 %v1095, %v1668
        %v1670 = vmul.f32 %v1658, 3.8918573e-05
        %v1671 = vadd.f32 %v1670, 0.001143296
        %v1672 = vmul.f32 %v1658, %v1671
        %v1673 = vadd.f32 %v1672, 0.014752088
        %v1674 = vmul.f32 %v1658, %v1673
        %v1675 = vadd.f32 %v1674, 0.112945676
        %v1676 = vmul.f32 %v1658, %v1675
        %v1677 = vadd.f32 %v1676, 0.4994258
        %v1678 = vmul.f32 %v1658, %v1677
        %v1679 = vadd.f32 %v1678, 1.0
        %v1680 = vrcp.pop %v1679
        %v1681 = vmul.f32 %v1679, %v1680
        %v1682 = vsub.f32 1.0, %v1681
        %v1683 = vmul.f32 %v1680, %v1682
        %v1684 = vadd.f32 %v1680, %v1683
        %vm1685 = vweird.f32 %v1679
        %vm1686 = vweird.f32 %v1680
        %vm1687 = vmor %vm1685, %vm1686
        %v1688 = vsel %vm1687, %v1680, %v1684
        %v1689 = vand.u32 2147483647, %v1679
        %vm1690 = vcmp.eq.f32.partialorder %v1689, 8.507059e+37
        %v1691 = vand.u32 %v1679, 2147483648
        %v1692 = vor.u32 1.1754944e-38, %v1691
        %v1693 = vsel %vm1690, %v1692, %v1688
        %v1694 = vmul.f32 %v1669, %v1693
        %v1695 = vmin.f32 %v1694, 1.0
        %v1696 = vmax.f32 %v1695, -1.0
        %v1697 = vmul.f32 %v1096, %v1096
        %v1698 = vmin.f32 16.0, %v1697
        %v1699 = vmul.f32 %v1698, 2.1237322e-06
        %v1700 = vadd.f32 %v1699, 0.00028619796
        %v1701 = vmul.f32 %v1698, %v1700
        %v1702 = vadd.f32 %v1701, 0.0036580483
        %v1703 = vmul.f32 %v1698, %v1702
        %v1704 = vadd.f32 %v1703, 0.05243302
        %v1705 = vmul.f32 %v1698, %v1704
        %v1706 = vadd.f32 %v1705, 0.18741608
        %v1707 = vmul.f32 %v1698, %v1706
        %v1708 = vadd.f32 %v1707, 1.1283791
        %v1709 = vmul.f32 %v1096, %v1708
        %v1710 = vmul.f32 %v1698, 3.8918573e-05
        %v1711 = vadd.f32 %v1710, 0.001143296
        %v1712 = vmul.f32 %v1698, %v1711
        %v1713 = vadd.f32 %v1712, 0.014752088
        %v1714 = vmul.f32 %v1698, %v1713
        %v1715 = vadd.f32 %v1714, 0.112945676
        %v1716 = vmul.f32 %v1698, %v1715
        %v1717 = vadd.f32 %v1716, 0.4994258
        %v1718 = vmul.f32 %v1698, %v1717
        %v1719 = vadd.f32 %v1718, 1.0
        %v1720 = vrcp.pop %v1719
        %v1721 = vmul.f32 %v1719, %v1720
        %v1722 = vsub.f32 1.0, %v1721
        %v1723 = vmul.f32 %v1720, %v1722
        %v1724 = vadd.f32 %v1720, %v1723
        %vm1725 = vweird.f32 %v1719
        %vm1726 = vweird.f32 %v1720
        %vm1727 = vmor %vm1725, %vm1726
        %v1728 = vsel %vm1727, %v1720, %v1724
        %v1729 = vand.u32 2147483647, %v1719
        %vm1730 = vcmp.eq.f32.partialorder %v1729, 8.507059e+37
        %v1731 = vand.u32 %v1719, 2147483648
        %v1732 = vor.u32 1.1754944e-38, %v1731
        %v1733 = vsel %vm1730, %v1732, %v1728
        %v1734 = vmul.f32 %v1709, %v1733
        %v1735 = vmin.f32 %v1734, 1.0
        %v1736 = vmax.f32 %v1735, -1.0
        %v1737 = vadd.f32 %v1136, 1.0
        %v1738 = vadd.f32 %v1176, 1.0
        %v1739 = vadd.f32 %v1216, 1.0
        %v1740 = vadd.f32 %v1256, 1.0
        %v1741 = vadd.f32 %v1296, 1.0
        %v1742 = vadd.f32 %v1336, 1.0
        %v1743 = vadd.f32 %v1376, 1.0
        %v1744 = vadd.f32 %v1416, 1.0
        %v1745 = vadd.f32 %v1456, 1.0
        %v1746 = vadd.f32 %v1496, 1.0
        %v1747 = vadd.f32 %v1536, 1.0
        %v1748 = vadd.f32 %v1576, 1.0
        %v1749 = vadd.f32 %v1616, 1.0
        %v1750 = vadd.f32 %v1656, 1.0
        %v1751 = vadd.f32 %v1696, 1.0
        %v1752 = vadd.f32 %v1736, 1.0
        %v1753 = vmul.f32 %v1065, %v1737
        %v1754 = vmul.f32 %v1066, %v1738
        %v1755 = vmul.f32 %v1067, %v1739
        %v1756 = vmul.f32 %v1068, %v1740
        %v1757 = vmul.f32 %v1069, %v1741
        %v1758 = vmul.f32 %v1070, %v1742
        %v1759 = vmul.f32 %v1071, %v1743
        %v1760 = vmul.f32 %v1072, %v1744
        %v1761 = vmul.f32 %v1073, %v1745
        %v1762 = vmul.f32 %v1074, %v1746
        %v1763 = vmul.f32 %v1075, %v1747
        %v1764 = vmul.f32 %v1076, %v1748
        %v1765 = vmul.f32 %v1077, %v1749
        %v1766 = vmul.f32 %v1078, %v1750
        %v1767 = vmul.f32 %v1079, %v1751
        %v1768 = vmul.f32 %v1080, %v1752
        %v1769 = vld [vmem:[%s4] sm:$0xff]
        %v1770 = vld [vmem:[%s4 + $0x8] sm:$0xff]
        %v1771 = vld [vmem:[%s4 + $0x10] sm:$0xff]
        %v1772 = vld [vmem:[%s4 + $0x18] sm:$0xff]
        %v1773 = vld [vmem:[%s4 + $0x20] sm:$0xff]
        %v1774 = vld [vmem:[%s4 + $0x28] sm:$0xff]
        %v1775 = vld [vmem:[%s4 + $0x30] sm:$0xff]
        %v1776 = vld [vmem:[%s4 + $0x38] sm:$0xff]
        %v1777 = vperm.slane %v416, 0
        %vm1778 = vcmask 523264
        %v1780 = vsel %vm1778, %v1753, 0
        %v1783 = vsel %vm1778, %v1754, 0
        %v1786 = vsel %vm1778, %v1755, 0
        %v1789 = vsel %vm1778, %v1756, 0
        %v1792 = vsel %vm1778, %v1757, 0
        %v1795 = vsel %vm1778, %v1758, 0
        %v1798 = vsel %vm1778, %v1759, 0
        %v1801 = vsel %vm1778, %v1760, 0
        %v1804 = vsel %vm1778, %v1761, 0
        %v1807 = vsel %vm1778, %v1762, 0
        %v1810 = vsel %vm1778, %v1763, 0
        %v1813 = vsel %vm1778, %v1764, 0
        %v1816 = vsel %vm1778, %v1765, 0
        %v1819 = vsel %vm1778, %v1766, 0
        %v1822 = vsel %vm1778, %v1767, 0
        %v1825 = vsel %vm1778, %v1768, 0
        %1827 = vmatpush.msra.mxu0 0.0
        %1828 = vmatpush.msra.mxu0 0.0
        %1829 = vmatpush.msra.mxu0 0.0
        %1830 = vmatpush.msra.mxu0 0.0
        %1831 = vmatpush.msra.mxu0 0.0
        %1832 = vmatpush.msra.mxu0 0.0
        %1833 = vmatpush.msra.mxu0 0.0
        %1834 = vmatpush.msra.mxu0 0.0
        %1835 = vmatpush.msra.mxu0 %v1776
        %1836 = vmatpush.msra.mxu0 %v1775
        %1837 = vmatpush.msra.mxu0 %v1774
        %1838 = vmatpush.msra.mxu0 %v1773
        %1839 = vmatpush.msra.mxu0 %v1772
        %1840 = vmatpush.msra.mxu0 %v1771
        %1841 = vmatpush.msra.mxu0 %v1770
        %1842 = vmatpush.msra.mxu0 %v1769
        %1843 = vmatmul.f32.gmra.mxu0 %v1780
        %v1844 = vpop.f32.mrf.mxu0
        %v1845 = vadd.f32 %v1777, %v1844
        %1846 = vmatmul.f32.gmra.mxu0 %v1783
        %v1847 = vpop.f32.mrf.mxu0
        %v1848 = vadd.f32 %v1777, %v1847
        %1849 = vmatmul.f32.gmra.mxu0 %v1786
        %v1850 = vpop.f32.mrf.mxu0
        %v1851 = vadd.f32 %v1777, %v1850
        %1852 = vmatmul.f32.gmra.mxu0 %v1789
        %v1853 = vpop.f32.mrf.mxu0
        %v1854 = vadd.f32 %v1777, %v1853
        %1855 = vmatmul.f32.gmra.mxu0 %v1792
        %v1856 = vpop.f32.mrf.mxu0
        %v1857 = vadd.f32 %v1777, %v1856
        %1858 = vmatmul.f32.gmra.mxu0 %v1795
        %v1859 = vpop.f32.mrf.mxu0
        %v1860 = vadd.f32 %v1777, %v1859
        %1861 = vmatmul.f32.gmra.mxu0 %v1798
        %v1862 = vpop.f32.mrf.mxu0
        %v1863 = vadd.f32 %v1777, %v1862
        %1864 = vmatmul.f32.gmra.mxu0 %v1801
        %v1865 = vpop.f32.mrf.mxu0
        %v1866 = vadd.f32 %v1777, %v1865
        %1867 = vmatmul.f32.gmra.mxu0 %v1804
        %v1868 = vpop.f32.mrf.mxu0
        %v1869 = vadd.f32 %v1777, %v1868
        %1870 = vmatmul.f32.gmra.mxu0 %v1807
        %v1871 = vpop.f32.mrf.mxu0
        %v1872 = vadd.f32 %v1777, %v1871
        %1873 = vmatmul.f32.gmra.mxu0 %v1810
        %v1874 = vpop.f32.mrf.mxu0
        %v1875 = vadd.f32 %v1777, %v1874
        %1876 = vmatmul.f32.gmra.mxu0 %v1813
        %v1877 = vpop.f32.mrf.mxu0
        %v1878 = vadd.f32 %v1777, %v1877
        %1879 = vmatmul.f32.gmra.mxu0 %v1816
        %v1880 = vpop.f32.mrf.mxu0
        %v1881 = vadd.f32 %v1777, %v1880
        %1882 = vmatmul.f32.gmra.mxu0 %v1819
        %v1883 = vpop.f32.mrf.mxu0
        %v1884 = vadd.f32 %v1777, %v1883
        %1885 = vmatmul.f32.gmra.mxu0 %v1822
        %v1886 = vpop.f32.mrf.mxu0
        %v1887 = vadd.f32 %v1777, %v1886
        %1888 = vmatmul.f32.gmra.mxu0 %v1825
        %v1889 = vpop.f32.mrf.mxu0
        %v1890 = vadd.f32 %v1777, %v1889
        %1891 = vdwg.mxu0
        %v1892 = vadd.f32 %v931, %v1845
        %v1893 = vadd.f32 %v932, %v1848
        %v1894 = vadd.f32 %v933, %v1851
        %v1895 = vadd.f32 %v934, %v1854
        %v1896 = vadd.f32 %v935, %v1857
        %v1897 = vadd.f32 %v936, %v1860
        %v1898 = vadd.f32 %v937, %v1863
        %v1899 = vadd.f32 %v938, %v1866
        %v1900 = vadd.f32 %v939, %v1869
        %v1901 = vadd.f32 %v940, %v1872
        %v1902 = vadd.f32 %v941, %v1875
        %v1903 = vadd.f32 %v942, %v1878
        %v1904 = vadd.f32 %v943, %v1881
        %v1905 = vadd.f32 %v944, %v1884
        %v1906 = vadd.f32 %v945, %v1887
        %v1907 = vadd.f32 %v946, %v1890
        %v1908 = vsel %vm424, %v1892, 0.0
        %1909 = vadd.xlane.f32.xlu0 %v1908
        %v1910 = vpop.xlane.xlu0 %1909
        %v1911 = vsel %vm424, %v1893, 0.0
        %1912 = vadd.xlane.f32.xlu0 %v1911
        %v1913 = vpop.xlane.xlu0 %1912
        %v1914 = vsel %vm424, %v1894, 0.0
        %1915 = vadd.xlane.f32.xlu0 %v1914
        %v1916 = vpop.xlane.xlu0 %1915
        %v1917 = vsel %vm424, %v1895, 0.0
        %1918 = vadd.xlane.f32.xlu0 %v1917
        %v1919 = vpop.xlane.xlu0 %1918
        %v1920 = vsel %vm424, %v1896, 0.0
        %1921 = vadd.xlane.f32.xlu0 %v1920
        %v1922 = vpop.xlane.xlu0 %1921
        %v1923 = vsel %vm424, %v1897, 0.0
        %1924 = vadd.xlane.f32.xlu0 %v1923
        %v1925 = vpop.xlane.xlu0 %1924
        %v1926 = vsel %vm424, %v1898, 0.0
        %1927 = vadd.xlane.f32.xlu0 %v1926
        %v1928 = vpop.xlane.xlu0 %1927
        %v1929 = vsel %vm424, %v1899, 0.0
        %1930 = vadd.xlane.f32.xlu0 %v1929
        %v1931 = vpop.xlane.xlu0 %1930
        %v1932 = vsel %vm424, %v1900, 0.0
        %1933 = vadd.xlane.f32.xlu0 %v1932
        %v1934 = vpop.xlane.xlu0 %1933
        %v1935 = vsel %vm424, %v1901, 0.0
        %1936 = vadd.xlane.f32.xlu0 %v1935
        %v1937 = vpop.xlane.xlu0 %1936
        %v1938 = vsel %vm424, %v1902, 0.0
        %1939 = vadd.xlane.f32.xlu0 %v1938
        %v1940 = vpop.xlane.xlu0 %1939
        %v1941 = vsel %vm424, %v1903, 0.0
        %1942 = vadd.xlane.f32.xlu0 %v1941
        %v1943 = vpop.xlane.xlu0 %1942
        %v1944 = vsel %vm424, %v1904, 0.0
        %1945 = vadd.xlane.f32.xlu0 %v1944
        %v1946 = vpop.xlane.xlu0 %1945
        %v1947 = vsel %vm424, %v1905, 0.0
        %1948 = vadd.xlane.f32.xlu0 %v1947
        %v1949 = vpop.xlane.xlu0 %1948
        %v1950 = vsel %vm424, %v1906, 0.0
        %1951 = vadd.xlane.f32.xlu0 %v1950
        %v1952 = vpop.xlane.xlu0 %1951
        %v1953 = vsel %vm424, %v1907, 0.0
        %1954 = vadd.xlane.f32.xlu0 %v1953
        %v1955 = vpop.xlane.xlu0 %1954
        %v1956 = vmul.f32 %v1910, %v608
        %v1957 = vmul.f32 %v1913, %v608
        %v1958 = vmul.f32 %v1916, %v608
        %v1959 = vmul.f32 %v1919, %v608
        %v1960 = vmul.f32 %v1922, %v608
        %v1961 = vmul.f32 %v1925, %v608
        %v1962 = vmul.f32 %v1928, %v608
        %v1963 = vmul.f32 %v1931, %v608
        %v1964 = vmul.f32 %v1934, %v608
        %v1965 = vmul.f32 %v1937, %v608
        %v1966 = vmul.f32 %v1940, %v608
        %v1967 = vmul.f32 %v1943, %v608
        %v1968 = vmul.f32 %v1946, %v608
        %v1969 = vmul.f32 %v1949, %v608
        %v1970 = vmul.f32 %v1952, %v608
        %v1971 = vmul.f32 %v1955, %v608
        %v1972 = vsub.f32 %v1892, %v1956
        %v1973 = vsub.f32 %v1893, %v1957
        %v1974 = vsub.f32 %v1894, %v1958
        %v1975 = vsub.f32 %v1895, %v1959
        %v1976 = vsub.f32 %v1896, %v1960
        %v1977 = vsub.f32 %v1897, %v1961
        %v1978 = vsub.f32 %v1898, %v1962
        %v1979 = vsub.f32 %v1899, %v1963
        %v1980 = vsub.f32 %v1900, %v1964
        %v1981 = vsub.f32 %v1901, %v1965
        %v1982 = vsub.f32 %v1902, %v1966
        %v1983 = vsub.f32 %v1903, %v1967
        %v1984 = vsub.f32 %v1904, %v1968
        %v1985 = vsub.f32 %v1905, %v1969
        %v1986 = vsub.f32 %v1906, %v1970
        %v1987 = vsub.f32 %v1907, %v1971
        %v1988 = vmul.f32 %v1972, %v1972
        %v1989 = vmul.f32 %v1973, %v1973
        %v1990 = vmul.f32 %v1974, %v1974
        %v1991 = vmul.f32 %v1975, %v1975
        %v1992 = vmul.f32 %v1976, %v1976
        %v1993 = vmul.f32 %v1977, %v1977
        %v1994 = vmul.f32 %v1978, %v1978
        %v1995 = vmul.f32 %v1979, %v1979
        %v1996 = vmul.f32 %v1980, %v1980
        %v1997 = vmul.f32 %v1981, %v1981
        %v1998 = vmul.f32 %v1982, %v1982
        %v1999 = vmul.f32 %v1983, %v1983
        %v2000 = vmul.f32 %v1984, %v1984
        %v2001 = vmul.f32 %v1985, %v1985
        %v2002 = vmul.f32 %v1986, %v1986
        %v2003 = vmul.f32 %v1987, %v1987
        %v2004 = vsel %vm424, %v1988, 0.0
        %2005 = vadd.xlane.f32.xlu0 %v2004
        %v2006 = vpop.xlane.xlu0 %2005
        %v2007 = vsel %vm424, %v1989, 0.0
        %2008 = vadd.xlane.f32.xlu0 %v2007
        %v2009 = vpop.xlane.xlu0 %2008
        %v2010 = vsel %vm424, %v1990, 0.0
        %2011 = vadd.xlane.f32.xlu0 %v2010
        %v2012 = vpop.xlane.xlu0 %2011
        %v2013 = vsel %vm424, %v1991, 0.0
        %2014 = vadd.xlane.f32.xlu0 %v2013
        %v2015 = vpop.xlane.xlu0 %2014
        %v2016 = vsel %vm424, %v1992, 0.0
        %2017 = vadd.xlane.f32.xlu0 %v2016
        %v2018 = vpop.xlane.xlu0 %2017
        %v2019 = vsel %vm424, %v1993, 0.0
        %2020 = vadd.xlane.f32.xlu0 %v2019
        %v2021 = vpop.xlane.xlu0 %2020
        %v2022 = vsel %vm424, %v1994, 0.0
        %2023 = vadd.xlane.f32.xlu0 %v2022
        %v2024 = vpop.xlane.xlu0 %2023
        %v2025 = vsel %vm424, %v1995, 0.0
        %2026 = vadd.xlane.f32.xlu0 %v2025
        %v2027 = vpop.xlane.xlu0 %2026
        %v2028 = vsel %vm424, %v1996, 0.0
        %2029 = vadd.xlane.f32.xlu0 %v2028
        %v2030 = vpop.xlane.xlu0 %2029
        %v2031 = vsel %vm424, %v1997, 0.0
        %2032 = vadd.xlane.f32.xlu0 %v2031
        %v2033 = vpop.xlane.xlu0 %2032
        %v2034 = vsel %vm424, %v1998, 0.0
        %2035 = vadd.xlane.f32.xlu0 %v2034
        %v2036 = vpop.xlane.xlu0 %2035
        %v2037 = vsel %vm424, %v1999, 0.0
        %2038 = vadd.xlane.f32.xlu0 %v2037
        %v2039 = vpop.xlane.xlu0 %2038
        %v2040 = vsel %vm424, %v2000, 0.0
        %2041 = vadd.xlane.f32.xlu0 %v2040
        %v2042 = vpop.xlane.xlu0 %2041
        %v2043 = vsel %vm424, %v2001, 0.0
        %2044 = vadd.xlane.f32.xlu0 %v2043
        %v2045 = vpop.xlane.xlu0 %2044
        %v2046 = vsel %vm424, %v2002, 0.0
        %2047 = vadd.xlane.f32.xlu0 %v2046
        %v2048 = vpop.xlane.xlu0 %2047
        %v2049 = vsel %vm424, %v2003, 0.0
        %2050 = vadd.xlane.f32.xlu0 %v2049
        %v2051 = vpop.xlane.xlu0 %2050
        %v2052 = vmul.f32 %v2006, %v608
        %v2053 = vmul.f32 %v2009, %v608
        %v2054 = vmul.f32 %v2012, %v608
        %v2055 = vmul.f32 %v2015, %v608
        %v2056 = vmul.f32 %v2018, %v608
        %v2057 = vmul.f32 %v2021, %v608
        %v2058 = vmul.f32 %v2024, %v608
        %v2059 = vmul.f32 %v2027, %v608
        %v2060 = vmul.f32 %v2030, %v608
        %v2061 = vmul.f32 %v2033, %v608
        %v2062 = vmul.f32 %v2036, %v608
        %v2063 = vmul.f32 %v2039, %v608
        %v2064 = vmul.f32 %v2042, %v608
        %v2065 = vmul.f32 %v2045, %v608
        %v2066 = vmul.f32 %v2048, %v608
        %v2067 = vmul.f32 %v2051, %v608
        %v2068 = vadd.f32 %v2052, 1e-05
        %v2069 = vadd.f32 %v2053, 1e-05
        %v2070 = vadd.f32 %v2054, 1e-05
        %v2071 = vadd.f32 %v2055, 1e-05
        %v2072 = vadd.f32 %v2056, 1e-05
        %v2073 = vadd.f32 %v2057, 1e-05
        %v2074 = vadd.f32 %v2058, 1e-05
        %v2075 = vadd.f32 %v2059, 1e-05
        %v2076 = vadd.f32 %v2060, 1e-05
        %v2077 = vadd.f32 %v2061, 1e-05
        %v2078 = vadd.f32 %v2062, 1e-05
        %v2079 = vadd.f32 %v2063, 1e-05
        %v2080 = vadd.f32 %v2064, 1e-05
        %v2081 = vadd.f32 %v2065, 1e-05
        %v2082 = vadd.f32 %v2066, 1e-05
        %v2083 = vadd.f32 %v2067, 1e-05
        %v2084 = vrsqrt.pop %v2068
        %v2085 = vmul.f32 %v2084, %v2068
        %v2086 = vmul.f32 %v2085, %v2084
        %v2087 = vmul.f32 0.5, %v2086
        %v2088 = vsub.f32 1.5, %v2087
        %v2089 = vmul.f32 %v2084, %v2088
        %vm2090 = vweird.f32 %v2068
        %vm2091 = vweird.f32 %v2084
        %vm2092 = vmor %vm2090, %vm2091
        %v2093 = vsel %vm2092, %v2084, %v2089
        %v2094 = vrsqrt.pop %v2069
        %v2095 = vmul.f32 %v2094, %v2069
        %v2096 = vmul.f32 %v2095, %v2094
        %v2097 = vmul.f32 0.5, %v2096
        %v2098 = vsub.f32 1.5, %v2097
        %v2099 = vmul.f32 %v2094, %v2098
        %vm2100 = vweird.f32 %v2069
        %vm2101 = vweird.f32 %v2094
        %vm2102 = vmor %vm2100, %vm2101
        %v2103 = vsel %vm2102, %v2094, %v2099
        %v2104 = vrsqrt.pop %v2070
        %v2105 = vmul.f32 %v2104, %v2070
        %v2106 = vmul.f32 %v2105, %v2104
        %v2107 = vmul.f32 0.5, %v2106
        %v2108 = vsub.f32 1.5, %v2107
        %v2109 = vmul.f32 %v2104, %v2108
        %vm2110 = vweird.f32 %v2070
        %vm2111 = vweird.f32 %v2104
        %vm2112 = vmor %vm2110, %vm2111
        %v2113 = vsel %vm2112, %v2104, %v2109
        %v2114 = vrsqrt.pop %v2071
        %v2115 = vmul.f32 %v2114, %v2071
        %v2116 = vmul.f32 %v2115, %v2114
        %v2117 = vmul.f32 0.5, %v2116
        %v2118 = vsub.f32 1.5, %v2117
        %v2119 = vmul.f32 %v2114, %v2118
        %vm2120 = vweird.f32 %v2071
        %vm2121 = vweird.f32 %v2114
        %vm2122 = vmor %vm2120, %vm2121
        %v2123 = vsel %vm2122, %v2114, %v2119
        %v2124 = vrsqrt.pop %v2072
        %v2125 = vmul.f32 %v2124, %v2072
        %v2126 = vmul.f32 %v2125, %v2124
        %v2127 = vmul.f32 0.5, %v2126
        %v2128 = vsub.f32 1.5, %v2127
        %v2129 = vmul.f32 %v2124, %v2128
        %vm2130 = vweird.f32 %v2072
        %vm2131 = vweird.f32 %v2124
        %vm2132 = vmor %vm2130, %vm2131
        %v2133 = vsel %vm2132, %v2124, %v2129
        %v2134 = vrsqrt.pop %v2073
        %v2135 = vmul.f32 %v2134, %v2073
        %v2136 = vmul.f32 %v2135, %v2134
        %v2137 = vmul.f32 0.5, %v2136
        %v2138 = vsub.f32 1.5, %v2137
        %v2139 = vmul.f32 %v2134, %v2138
        %vm2140 = vweird.f32 %v2073
        %vm2141 = vweird.f32 %v2134
        %vm2142 = vmor %vm2140, %vm2141
        %v2143 = vsel %vm2142, %v2134, %v2139
        %v2144 = vrsqrt.pop %v2074
        %v2145 = vmul.f32 %v2144, %v2074
        %v2146 = vmul.f32 %v2145, %v2144
        %v2147 = vmul.f32 0.5, %v2146
        %v2148 = vsub.f32 1.5, %v2147
        %v2149 = vmul.f32 %v2144, %v2148
        %vm2150 = vweird.f32 %v2074
        %vm2151 = vweird.f32 %v2144
        %vm2152 = vmor %vm2150, %vm2151
        %v2153 = vsel %vm2152, %v2144, %v2149
        %v2154 = vrsqrt.pop %v2075
        %v2155 = vmul.f32 %v2154, %v2075
        %v2156 = vmul.f32 %v2155, %v2154
        %v2157 = vmul.f32 0.5, %v2156
        %v2158 = vsub.f32 1.5, %v2157
        %v2159 = vmul.f32 %v2154, %v2158
        %vm2160 = vweird.f32 %v2075
        %vm2161 = vweird.f32 %v2154
        %vm2162 = vmor %vm2160, %vm2161
        %v2163 = vsel %vm2162, %v2154, %v2159
        %v2164 = vrsqrt.pop %v2076
        %v2165 = vmul.f32 %v2164, %v2076
        %v2166 = vmul.f32 %v2165, %v2164
        %v2167 = vmul.f32 0.5, %v2166
        %v2168 = vsub.f32 1.5, %v2167
        %v2169 = vmul.f32 %v2164, %v2168
        %vm2170 = vweird.f32 %v2076
        %vm2171 = vweird.f32 %v2164
        %vm2172 = vmor %vm2170, %vm2171
        %v2173 = vsel %vm2172, %v2164, %v2169
        %v2174 = vrsqrt.pop %v2077
        %v2175 = vmul.f32 %v2174, %v2077
        %v2176 = vmul.f32 %v2175, %v2174
        %v2177 = vmul.f32 0.5, %v2176
        %v2178 = vsub.f32 1.5, %v2177
        %v2179 = vmul.f32 %v2174, %v2178
        %vm2180 = vweird.f32 %v2077
        %vm2181 = vweird.f32 %v2174
        %vm2182 = vmor %vm2180, %vm2181
        %v2183 = vsel %vm2182, %v2174, %v2179
        %v2184 = vrsqrt.pop %v2078
        %v2185 = vmul.f32 %v2184, %v2078
        %v2186 = vmul.f32 %v2185, %v2184
        %v2187 = vmul.f32 0.5, %v2186
        %v2188 = vsub.f32 1.5, %v2187
        %v2189 = vmul.f32 %v2184, %v2188
        %vm2190 = vweird.f32 %v2078
        %vm2191 = vweird.f32 %v2184
        %vm2192 = vmor %vm2190, %vm2191
        %v2193 = vsel %vm2192, %v2184, %v2189
        %v2194 = vrsqrt.pop %v2079
        %v2195 = vmul.f32 %v2194, %v2079
        %v2196 = vmul.f32 %v2195, %v2194
        %v2197 = vmul.f32 0.5, %v2196
        %v2198 = vsub.f32 1.5, %v2197
        %v2199 = vmul.f32 %v2194, %v2198
        %vm2200 = vweird.f32 %v2079
        %vm2201 = vweird.f32 %v2194
        %vm2202 = vmor %vm2200, %vm2201
        %v2203 = vsel %vm2202, %v2194, %v2199
        %v2204 = vrsqrt.pop %v2080
        %v2205 = vmul.f32 %v2204, %v2080
        %v2206 = vmul.f32 %v2205, %v2204
        %v2207 = vmul.f32 0.5, %v2206
        %v2208 = vsub.f32 1.5, %v2207
        %v2209 = vmul.f32 %v2204, %v2208
        %vm2210 = vweird.f32 %v2080
        %vm2211 = vweird.f32 %v2204
        %vm2212 = vmor %vm2210, %vm2211
        %v2213 = vsel %vm2212, %v2204, %v2209
        %v2214 = vrsqrt.pop %v2081
        %v2215 = vmul.f32 %v2214, %v2081
        %v2216 = vmul.f32 %v2215, %v2214
        %v2217 = vmul.f32 0.5, %v2216
        %v2218 = vsub.f32 1.5, %v2217
        %v2219 = vmul.f32 %v2214, %v2218
        %vm2220 = vweird.f32 %v2081
        %vm2221 = vweird.f32 %v2214
        %vm2222 = vmor %vm2220, %vm2221
        %v2223 = vsel %vm2222, %v2214, %v2219
        %v2224 = vrsqrt.pop %v2082
        %v2225 = vmul.f32 %v2224, %v2082
        %v2226 = vmul.f32 %v2225, %v2224
        %v2227 = vmul.f32 0.5, %v2226
        %v2228 = vsub.f32 1.5, %v2227
        %v2229 = vmul.f32 %v2224, %v2228
        %vm2230 = vweird.f32 %v2082
        %vm2231 = vweird.f32 %v2224
        %vm2232 = vmor %vm2230, %vm2231
        %v2233 = vsel %vm2232, %v2224, %v2229
        %v2234 = vrsqrt.pop %v2083
        %v2235 = vmul.f32 %v2234, %v2083
        %v2236 = vmul.f32 %v2235, %v2234
        %v2237 = vmul.f32 0.5, %v2236
        %v2238 = vsub.f32 1.5, %v2237
        %v2239 = vmul.f32 %v2234, %v2238
        %vm2240 = vweird.f32 %v2083
        %vm2241 = vweird.f32 %v2234
        %vm2242 = vmor %vm2240, %vm2241
        %v2243 = vsel %vm2242, %v2234, %v2239
        %v2244 = vmul.f32 %v1972, %v2093
        %v2245 = vmul.f32 %v1973, %v2103
        %v2246 = vmul.f32 %v1974, %v2113
        %v2247 = vmul.f32 %v1975, %v2123
        %v2248 = vmul.f32 %v1976, %v2133
        %v2249 = vmul.f32 %v1977, %v2143
        %v2250 = vmul.f32 %v1978, %v2153
        %v2251 = vmul.f32 %v1979, %v2163
        %v2252 = vmul.f32 %v1980, %v2173
        %v2253 = vmul.f32 %v1981, %v2183
        %v2254 = vmul.f32 %v1982, %v2193
        %v2255 = vmul.f32 %v1983, %v2203
        %v2256 = vmul.f32 %v1984, %v2213
        %v2257 = vmul.f32 %v1985, %v2223
        %v2258 = vmul.f32 %v1986, %v2233
        %v2259 = vmul.f32 %v1987, %v2243
        %v2260 = vperm.slane %v417, 0
        %v2261 = vmul.f32 %v2244, %v2260
        %v2262 = vmul.f32 %v2245, %v2260
        %v2263 = vmul.f32 %v2246, %v2260
        %v2264 = vmul.f32 %v2247, %v2260
        %v2265 = vmul.f32 %v2248, %v2260
        %v2266 = vmul.f32 %v2249, %v2260
        %v2267 = vmul.f32 %v2250, %v2260
        %v2268 = vmul.f32 %v2251, %v2260
        %v2269 = vmul.f32 %v2252, %v2260
        %v2270 = vmul.f32 %v2253, %v2260
        %v2271 = vmul.f32 %v2254, %v2260
        %v2272 = vmul.f32 %v2255, %v2260
        %v2273 = vmul.f32 %v2256, %v2260
        %v2274 = vmul.f32 %v2257, %v2260
        %v2275 = vmul.f32 %v2258, %v2260
        %v2276 = vmul.f32 %v2259, %v2260
        %v2277 = vperm.slane %v418, 0
        %v2278 = vadd.f32 %v2261, %v2277
        %v2279 = vadd.f32 %v2262, %v2277
        %v2280 = vadd.f32 %v2263, %v2277
        %v2281 = vadd.f32 %v2264, %v2277
        %v2282 = vadd.f32 %v2265, %v2277
        %v2283 = vadd.f32 %v2266, %v2277
        %v2284 = vadd.f32 %v2267, %v2277
        %v2285 = vadd.f32 %v2268, %v2277
        %v2286 = vadd.f32 %v2269, %v2277
        %v2287 = vadd.f32 %v2270, %v2277
        %v2288 = vadd.f32 %v2271, %v2277
        %v2289 = vadd.f32 %v2272, %v2277
        %v2290 = vadd.f32 %v2273, %v2277
        %v2291 = vadd.f32 %v2274, %v2277
        %v2292 = vadd.f32 %v2275, %v2277
        %v2293 = vadd.f32 %v2276, %v2277
        %v2294 = vld [vmem:[%s6 + $0x8] sm:$0x1]
        %v2295 = vld [vmem:[%s6 + $0x9] sm:$0x1]
        %v2296 = vld [vmem:[%s6 + $0xa] sm:$0x1]
        %v2297 = vld [vmem:[%s6 + $0xb] sm:$0x1]
        %v2298 = vld [vmem:[%s6 + $0xc] sm:$0x1]
        %v2299 = vld [vmem:[%s6 + $0xd] sm:$0x1]
        %v2300 = vld [vmem:[%s6 + $0xe] sm:$0x1]
        %s2301 = scalar_lea.vmem %s2, 32
        %v2302 = vld [vmem:[%s2301] sm:$0xff]
        %v2303 = vld [vmem:[%s2301 + $0x8] sm:$0xff]
        %v2304 = vld [vmem:[%s2301 + $0x10] sm:$0xff]
        %v2305 = vld [vmem:[%s2301 + $0x18] sm:$0xff]
        %v2306 = vperm.slane %v2294, 0
        %v2308 = vsel %vm424, %v2278, 0
        %v2311 = vsel %vm424, %v2279, 0
        %v2314 = vsel %vm424, %v2280, 0
        %v2317 = vsel %vm424, %v2281, 0
        %v2320 = vsel %vm424, %v2282, 0
        %v2323 = vsel %vm424, %v2283, 0
        %v2326 = vsel %vm424, %v2284, 0
        %v2329 = vsel %vm424, %v2285, 0
        %v2332 = vsel %vm424, %v2286, 0
        %v2335 = vsel %vm424, %v2287, 0
        %v2338 = vsel %vm424, %v2288, 0
        %v2341 = vsel %vm424, %v2289, 0
        %v2344 = vsel %vm424, %v2290, 0
        %v2347 = vsel %vm424, %v2291, 0
        %v2350 = vsel %vm424, %v2292, 0
        %v2353 = vsel %vm424, %v2293, 0
        %2355 = vmatpush.msra.mxu0 0.0
        %2356 = vmatpush.msra.mxu0 0.0
        %2357 = vmatpush.msra.mxu0 0.0
        %2358 = vmatpush.msra.mxu0 0.0
        %2359 = vmatpush.msra.mxu0 0.0
        %2360 = vmatpush.msra.mxu0 0.0
        %2361 = vmatpush.msra.mxu0 0.0
        %2362 = vmatpush.msra.mxu0 0.0
        %2363 = vmatpush.msra.mxu0 0.0
        %2364 = vmatpush.msra.mxu0 0.0
        %2365 = vmatpush.msra.mxu0 0.0
        %2366 = vmatpush.msra.mxu0 0.0
        %2367 = vmatpush.msra.mxu0 %v2305
        %2368 = vmatpush.msra.mxu0 %v2304
        %2369 = vmatpush.msra.mxu0 %v2303
        %2370 = vmatpush.msra.mxu0 %v2302
        %2371 = vmatmul.f32.gmra.mxu0 %v2308
        %v2372 = vpop.f32.mrf.mxu0
        %v2373 = vadd.f32 %v2306, %v2372
        %2374 = vmatmul.f32.gmra.mxu0 %v2311
        %v2375 = vpop.f32.mrf.mxu0
        %v2376 = vadd.f32 %v2306, %v2375
        %2377 = vmatmul.f32.gmra.mxu0 %v2314
        %v2378 = vpop.f32.mrf.mxu0
        %v2379 = vadd.f32 %v2306, %v2378
        %2380 = vmatmul.f32.gmra.mxu0 %v2317
        %v2381 = vpop.f32.mrf.mxu0
        %v2382 = vadd.f32 %v2306, %v2381
        %2383 = vmatmul.f32.gmra.mxu0 %v2320
        %v2384 = vpop.f32.mrf.mxu0
        %v2385 = vadd.f32 %v2306, %v2384
        %2386 = vmatmul.f32.gmra.mxu0 %v2323
        %v2387 = vpop.f32.mrf.mxu0
        %v2388 = vadd.f32 %v2306, %v2387
        %2389 = vmatmul.f32.gmra.mxu0 %v2326
        %v2390 = vpop.f32.mrf.mxu0
        %v2391 = vadd.f32 %v2306, %v2390
        %2392 = vmatmul.f32.gmra.mxu0 %v2329
        %v2393 = vpop.f32.mrf.mxu0
        %v2394 = vadd.f32 %v2306, %v2393
        %2395 = vmatmul.f32.gmra.mxu0 %v2332
        %v2396 = vpop.f32.mrf.mxu0
        %v2397 = vadd.f32 %v2306, %v2396
        %2398 = vmatmul.f32.gmra.mxu0 %v2335
        %v2399 = vpop.f32.mrf.mxu0
        %v2400 = vadd.f32 %v2306, %v2399
        %2401 = vmatmul.f32.gmra.mxu0 %v2338
        %v2402 = vpop.f32.mrf.mxu0
        %v2403 = vadd.f32 %v2306, %v2402
        %2404 = vmatmul.f32.gmra.mxu0 %v2341
        %v2405 = vpop.f32.mrf.mxu0
        %v2406 = vadd.f32 %v2306, %v2405
        %2407 = vmatmul.f32.gmra.mxu0 %v2344
        %v2408 = vpop.f32.mrf.mxu0
        %v2409 = vadd.f32 %v2306, %v2408
        %2410 = vmatmul.f32.gmra.mxu0 %v2347
        %v2411 = vpop.f32.mrf.mxu0
        %v2412 = vadd.f32 %v2306, %v2411
        %2413 = vmatmul.f32.gmra.mxu0 %v2350
        %v2414 = vpop.f32.mrf.mxu0
        %v2415 = vadd.f32 %v2306, %v2414
        %2416 = vmatmul.f32.gmra.mxu0 %v2353
        %v2417 = vpop.f32.mrf.mxu0
        %v2418 = vadd.f32 %v2306, %v2417
        %2419 = vdwg.mxu0
        %v2420 = vadd.f32 %v2278, %v2373
        %v2421 = vadd.f32 %v2279, %v2376
        %v2422 = vadd.f32 %v2280, %v2379
        %v2423 = vadd.f32 %v2281, %v2382
        %v2424 = vadd.f32 %v2282, %v2385
        %v2425 = vadd.f32 %v2283, %v2388
        %v2426 = vadd.f32 %v2284, %v2391
        %v2427 = vadd.f32 %v2285, %v2394
        %v2428 = vadd.f32 %v2286, %v2397
        %v2429 = vadd.f32 %v2287, %v2400
        %v2430 = vadd.f32 %v2288, %v2403
        %v2431 = vadd.f32 %v2289, %v2406
        %v2432 = vadd.f32 %v2290, %v2409
        %v2433 = vadd.f32 %v2291, %v2412
        %v2434 = vadd.f32 %v2292, %v2415
        %v2435 = vadd.f32 %v2293, %v2418
        %v2436 = vsel %vm424, %v2420, 0.0
        %2437 = vadd.xlane.f32.xlu0 %v2436
        %v2438 = vpop.xlane.xlu0 %2437
        %v2439 = vsel %vm424, %v2421, 0.0
        %2440 = vadd.xlane.f32.xlu0 %v2439
        %v2441 = vpop.xlane.xlu0 %2440
        %v2442 = vsel %vm424, %v2422, 0.0
        %2443 = vadd.xlane.f32.xlu0 %v2442
        %v2444 = vpop.xlane.xlu0 %2443
        %v2445 = vsel %vm424, %v2423, 0.0
        %2446 = vadd.xlane.f32.xlu0 %v2445
        %v2447 = vpop.xlane.xlu0 %2446
        %v2448 = vsel %vm424, %v2424, 0.0
        %2449 = vadd.xlane.f32.xlu0 %v2448
        %v2450 = vpop.xlane.xlu0 %2449
        %v2451 = vsel %vm424, %v2425, 0.0
        %2452 = vadd.xlane.f32.xlu0 %v2451
        %v2453 = vpop.xlane.xlu0 %2452
        %v2454 = vsel %vm424, %v2426, 0.0
        %2455 = vadd.xlane.f32.xlu0 %v2454
        %v2456 = vpop.xlane.xlu0 %2455
        %v2457 = vsel %vm424, %v2427, 0.0
        %2458 = vadd.xlane.f32.xlu0 %v2457
        %v2459 = vpop.xlane.xlu0 %2458
        %v2460 = vsel %vm424, %v2428, 0.0
        %2461 = vadd.xlane.f32.xlu0 %v2460
        %v2462 = vpop.xlane.xlu0 %2461
        %v2463 = vsel %vm424, %v2429, 0.0
        %2464 = vadd.xlane.f32.xlu0 %v2463
        %v2465 = vpop.xlane.xlu0 %2464
        %v2466 = vsel %vm424, %v2430, 0.0
        %2467 = vadd.xlane.f32.xlu0 %v2466
        %v2468 = vpop.xlane.xlu0 %2467
        %v2469 = vsel %vm424, %v2431, 0.0
        %2470 = vadd.xlane.f32.xlu0 %v2469
        %v2471 = vpop.xlane.xlu0 %2470
        %v2472 = vsel %vm424, %v2432, 0.0
        %2473 = vadd.xlane.f32.xlu0 %v2472
        %v2474 = vpop.xlane.xlu0 %2473
        %v2475 = vsel %vm424, %v2433, 0.0
        %2476 = vadd.xlane.f32.xlu0 %v2475
        %v2477 = vpop.xlane.xlu0 %2476
        %v2478 = vsel %vm424, %v2434, 0.0
        %2479 = vadd.xlane.f32.xlu0 %v2478
        %v2480 = vpop.xlane.xlu0 %2479
        %v2481 = vsel %vm424, %v2435, 0.0
        %2482 = vadd.xlane.f32.xlu0 %v2481
        %v2483 = vpop.xlane.xlu0 %2482
        %v2484 = vmul.f32 %v2438, %v608
        %v2485 = vmul.f32 %v2441, %v608
        %v2486 = vmul.f32 %v2444, %v608
        %v2487 = vmul.f32 %v2447, %v608
        %v2488 = vmul.f32 %v2450, %v608
        %v2489 = vmul.f32 %v2453, %v608
        %v2490 = vmul.f32 %v2456, %v608
        %v2491 = vmul.f32 %v2459, %v608
        %v2492 = vmul.f32 %v2462, %v608
        %v2493 = vmul.f32 %v2465, %v608
        %v2494 = vmul.f32 %v2468, %v608
        %v2495 = vmul.f32 %v2471, %v608
        %v2496 = vmul.f32 %v2474, %v608
        %v2497 = vmul.f32 %v2477, %v608
        %v2498 = vmul.f32 %v2480, %v608
        %v2499 = vmul.f32 %v2483, %v608
        %v2500 = vsub.f32 %v2420, %v2484
        %v2501 = vsub.f32 %v2421, %v2485
        %v2502 = vsub.f32 %v2422, %v2486
        %v2503 = vsub.f32 %v2423, %v2487
        %v2504 = vsub.f32 %v2424, %v2488
        %v2505 = vsub.f32 %v2425, %v2489
        %v2506 = vsub.f32 %v2426, %v2490
        %v2507 = vsub.f32 %v2427, %v2491
        %v2508 = vsub.f32 %v2428, %v2492
        %v2509 = vsub.f32 %v2429, %v2493
        %v2510 = vsub.f32 %v2430, %v2494
        %v2511 = vsub.f32 %v2431, %v2495
        %v2512 = vsub.f32 %v2432, %v2496
        %v2513 = vsub.f32 %v2433, %v2497
        %v2514 = vsub.f32 %v2434, %v2498
        %v2515 = vsub.f32 %v2435, %v2499
        %v2516 = vmul.f32 %v2500, %v2500
        %v2517 = vmul.f32 %v2501, %v2501
        %v2518 = vmul.f32 %v2502, %v2502
        %v2519 = vmul.f32 %v2503, %v2503
        %v2520 = vmul.f32 %v2504, %v2504
        %v2521 = vmul.f32 %v2505, %v2505
        %v2522 = vmul.f32 %v2506, %v2506
        %v2523 = vmul.f32 %v2507, %v2507
        %v2524 = vmul.f32 %v2508, %v2508
        %v2525 = vmul.f32 %v2509, %v2509
        %v2526 = vmul.f32 %v2510, %v2510
        %v2527 = vmul.f32 %v2511, %v2511
        %v2528 = vmul.f32 %v2512, %v2512
        %v2529 = vmul.f32 %v2513, %v2513
        %v2530 = vmul.f32 %v2514, %v2514
        %v2531 = vmul.f32 %v2515, %v2515
        %v2532 = vsel %vm424, %v2516, 0.0
        %2533 = vadd.xlane.f32.xlu0 %v2532
        %v2534 = vpop.xlane.xlu0 %2533
        %v2535 = vsel %vm424, %v2517, 0.0
        %2536 = vadd.xlane.f32.xlu0 %v2535
        %v2537 = vpop.xlane.xlu0 %2536
        %v2538 = vsel %vm424, %v2518, 0.0
        %2539 = vadd.xlane.f32.xlu0 %v2538
        %v2540 = vpop.xlane.xlu0 %2539
        %v2541 = vsel %vm424, %v2519, 0.0
        %2542 = vadd.xlane.f32.xlu0 %v2541
        %v2543 = vpop.xlane.xlu0 %2542
        %v2544 = vsel %vm424, %v2520, 0.0
        %2545 = vadd.xlane.f32.xlu0 %v2544
        %v2546 = vpop.xlane.xlu0 %2545
        %v2547 = vsel %vm424, %v2521, 0.0
        %2548 = vadd.xlane.f32.xlu0 %v2547
        %v2549 = vpop.xlane.xlu0 %2548
        %v2550 = vsel %vm424, %v2522, 0.0
        %2551 = vadd.xlane.f32.xlu0 %v2550
        %v2552 = vpop.xlane.xlu0 %2551
        %v2553 = vsel %vm424, %v2523, 0.0
        %2554 = vadd.xlane.f32.xlu0 %v2553
        %v2555 = vpop.xlane.xlu0 %2554
        %v2556 = vsel %vm424, %v2524, 0.0
        %2557 = vadd.xlane.f32.xlu0 %v2556
        %v2558 = vpop.xlane.xlu0 %2557
        %v2559 = vsel %vm424, %v2525, 0.0
        %2560 = vadd.xlane.f32.xlu0 %v2559
        %v2561 = vpop.xlane.xlu0 %2560
        %v2562 = vsel %vm424, %v2526, 0.0
        %2563 = vadd.xlane.f32.xlu0 %v2562
        %v2564 = vpop.xlane.xlu0 %2563
        %v2565 = vsel %vm424, %v2527, 0.0
        %2566 = vadd.xlane.f32.xlu0 %v2565
        %v2567 = vpop.xlane.xlu0 %2566
        %v2568 = vsel %vm424, %v2528, 0.0
        %2569 = vadd.xlane.f32.xlu0 %v2568
        %v2570 = vpop.xlane.xlu0 %2569
        %v2571 = vsel %vm424, %v2529, 0.0
        %2572 = vadd.xlane.f32.xlu0 %v2571
        %v2573 = vpop.xlane.xlu0 %2572
        %v2574 = vsel %vm424, %v2530, 0.0
        %2575 = vadd.xlane.f32.xlu0 %v2574
        %v2576 = vpop.xlane.xlu0 %2575
        %v2577 = vsel %vm424, %v2531, 0.0
        %2578 = vadd.xlane.f32.xlu0 %v2577
        %v2579 = vpop.xlane.xlu0 %2578
        %v2580 = vmul.f32 %v2534, %v608
        %v2581 = vmul.f32 %v2537, %v608
        %v2582 = vmul.f32 %v2540, %v608
        %v2583 = vmul.f32 %v2543, %v608
        %v2584 = vmul.f32 %v2546, %v608
        %v2585 = vmul.f32 %v2549, %v608
        %v2586 = vmul.f32 %v2552, %v608
        %v2587 = vmul.f32 %v2555, %v608
        %v2588 = vmul.f32 %v2558, %v608
        %v2589 = vmul.f32 %v2561, %v608
        %v2590 = vmul.f32 %v2564, %v608
        %v2591 = vmul.f32 %v2567, %v608
        %v2592 = vmul.f32 %v2570, %v608
        %v2593 = vmul.f32 %v2573, %v608
        %v2594 = vmul.f32 %v2576, %v608
        %v2595 = vmul.f32 %v2579, %v608
        %v2596 = vadd.f32 %v2580, 1e-05
        %v2597 = vadd.f32 %v2581, 1e-05
        %v2598 = vadd.f32 %v2582, 1e-05
        %v2599 = vadd.f32 %v2583, 1e-05
        %v2600 = vadd.f32 %v2584, 1e-05
        %v2601 = vadd.f32 %v2585, 1e-05
        %v2602 = vadd.f32 %v2586, 1e-05
        %v2603 = vadd.f32 %v2587, 1e-05
        %v2604 = vadd.f32 %v2588, 1e-05
        %v2605 = vadd.f32 %v2589, 1e-05
        %v2606 = vadd.f32 %v2590, 1e-05
        %v2607 = vadd.f32 %v2591, 1e-05
        %v2608 = vadd.f32 %v2592, 1e-05
        %v2609 = vadd.f32 %v2593, 1e-05
        %v2610 = vadd.f32 %v2594, 1e-05
        %v2611 = vadd.f32 %v2595, 1e-05
        %v2612 = vrsqrt.pop %v2596
        %v2613 = vmul.f32 %v2612, %v2596
        %v2614 = vmul.f32 %v2613, %v2612
        %v2615 = vmul.f32 0.5, %v2614
        %v2616 = vsub.f32 1.5, %v2615
        %v2617 = vmul.f32 %v2612, %v2616
        %vm2618 = vweird.f32 %v2596
        %vm2619 = vweird.f32 %v2612
        %vm2620 = vmor %vm2618, %vm2619
        %v2621 = vsel %vm2620, %v2612, %v2617
        %v2622 = vrsqrt.pop %v2597
        %v2623 = vmul.f32 %v2622, %v2597
        %v2624 = vmul.f32 %v2623, %v2622
        %v2625 = vmul.f32 0.5, %v2624
        %v2626 = vsub.f32 1.5, %v2625
        %v2627 = vmul.f32 %v2622, %v2626
        %vm2628 = vweird.f32 %v2597
        %vm2629 = vweird.f32 %v2622
        %vm2630 = vmor %vm2628, %vm2629
        %v2631 = vsel %vm2630, %v2622, %v2627
        %v2632 = vrsqrt.pop %v2598
        %v2633 = vmul.f32 %v2632, %v2598
        %v2634 = vmul.f32 %v2633, %v2632
        %v2635 = vmul.f32 0.5, %v2634
        %v2636 = vsub.f32 1.5, %v2635
        %v2637 = vmul.f32 %v2632, %v2636
        %vm2638 = vweird.f32 %v2598
        %vm2639 = vweird.f32 %v2632
        %vm2640 = vmor %vm2638, %vm2639
        %v2641 = vsel %vm2640, %v2632, %v2637
        %v2642 = vrsqrt.pop %v2599
        %v2643 = vmul.f32 %v2642, %v2599
        %v2644 = vmul.f32 %v2643, %v2642
        %v2645 = vmul.f32 0.5, %v2644
        %v2646 = vsub.f32 1.5, %v2645
        %v2647 = vmul.f32 %v2642, %v2646
        %vm2648 = vweird.f32 %v2599
        %vm2649 = vweird.f32 %v2642
        %vm2650 = vmor %vm2648, %vm2649
        %v2651 = vsel %vm2650, %v2642, %v2647
        %v2652 = vrsqrt.pop %v2600
        %v2653 = vmul.f32 %v2652, %v2600
        %v2654 = vmul.f32 %v2653, %v2652
        %v2655 = vmul.f32 0.5, %v2654
        %v2656 = vsub.f32 1.5, %v2655
        %v2657 = vmul.f32 %v2652, %v2656
        %vm2658 = vweird.f32 %v2600
        %vm2659 = vweird.f32 %v2652
        %vm2660 = vmor %vm2658, %vm2659
        %v2661 = vsel %vm2660, %v2652, %v2657
        %v2662 = vrsqrt.pop %v2601
        %v2663 = vmul.f32 %v2662, %v2601
        %v2664 = vmul.f32 %v2663, %v2662
        %v2665 = vmul.f32 0.5, %v2664
        %v2666 = vsub.f32 1.5, %v2665
        %v2667 = vmul.f32 %v2662, %v2666
        %vm2668 = vweird.f32 %v2601
        %vm2669 = vweird.f32 %v2662
        %vm2670 = vmor %vm2668, %vm2669
        %v2671 = vsel %vm2670, %v2662, %v2667
        %v2672 = vrsqrt.pop %v2602
        %v2673 = vmul.f32 %v2672, %v2602
        %v2674 = vmul.f32 %v2673, %v2672
        %v2675 = vmul.f32 0.5, %v2674
        %v2676 = vsub.f32 1.5, %v2675
        %v2677 = vmul.f32 %v2672, %v2676
        %vm2678 = vweird.f32 %v2602
        %vm2679 = vweird.f32 %v2672
        %vm2680 = vmor %vm2678, %vm2679
        %v2681 = vsel %vm2680, %v2672, %v2677
        %v2682 = vrsqrt.pop %v2603
        %v2683 = vmul.f32 %v2682, %v2603
        %v2684 = vmul.f32 %v2683, %v2682
        %v2685 = vmul.f32 0.5, %v2684
        %v2686 = vsub.f32 1.5, %v2685
        %v2687 = vmul.f32 %v2682, %v2686
        %vm2688 = vweird.f32 %v2603
        %vm2689 = vweird.f32 %v2682
        %vm2690 = vmor %vm2688, %vm2689
        %v2691 = vsel %vm2690, %v2682, %v2687
        %v2692 = vrsqrt.pop %v2604
        %v2693 = vmul.f32 %v2692, %v2604
        %v2694 = vmul.f32 %v2693, %v2692
        %v2695 = vmul.f32 0.5, %v2694
        %v2696 = vsub.f32 1.5, %v2695
        %v2697 = vmul.f32 %v2692, %v2696
        %vm2698 = vweird.f32 %v2604
        %vm2699 = vweird.f32 %v2692
        %vm2700 = vmor %vm2698, %vm2699
        %v2701 = vsel %vm2700, %v2692, %v2697
        %v2702 = vrsqrt.pop %v2605
        %v2703 = vmul.f32 %v2702, %v2605
        %v2704 = vmul.f32 %v2703, %v2702
        %v2705 = vmul.f32 0.5, %v2704
        %v2706 = vsub.f32 1.5, %v2705
        %v2707 = vmul.f32 %v2702, %v2706
        %vm2708 = vweird.f32 %v2605
        %vm2709 = vweird.f32 %v2702
        %vm2710 = vmor %vm2708, %vm2709
        %v2711 = vsel %vm2710, %v2702, %v2707
        %v2712 = vrsqrt.pop %v2606
        %v2713 = vmul.f32 %v2712, %v2606
        %v2714 = vmul.f32 %v2713, %v2712
        %v2715 = vmul.f32 0.5, %v2714
        %v2716 = vsub.f32 1.5, %v2715
        %v2717 = vmul.f32 %v2712, %v2716
        %vm2718 = vweird.f32 %v2606
        %vm2719 = vweird.f32 %v2712
        %vm2720 = vmor %vm2718, %vm2719
        %v2721 = vsel %vm2720, %v2712, %v2717
        %v2722 = vrsqrt.pop %v2607
        %v2723 = vmul.f32 %v2722, %v2607
        %v2724 = vmul.f32 %v2723, %v2722
        %v2725 = vmul.f32 0.5, %v2724
        %v2726 = vsub.f32 1.5, %v2725
        %v2727 = vmul.f32 %v2722, %v2726
        %vm2728 = vweird.f32 %v2607
        %vm2729 = vweird.f32 %v2722
        %vm2730 = vmor %vm2728, %vm2729
        %v2731 = vsel %vm2730, %v2722, %v2727
        %v2732 = vrsqrt.pop %v2608
        %v2733 = vmul.f32 %v2732, %v2608
        %v2734 = vmul.f32 %v2733, %v2732
        %v2735 = vmul.f32 0.5, %v2734
        %v2736 = vsub.f32 1.5, %v2735
        %v2737 = vmul.f32 %v2732, %v2736
        %vm2738 = vweird.f32 %v2608
        %vm2739 = vweird.f32 %v2732
        %vm2740 = vmor %vm2738, %vm2739
        %v2741 = vsel %vm2740, %v2732, %v2737
        %v2742 = vrsqrt.pop %v2609
        %v2743 = vmul.f32 %v2742, %v2609
        %v2744 = vmul.f32 %v2743, %v2742
        %v2745 = vmul.f32 0.5, %v2744
        %v2746 = vsub.f32 1.5, %v2745
        %v2747 = vmul.f32 %v2742, %v2746
        %vm2748 = vweird.f32 %v2609
        %vm2749 = vweird.f32 %v2742
        %vm2750 = vmor %vm2748, %vm2749
        %v2751 = vsel %vm2750, %v2742, %v2747
        %v2752 = vrsqrt.pop %v2610
        %v2753 = vmul.f32 %v2752, %v2610
        %v2754 = vmul.f32 %v2753, %v2752
        %v2755 = vmul.f32 0.5, %v2754
        %v2756 = vsub.f32 1.5, %v2755
        %v2757 = vmul.f32 %v2752, %v2756
        %vm2758 = vweird.f32 %v2610
        %vm2759 = vweird.f32 %v2752
        %vm2760 = vmor %vm2758, %vm2759
        %v2761 = vsel %vm2760, %v2752, %v2757
        %v2762 = vrsqrt.pop %v2611
        %v2763 = vmul.f32 %v2762, %v2611
        %v2764 = vmul.f32 %v2763, %v2762
        %v2765 = vmul.f32 0.5, %v2764
        %v2766 = vsub.f32 1.5, %v2765
        %v2767 = vmul.f32 %v2762, %v2766
        %vm2768 = vweird.f32 %v2611
        %vm2769 = vweird.f32 %v2762
        %vm2770 = vmor %vm2768, %vm2769
        %v2771 = vsel %vm2770, %v2762, %v2767
        %v2772 = vmul.f32 %v2500, %v2621
        %v2773 = vmul.f32 %v2501, %v2631
        %v2774 = vmul.f32 %v2502, %v2641
        %v2775 = vmul.f32 %v2503, %v2651
        %v2776 = vmul.f32 %v2504, %v2661
        %v2777 = vmul.f32 %v2505, %v2671
        %v2778 = vmul.f32 %v2506, %v2681
        %v2779 = vmul.f32 %v2507, %v2691
        %v2780 = vmul.f32 %v2508, %v2701
        %v2781 = vmul.f32 %v2509, %v2711
        %v2782 = vmul.f32 %v2510, %v2721
        %v2783 = vmul.f32 %v2511, %v2731
        %v2784 = vmul.f32 %v2512, %v2741
        %v2785 = vmul.f32 %v2513, %v2751
        %v2786 = vmul.f32 %v2514, %v2761
        %v2787 = vmul.f32 %v2515, %v2771
        %v2788 = vperm.slane %v2295, 0
        %v2789 = vmul.f32 %v2772, %v2788
        %v2790 = vmul.f32 %v2773, %v2788
        %v2791 = vmul.f32 %v2774, %v2788
        %v2792 = vmul.f32 %v2775, %v2788
        %v2793 = vmul.f32 %v2776, %v2788
        %v2794 = vmul.f32 %v2777, %v2788
        %v2795 = vmul.f32 %v2778, %v2788
        %v2796 = vmul.f32 %v2779, %v2788
        %v2797 = vmul.f32 %v2780, %v2788
        %v2798 = vmul.f32 %v2781, %v2788
        %v2799 = vmul.f32 %v2782, %v2788
        %v2800 = vmul.f32 %v2783, %v2788
        %v2801 = vmul.f32 %v2784, %v2788
        %v2802 = vmul.f32 %v2785, %v2788
        %v2803 = vmul.f32 %v2786, %v2788
        %v2804 = vmul.f32 %v2787, %v2788
        %v2805 = vperm.slane %v2296, 0
        %v2806 = vadd.f32 %v2789, %v2805
        %v2807 = vadd.f32 %v2790, %v2805
        %v2808 = vadd.f32 %v2791, %v2805
        %v2809 = vadd.f32 %v2792, %v2805
        %v2810 = vadd.f32 %v2793, %v2805
        %v2811 = vadd.f32 %v2794, %v2805
        %v2812 = vadd.f32 %v2795, %v2805
        %v2813 = vadd.f32 %v2796, %v2805
        %v2814 = vadd.f32 %v2797, %v2805
        %v2815 = vadd.f32 %v2798, %v2805
        %v2816 = vadd.f32 %v2799, %v2805
        %v2817 = vadd.f32 %v2800, %v2805
        %v2818 = vadd.f32 %v2801, %v2805
        %v2819 = vadd.f32 %v2802, %v2805
        %v2820 = vadd.f32 %v2803, %v2805
        %v2821 = vadd.f32 %v2804, %v2805
        %s2822 = scalar_lea.vmem %s3, 32
        %v2823 = vld [vmem:[%s2822] sm:$0xff]
        %v2824 = vld [vmem:[%s2822 + $0x8] sm:$0xff]
        %v2825 = vld [vmem:[%s2822 + $0x10] sm:$0xff]
        %v2826 = vld [vmem:[%s2822 + $0x18] sm:$0xff]
        %v2827 = vperm.slane %v2297, 0
        %v2829 = vsel %vm424, %v2806, 0
        %v2832 = vsel %vm424, %v2807, 0
        %v2835 = vsel %vm424, %v2808, 0
        %v2838 = vsel %vm424, %v2809, 0
        %v2841 = vsel %vm424, %v2810, 0
        %v2844 = vsel %vm424, %v2811, 0
        %v2847 = vsel %vm424, %v2812, 0
        %v2850 = vsel %vm424, %v2813, 0
        %v2853 = vsel %vm424, %v2814, 0
        %v2856 = vsel %vm424, %v2815, 0
        %v2859 = vsel %vm424, %v2816, 0
        %v2862 = vsel %vm424, %v2817, 0
        %v2865 = vsel %vm424, %v2818, 0
        %v2868 = vsel %vm424, %v2819, 0
        %v2871 = vsel %vm424, %v2820, 0
        %v2874 = vsel %vm424, %v2821, 0
        %2876 = vmatpush.msra.mxu0 0.0
        %2877 = vmatpush.msra.mxu0 0.0
        %2878 = vmatpush.msra.mxu0 0.0
        %2879 = vmatpush.msra.mxu0 0.0
        %2880 = vmatpush.msra.mxu0 0.0
        %2881 = vmatpush.msra.mxu0 0.0
        %2882 = vmatpush.msra.mxu0 0.0
        %2883 = vmatpush.msra.mxu0 0.0
        %2884 = vmatpush.msra.mxu0 0.0
        %2885 = vmatpush.msra.mxu0 0.0
        %2886 = vmatpush.msra.mxu0 0.0
        %2887 = vmatpush.msra.mxu0 0.0
        %2888 = vmatpush.msra.mxu0 %v2826
        %2889 = vmatpush.msra.mxu0 %v2825
        %2890 = vmatpush.msra.mxu0 %v2824
        %2891 = vmatpush.msra.mxu0 %v2823
        %2892 = vmatmul.f32.gmra.mxu0 %v2829
        %v2893 = vpop.f32.mrf.mxu0
        %v2894 = vadd.f32 %v2827, %v2893
        %2895 = vmatmul.f32.gmra.mxu0 %v2832
        %v2896 = vpop.f32.mrf.mxu0
        %v2897 = vadd.f32 %v2827, %v2896
        %2898 = vmatmul.f32.gmra.mxu0 %v2835
        %v2899 = vpop.f32.mrf.mxu0
        %v2900 = vadd.f32 %v2827, %v2899
        %2901 = vmatmul.f32.gmra.mxu0 %v2838
        %v2902 = vpop.f32.mrf.mxu0
        %v2903 = vadd.f32 %v2827, %v2902
        %2904 = vmatmul.f32.gmra.mxu0 %v2841
        %v2905 = vpop.f32.mrf.mxu0
        %v2906 = vadd.f32 %v2827, %v2905
        %2907 = vmatmul.f32.gmra.mxu0 %v2844
        %v2908 = vpop.f32.mrf.mxu0
        %v2909 = vadd.f32 %v2827, %v2908
        %2910 = vmatmul.f32.gmra.mxu0 %v2847
        %v2911 = vpop.f32.mrf.mxu0
        %v2912 = vadd.f32 %v2827, %v2911
        %2913 = vmatmul.f32.gmra.mxu0 %v2850
        %v2914 = vpop.f32.mrf.mxu0
        %v2915 = vadd.f32 %v2827, %v2914
        %2916 = vmatmul.f32.gmra.mxu0 %v2853
        %v2917 = vpop.f32.mrf.mxu0
        %v2918 = vadd.f32 %v2827, %v2917
        %2919 = vmatmul.f32.gmra.mxu0 %v2856
        %v2920 = vpop.f32.mrf.mxu0
        %v2921 = vadd.f32 %v2827, %v2920
        %2922 = vmatmul.f32.gmra.mxu0 %v2859
        %v2923 = vpop.f32.mrf.mxu0
        %v2924 = vadd.f32 %v2827, %v2923
        %2925 = vmatmul.f32.gmra.mxu0 %v2862
        %v2926 = vpop.f32.mrf.mxu0
        %v2927 = vadd.f32 %v2827, %v2926
        %2928 = vmatmul.f32.gmra.mxu0 %v2865
        %v2929 = vpop.f32.mrf.mxu0
        %v2930 = vadd.f32 %v2827, %v2929
        %2931 = vmatmul.f32.gmra.mxu0 %v2868
        %v2932 = vpop.f32.mrf.mxu0
        %v2933 = vadd.f32 %v2827, %v2932
        %2934 = vmatmul.f32.gmra.mxu0 %v2871
        %v2935 = vpop.f32.mrf.mxu0
        %v2936 = vadd.f32 %v2827, %v2935
        %2937 = vmatmul.f32.gmra.mxu0 %v2874
        %v2938 = vpop.f32.mrf.mxu0
        %v2939 = vadd.f32 %v2827, %v2938
        %2940 = vdwg.mxu0
        %v2941 = vmul.f32 %v2894, 0.5
        %v2942 = vmul.f32 %v2897, 0.5
        %v2943 = vmul.f32 %v2900, 0.5
        %v2944 = vmul.f32 %v2903, 0.5
        %v2945 = vmul.f32 %v2906, 0.5
        %v2946 = vmul.f32 %v2909, 0.5
        %v2947 = vmul.f32 %v2912, 0.5
        %v2948 = vmul.f32 %v2915, 0.5
        %v2949 = vmul.f32 %v2918, 0.5
        %v2950 = vmul.f32 %v2921, 0.5
        %v2951 = vmul.f32 %v2924, 0.5
        %v2952 = vmul.f32 %v2927, 0.5
        %v2953 = vmul.f32 %v2930, 0.5
        %v2954 = vmul.f32 %v2933, 0.5
        %v2955 = vmul.f32 %v2936, 0.5
        %v2956 = vmul.f32 %v2939, 0.5
        %v2957 = vmul.f32 %v2894, 0.70710677
        %v2958 = vmul.f32 %v2897, 0.70710677
        %v2959 = vmul.f32 %v2900, 0.70710677
        %v2960 = vmul.f32 %v2903, 0.70710677
        %v2961 = vmul.f32 %v2906, 0.70710677
        %v2962 = vmul.f32 %v2909, 0.70710677
        %v2963 = vmul.f32 %v2912, 0.70710677
        %v2964 = vmul.f32 %v2915, 0.70710677
        %v2965 = vmul.f32 %v2918, 0.70710677
        %v2966 = vmul.f32 %v2921, 0.70710677
        %v2967 = vmul.f32 %v2924, 0.70710677
        %v2968 = vmul.f32 %v2927, 0.70710677
        %v2969 = vmul.f32 %v2930, 0.70710677
        %v2970 = vmul.f32 %v2933, 0.70710677
        %v2971 = vmul.f32 %v2936, 0.70710677
        %v2972 = vmul.f32 %v2939, 0.70710677
        %v2973 = vmul.f32 %v2957, %v2957
        %v2974 = vmin.f32 16.0, %v2973
        %v2975 = vmul.f32 %v2974, 2.1237322e-06
        %v2976 = vadd.f32 %v2975, 0.00028619796
        %v2977 = vmul.f32 %v2974, %v2976
        %v2978 = vadd.f32 %v2977, 0.0036580483
        %v2979 = vmul.f32 %v2974, %v2978
        %v2980 = vadd.f32 %v2979, 0.05243302
        %v2981 = vmul.f32 %v2974, %v2980
        %v2982 = vadd.f32 %v2981, 0.18741608
        %v2983 = vmul.f32 %v2974, %v2982
        %v2984 = vadd.f32 %v2983, 1.1283791
        %v2985 = vmul.f32 %v2957, %v2984
        %v2986 = vmul.f32 %v2974, 3.8918573e-05
        %v2987 = vadd.f32 %v2986, 0.001143296
        %v2988 = vmul.f32 %v2974, %v2987
        %v2989 = vadd.f32 %v2988, 0.014752088
        %v2990 = vmul.f32 %v2974, %v2989
        %v2991 = vadd.f32 %v2990, 0.112945676
        %v2992 = vmul.f32 %v2974, %v2991
        %v2993 = vadd.f32 %v2992, 0.4994258
        %v2994 = vmul.f32 %v2974, %v2993
        %v2995 = vadd.f32 %v2994, 1.0
        %v2996 = vrcp.pop %v2995
        %v2997 = vmul.f32 %v2995, %v2996
        %v2998 = vsub.f32 1.0, %v2997
        %v2999 = vmul.f32 %v2996, %v2998
        %v3000 = vadd.f32 %v2996, %v2999
        %vm3001 = vweird.f32 %v2995
        %vm3002 = vweird.f32 %v2996
        %vm3003 = vmor %vm3001, %vm3002
        %v3004 = vsel %vm3003, %v2996, %v3000
        %v3005 = vand.u32 2147483647, %v2995
        %vm3006 = vcmp.eq.f32.partialorder %v3005, 8.507059e+37
        %v3007 = vand.u32 %v2995, 2147483648
        %v3008 = vor.u32 1.1754944e-38, %v3007
        %v3009 = vsel %vm3006, %v3008, %v3004
        %v3010 = vmul.f32 %v2985, %v3009
        %v3011 = vmin.f32 %v3010, 1.0
        %v3012 = vmax.f32 %v3011, -1.0
        %v3013 = vmul.f32 %v2958, %v2958
        %v3014 = vmin.f32 16.0, %v3013
        %v3015 = vmul.f32 %v3014, 2.1237322e-06
        %v3016 = vadd.f32 %v3015, 0.00028619796
        %v3017 = vmul.f32 %v3014, %v3016
        %v3018 = vadd.f32 %v3017, 0.0036580483
        %v3019 = vmul.f32 %v3014, %v3018
        %v3020 = vadd.f32 %v3019, 0.05243302
        %v3021 = vmul.f32 %v3014, %v3020
        %v3022 = vadd.f32 %v3021, 0.18741608
        %v3023 = vmul.f32 %v3014, %v3022
        %v3024 = vadd.f32 %v3023, 1.1283791
        %v3025 = vmul.f32 %v2958, %v3024
        %v3026 = vmul.f32 %v3014, 3.8918573e-05
        %v3027 = vadd.f32 %v3026, 0.001143296
        %v3028 = vmul.f32 %v3014, %v3027
        %v3029 = vadd.f32 %v3028, 0.014752088
        %v3030 = vmul.f32 %v3014, %v3029
        %v3031 = vadd.f32 %v3030, 0.112945676
        %v3032 = vmul.f32 %v3014, %v3031
        %v3033 = vadd.f32 %v3032, 0.4994258
        %v3034 = vmul.f32 %v3014, %v3033
        %v3035 = vadd.f32 %v3034, 1.0
        %v3036 = vrcp.pop %v3035
        %v3037 = vmul.f32 %v3035, %v3036
        %v3038 = vsub.f32 1.0, %v3037
        %v3039 = vmul.f32 %v3036, %v3038
        %v3040 = vadd.f32 %v3036, %v3039
        %vm3041 = vweird.f32 %v3035
        %vm3042 = vweird.f32 %v3036
        %vm3043 = vmor %vm3041, %vm3042
        %v3044 = vsel %vm3043, %v3036, %v3040
        %v3045 = vand.u32 2147483647, %v3035
        %vm3046 = vcmp.eq.f32.partialorder %v3045, 8.507059e+37
        %v3047 = vand.u32 %v3035, 2147483648
        %v3048 = vor.u32 1.1754944e-38, %v3047
        %v3049 = vsel %vm3046, %v3048, %v3044
        %v3050 = vmul.f32 %v3025, %v3049
        %v3051 = vmin.f32 %v3050, 1.0
        %v3052 = vmax.f32 %v3051, -1.0
        %v3053 = vmul.f32 %v2959, %v2959
        %v3054 = vmin.f32 16.0, %v3053
        %v3055 = vmul.f32 %v3054, 2.1237322e-06
        %v3056 = vadd.f32 %v3055, 0.00028619796
        %v3057 = vmul.f32 %v3054, %v3056
        %v3058 = vadd.f32 %v3057, 0.0036580483
        %v3059 = vmul.f32 %v3054, %v3058
        %v3060 = vadd.f32 %v3059, 0.05243302
        %v3061 = vmul.f32 %v3054, %v3060
        %v3062 = vadd.f32 %v3061, 0.18741608
        %v3063 = vmul.f32 %v3054, %v3062
        %v3064 = vadd.f32 %v3063, 1.1283791
        %v3065 = vmul.f32 %v2959, %v3064
        %v3066 = vmul.f32 %v3054, 3.8918573e-05
        %v3067 = vadd.f32 %v3066, 0.001143296
        %v3068 = vmul.f32 %v3054, %v3067
        %v3069 = vadd.f32 %v3068, 0.014752088
        %v3070 = vmul.f32 %v3054, %v3069
        %v3071 = vadd.f32 %v3070, 0.112945676
        %v3072 = vmul.f32 %v3054, %v3071
        %v3073 = vadd.f32 %v3072, 0.4994258
        %v3074 = vmul.f32 %v3054, %v3073
        %v3075 = vadd.f32 %v3074, 1.0
        %v3076 = vrcp.pop %v3075
        %v3077 = vmul.f32 %v3075, %v3076
        %v3078 = vsub.f32 1.0, %v3077
        %v3079 = vmul.f32 %v3076, %v3078
        %v3080 = vadd.f32 %v3076, %v3079
        %vm3081 = vweird.f32 %v3075
        %vm3082 = vweird.f32 %v3076
        %vm3083 = vmor %vm3081, %vm3082
        %v3084 = vsel %vm3083, %v3076, %v3080
        %v3085 = vand.u32 2147483647, %v3075
        %vm3086 = vcmp.eq.f32.partialorder %v3085, 8.507059e+37
        %v3087 = vand.u32 %v3075, 2147483648
        %v3088 = vor.u32 1.1754944e-38, %v3087
        %v3089 = vsel %vm3086, %v3088, %v3084
        %v3090 = vmul.f32 %v3065, %v3089
        %v3091 = vmin.f32 %v3090, 1.0
        %v3092 = vmax.f32 %v3091, -1.0
        %v3093 = vmul.f32 %v2960, %v2960
        %v3094 = vmin.f32 16.0, %v3093
        %v3095 = vmul.f32 %v3094, 2.1237322e-06
        %v3096 = vadd.f32 %v3095, 0.00028619796
        %v3097 = vmul.f32 %v3094, %v3096
        %v3098 = vadd.f32 %v3097, 0.0036580483
        %v3099 = vmul.f32 %v3094, %v3098
        %v3100 = vadd.f32 %v3099, 0.05243302
        %v3101 = vmul.f32 %v3094, %v3100
        %v3102 = vadd.f32 %v3101, 0.18741608
        %v3103 = vmul.f32 %v3094, %v3102
        %v3104 = vadd.f32 %v3103, 1.1283791
        %v3105 = vmul.f32 %v2960, %v3104
        %v3106 = vmul.f32 %v3094, 3.8918573e-05
        %v3107 = vadd.f32 %v3106, 0.001143296
        %v3108 = vmul.f32 %v3094, %v3107
        %v3109 = vadd.f32 %v3108, 0.014752088
        %v3110 = vmul.f32 %v3094, %v3109
        %v3111 = vadd.f32 %v3110, 0.112945676
        %v3112 = vmul.f32 %v3094, %v3111
        %v3113 = vadd.f32 %v3112, 0.4994258
        %v3114 = vmul.f32 %v3094, %v3113
        %v3115 = vadd.f32 %v3114, 1.0
        %v3116 = vrcp.pop %v3115
        %v3117 = vmul.f32 %v3115, %v3116
        %v3118 = vsub.f32 1.0, %v3117
        %v3119 = vmul.f32 %v3116, %v3118
        %v3120 = vadd.f32 %v3116, %v3119
        %vm3121 = vweird.f32 %v3115
        %vm3122 = vweird.f32 %v3116
        %vm3123 = vmor %vm3121, %vm3122
        %v3124 = vsel %vm3123, %v3116, %v3120
        %v3125 = vand.u32 2147483647, %v3115
        %vm3126 = vcmp.eq.f32.partialorder %v3125, 8.507059e+37
        %v3127 = vand.u32 %v3115, 2147483648
        %v3128 = vor.u32 1.1754944e-38, %v3127
        %v3129 = vsel %vm3126, %v3128, %v3124
        %v3130 = vmul.f32 %v3105, %v3129
        %v3131 = vmin.f32 %v3130, 1.0
        %v3132 = vmax.f32 %v3131, -1.0
        %v3133 = vmul.f32 %v2961, %v2961
        %v3134 = vmin.f32 16.0, %v3133
        %v3135 = vmul.f32 %v3134, 2.1237322e-06
        %v3136 = vadd.f32 %v3135, 0.00028619796
        %v3137 = vmul.f32 %v3134, %v3136
        %v3138 = vadd.f32 %v3137, 0.0036580483
        %v3139 = vmul.f32 %v3134, %v3138
        %v3140 = vadd.f32 %v3139, 0.05243302
        %v3141 = vmul.f32 %v3134, %v3140
        %v3142 = vadd.f32 %v3141, 0.18741608
        %v3143 = vmul.f32 %v3134, %v3142
        %v3144 = vadd.f32 %v3143, 1.1283791
        %v3145 = vmul.f32 %v2961, %v3144
        %v3146 = vmul.f32 %v3134, 3.8918573e-05
        %v3147 = vadd.f32 %v3146, 0.001143296
        %v3148 = vmul.f32 %v3134, %v3147
        %v3149 = vadd.f32 %v3148, 0.014752088
        %v3150 = vmul.f32 %v3134, %v3149
        %v3151 = vadd.f32 %v3150, 0.112945676
        %v3152 = vmul.f32 %v3134, %v3151
        %v3153 = vadd.f32 %v3152, 0.4994258
        %v3154 = vmul.f32 %v3134, %v3153
        %v3155 = vadd.f32 %v3154, 1.0
        %v3156 = vrcp.pop %v3155
        %v3157 = vmul.f32 %v3155, %v3156
        %v3158 = vsub.f32 1.0, %v3157
        %v3159 = vmul.f32 %v3156, %v3158
        %v3160 = vadd.f32 %v3156, %v3159
        %vm3161 = vweird.f32 %v3155
        %vm3162 = vweird.f32 %v3156
        %vm3163 = vmor %vm3161, %vm3162
        %v3164 = vsel %vm3163, %v3156, %v3160
        %v3165 = vand.u32 2147483647, %v3155
        %vm3166 = vcmp.eq.f32.partialorder %v3165, 8.507059e+37
        %v3167 = vand.u32 %v3155, 2147483648
        %v3168 = vor.u32 1.1754944e-38, %v3167
        %v3169 = vsel %vm3166, %v3168, %v3164
        %v3170 = vmul.f32 %v3145, %v3169
        %v3171 = vmin.f32 %v3170, 1.0
        %v3172 = vmax.f32 %v3171, -1.0
        %v3173 = vmul.f32 %v2962, %v2962
        %v3174 = vmin.f32 16.0, %v3173
        %v3175 = vmul.f32 %v3174, 2.1237322e-06
        %v3176 = vadd.f32 %v3175, 0.00028619796
        %v3177 = vmul.f32 %v3174, %v3176
        %v3178 = vadd.f32 %v3177, 0.0036580483
        %v3179 = vmul.f32 %v3174, %v3178
        %v3180 = vadd.f32 %v3179, 0.05243302
        %v3181 = vmul.f32 %v3174, %v3180
        %v3182 = vadd.f32 %v3181, 0.18741608
        %v3183 = vmul.f32 %v3174, %v3182
        %v3184 = vadd.f32 %v3183, 1.1283791
        %v3185 = vmul.f32 %v2962, %v3184
        %v3186 = vmul.f32 %v3174, 3.8918573e-05
        %v3187 = vadd.f32 %v3186, 0.001143296
        %v3188 = vmul.f32 %v3174, %v3187
        %v3189 = vadd.f32 %v3188, 0.014752088
        %v3190 = vmul.f32 %v3174, %v3189
        %v3191 = vadd.f32 %v3190, 0.112945676
        %v3192 = vmul.f32 %v3174, %v3191
        %v3193 = vadd.f32 %v3192, 0.4994258
        %v3194 = vmul.f32 %v3174, %v3193
        %v3195 = vadd.f32 %v3194, 1.0
        %v3196 = vrcp.pop %v3195
        %v3197 = vmul.f32 %v3195, %v3196
        %v3198 = vsub.f32 1.0, %v3197
        %v3199 = vmul.f32 %v3196, %v3198
        %v3200 = vadd.f32 %v3196, %v3199
        %vm3201 = vweird.f32 %v3195
        %vm3202 = vweird.f32 %v3196
        %vm3203 = vmor %vm3201, %vm3202
        %v3204 = vsel %vm3203, %v3196, %v3200
        %v3205 = vand.u32 2147483647, %v3195
        %vm3206 = vcmp.eq.f32.partialorder %v3205, 8.507059e+37
        %v3207 = vand.u32 %v3195, 2147483648
        %v3208 = vor.u32 1.1754944e-38, %v3207
        %v3209 = vsel %vm3206, %v3208, %v3204
        %v3210 = vmul.f32 %v3185, %v3209
        %v3211 = vmin.f32 %v3210, 1.0
        %v3212 = vmax.f32 %v3211, -1.0
        %v3213 = vmul.f32 %v2963, %v2963
        %v3214 = vmin.f32 16.0, %v3213
        %v3215 = vmul.f32 %v3214, 2.1237322e-06
        %v3216 = vadd.f32 %v3215, 0.00028619796
        %v3217 = vmul.f32 %v3214, %v3216
        %v3218 = vadd.f32 %v3217, 0.0036580483
        %v3219 = vmul.f32 %v3214, %v3218
        %v3220 = vadd.f32 %v3219, 0.05243302
        %v3221 = vmul.f32 %v3214, %v3220
        %v3222 = vadd.f32 %v3221, 0.18741608
        %v3223 = vmul.f32 %v3214, %v3222
        %v3224 = vadd.f32 %v3223, 1.1283791
        %v3225 = vmul.f32 %v2963, %v3224
        %v3226 = vmul.f32 %v3214, 3.8918573e-05
        %v3227 = vadd.f32 %v3226, 0.001143296
        %v3228 = vmul.f32 %v3214, %v3227
        %v3229 = vadd.f32 %v3228, 0.014752088
        %v3230 = vmul.f32 %v3214, %v3229
        %v3231 = vadd.f32 %v3230, 0.112945676
        %v3232 = vmul.f32 %v3214, %v3231
        %v3233 = vadd.f32 %v3232, 0.4994258
        %v3234 = vmul.f32 %v3214, %v3233
        %v3235 = vadd.f32 %v3234, 1.0
        %v3236 = vrcp.pop %v3235
        %v3237 = vmul.f32 %v3235, %v3236
        %v3238 = vsub.f32 1.0, %v3237
        %v3239 = vmul.f32 %v3236, %v3238
        %v3240 = vadd.f32 %v3236, %v3239
        %vm3241 = vweird.f32 %v3235
        %vm3242 = vweird.f32 %v3236
        %vm3243 = vmor %vm3241, %vm3242
        %v3244 = vsel %vm3243, %v3236, %v3240
        %v3245 = vand.u32 2147483647, %v3235
        %vm3246 = vcmp.eq.f32.partialorder %v3245, 8.507059e+37
        %v3247 = vand.u32 %v3235, 2147483648
        %v3248 = vor.u32 1.1754944e-38, %v3247
        %v3249 = vsel %vm3246, %v3248, %v3244
        %v3250 = vmul.f32 %v3225, %v3249
        %v3251 = vmin.f32 %v3250, 1.0
        %v3252 = vmax.f32 %v3251, -1.0
        %v3253 = vmul.f32 %v2964, %v2964
        %v3254 = vmin.f32 16.0, %v3253
        %v3255 = vmul.f32 %v3254, 2.1237322e-06
        %v3256 = vadd.f32 %v3255, 0.00028619796
        %v3257 = vmul.f32 %v3254, %v3256
        %v3258 = vadd.f32 %v3257, 0.0036580483
        %v3259 = vmul.f32 %v3254, %v3258
        %v3260 = vadd.f32 %v3259, 0.05243302
        %v3261 = vmul.f32 %v3254, %v3260
        %v3262 = vadd.f32 %v3261, 0.18741608
        %v3263 = vmul.f32 %v3254, %v3262
        %v3264 = vadd.f32 %v3263, 1.1283791
        %v3265 = vmul.f32 %v2964, %v3264
        %v3266 = vmul.f32 %v3254, 3.8918573e-05
        %v3267 = vadd.f32 %v3266, 0.001143296
        %v3268 = vmul.f32 %v3254, %v3267
        %v3269 = vadd.f32 %v3268, 0.014752088
        %v3270 = vmul.f32 %v3254, %v3269
        %v3271 = vadd.f32 %v3270, 0.112945676
        %v3272 = vmul.f32 %v3254, %v3271
        %v3273 = vadd.f32 %v3272, 0.4994258
        %v3274 = vmul.f32 %v3254, %v3273
        %v3275 = vadd.f32 %v3274, 1.0
        %v3276 = vrcp.pop %v3275
        %v3277 = vmul.f32 %v3275, %v3276
        %v3278 = vsub.f32 1.0, %v3277
        %v3279 = vmul.f32 %v3276, %v3278
        %v3280 = vadd.f32 %v3276, %v3279
        %vm3281 = vweird.f32 %v3275
        %vm3282 = vweird.f32 %v3276
        %vm3283 = vmor %vm3281, %vm3282
        %v3284 = vsel %vm3283, %v3276, %v3280
        %v3285 = vand.u32 2147483647, %v3275
        %vm3286 = vcmp.eq.f32.partialorder %v3285, 8.507059e+37
        %v3287 = vand.u32 %v3275, 2147483648
        %v3288 = vor.u32 1.1754944e-38, %v3287
        %v3289 = vsel %vm3286, %v3288, %v3284
        %v3290 = vmul.f32 %v3265, %v3289
        %v3291 = vmin.f32 %v3290, 1.0
        %v3292 = vmax.f32 %v3291, -1.0
        %v3293 = vmul.f32 %v2965, %v2965
        %v3294 = vmin.f32 16.0, %v3293
        %v3295 = vmul.f32 %v3294, 2.1237322e-06
        %v3296 = vadd.f32 %v3295, 0.00028619796
        %v3297 = vmul.f32 %v3294, %v3296
        %v3298 = vadd.f32 %v3297, 0.0036580483
        %v3299 = vmul.f32 %v3294, %v3298
        %v3300 = vadd.f32 %v3299, 0.05243302
        %v3301 = vmul.f32 %v3294, %v3300
        %v3302 = vadd.f32 %v3301, 0.18741608
        %v3303 = vmul.f32 %v3294, %v3302
        %v3304 = vadd.f32 %v3303, 1.1283791
        %v3305 = vmul.f32 %v2965, %v3304
        %v3306 = vmul.f32 %v3294, 3.8918573e-05
        %v3307 = vadd.f32 %v3306, 0.001143296
        %v3308 = vmul.f32 %v3294, %v3307
        %v3309 = vadd.f32 %v3308, 0.014752088
        %v3310 = vmul.f32 %v3294, %v3309
        %v3311 = vadd.f32 %v3310, 0.112945676
        %v3312 = vmul.f32 %v3294, %v3311
        %v3313 = vadd.f32 %v3312, 0.4994258
        %v3314 = vmul.f32 %v3294, %v3313
        %v3315 = vadd.f32 %v3314, 1.0
        %v3316 = vrcp.pop %v3315
        %v3317 = vmul.f32 %v3315, %v3316
        %v3318 = vsub.f32 1.0, %v3317
        %v3319 = vmul.f32 %v3316, %v3318
        %v3320 = vadd.f32 %v3316, %v3319
        %vm3321 = vweird.f32 %v3315
        %vm3322 = vweird.f32 %v3316
        %vm3323 = vmor %vm3321, %vm3322
        %v3324 = vsel %vm3323, %v3316, %v3320
        %v3325 = vand.u32 2147483647, %v3315
        %vm3326 = vcmp.eq.f32.partialorder %v3325, 8.507059e+37
        %v3327 = vand.u32 %v3315, 2147483648
        %v3328 = vor.u32 1.1754944e-38, %v3327
        %v3329 = vsel %vm3326, %v3328, %v3324
        %v3330 = vmul.f32 %v3305, %v3329
        %v3331 = vmin.f32 %v3330, 1.0
        %v3332 = vmax.f32 %v3331, -1.0
        %v3333 = vmul.f32 %v2966, %v2966
        %v3334 = vmin.f32 16.0, %v3333
        %v3335 = vmul.f32 %v3334, 2.1237322e-06
        %v3336 = vadd.f32 %v3335, 0.00028619796
        %v3337 = vmul.f32 %v3334, %v3336
        %v3338 = vadd.f32 %v3337, 0.0036580483
        %v3339 = vmul.f32 %v3334, %v3338
        %v3340 = vadd.f32 %v3339, 0.05243302
        %v3341 = vmul.f32 %v3334, %v3340
        %v3342 = vadd.f32 %v3341, 0.18741608
        %v3343 = vmul.f32 %v3334, %v3342
        %v3344 = vadd.f32 %v3343, 1.1283791
        %v3345 = vmul.f32 %v2966, %v3344
        %v3346 = vmul.f32 %v3334, 3.8918573e-05
        %v3347 = vadd.f32 %v3346, 0.001143296
        %v3348 = vmul.f32 %v3334, %v3347
        %v3349 = vadd.f32 %v3348, 0.014752088
        %v3350 = vmul.f32 %v3334, %v3349
        %v3351 = vadd.f32 %v3350, 0.112945676
        %v3352 = vmul.f32 %v3334, %v3351
        %v3353 = vadd.f32 %v3352, 0.4994258
        %v3354 = vmul.f32 %v3334, %v3353
        %v3355 = vadd.f32 %v3354, 1.0
        %v3356 = vrcp.pop %v3355
        %v3357 = vmul.f32 %v3355, %v3356
        %v3358 = vsub.f32 1.0, %v3357
        %v3359 = vmul.f32 %v3356, %v3358
        %v3360 = vadd.f32 %v3356, %v3359
        %vm3361 = vweird.f32 %v3355
        %vm3362 = vweird.f32 %v3356
        %vm3363 = vmor %vm3361, %vm3362
        %v3364 = vsel %vm3363, %v3356, %v3360
        %v3365 = vand.u32 2147483647, %v3355
        %vm3366 = vcmp.eq.f32.partialorder %v3365, 8.507059e+37
        %v3367 = vand.u32 %v3355, 2147483648
        %v3368 = vor.u32 1.1754944e-38, %v3367
        %v3369 = vsel %vm3366, %v3368, %v3364
        %v3370 = vmul.f32 %v3345, %v3369
        %v3371 = vmin.f32 %v3370, 1.0
        %v3372 = vmax.f32 %v3371, -1.0
        %v3373 = vmul.f32 %v2967, %v2967
        %v3374 = vmin.f32 16.0, %v3373
        %v3375 = vmul.f32 %v3374, 2.1237322e-06
        %v3376 = vadd.f32 %v3375, 0.00028619796
        %v3377 = vmul.f32 %v3374, %v3376
        %v3378 = vadd.f32 %v3377, 0.0036580483
        %v3379 = vmul.f32 %v3374, %v3378
        %v3380 = vadd.f32 %v3379, 0.05243302
        %v3381 = vmul.f32 %v3374, %v3380
        %v3382 = vadd.f32 %v3381, 0.18741608
        %v3383 = vmul.f32 %v3374, %v3382
        %v3384 = vadd.f32 %v3383, 1.1283791
        %v3385 = vmul.f32 %v2967, %v3384
        %v3386 = vmul.f32 %v3374, 3.8918573e-05
        %v3387 = vadd.f32 %v3386, 0.001143296
        %v3388 = vmul.f32 %v3374, %v3387
        %v3389 = vadd.f32 %v3388, 0.014752088
        %v3390 = vmul.f32 %v3374, %v3389
        %v3391 = vadd.f32 %v3390, 0.112945676
        %v3392 = vmul.f32 %v3374, %v3391
        %v3393 = vadd.f32 %v3392, 0.4994258
        %v3394 = vmul.f32 %v3374, %v3393
        %v3395 = vadd.f32 %v3394, 1.0
        %v3396 = vrcp.pop %v3395
        %v3397 = vmul.f32 %v3395, %v3396
        %v3398 = vsub.f32 1.0, %v3397
        %v3399 = vmul.f32 %v3396, %v3398
        %v3400 = vadd.f32 %v3396, %v3399
        %vm3401 = vweird.f32 %v3395
        %vm3402 = vweird.f32 %v3396
        %vm3403 = vmor %vm3401, %vm3402
        %v3404 = vsel %vm3403, %v3396, %v3400
        %v3405 = vand.u32 2147483647, %v3395
        %vm3406 = vcmp.eq.f32.partialorder %v3405, 8.507059e+37
        %v3407 = vand.u32 %v3395, 2147483648
        %v3408 = vor.u32 1.1754944e-38, %v3407
        %v3409 = vsel %vm3406, %v3408, %v3404
        %v3410 = vmul.f32 %v3385, %v3409
        %v3411 = vmin.f32 %v3410, 1.0
        %v3412 = vmax.f32 %v3411, -1.0
        %v3413 = vmul.f32 %v2968, %v2968
        %v3414 = vmin.f32 16.0, %v3413
        %v3415 = vmul.f32 %v3414, 2.1237322e-06
        %v3416 = vadd.f32 %v3415, 0.00028619796
        %v3417 = vmul.f32 %v3414, %v3416
        %v3418 = vadd.f32 %v3417, 0.0036580483
        %v3419 = vmul.f32 %v3414, %v3418
        %v3420 = vadd.f32 %v3419, 0.05243302
        %v3421 = vmul.f32 %v3414, %v3420
        %v3422 = vadd.f32 %v3421, 0.18741608
        %v3423 = vmul.f32 %v3414, %v3422
        %v3424 = vadd.f32 %v3423, 1.1283791
        %v3425 = vmul.f32 %v2968, %v3424
        %v3426 = vmul.f32 %v3414, 3.8918573e-05
        %v3427 = vadd.f32 %v3426, 0.001143296
        %v3428 = vmul.f32 %v3414, %v3427
        %v3429 = vadd.f32 %v3428, 0.014752088
        %v3430 = vmul.f32 %v3414, %v3429
        %v3431 = vadd.f32 %v3430, 0.112945676
        %v3432 = vmul.f32 %v3414, %v3431
        %v3433 = vadd.f32 %v3432, 0.4994258
        %v3434 = vmul.f32 %v3414, %v3433
        %v3435 = vadd.f32 %v3434, 1.0
        %v3436 = vrcp.pop %v3435
        %v3437 = vmul.f32 %v3435, %v3436
        %v3438 = vsub.f32 1.0, %v3437
        %v3439 = vmul.f32 %v3436, %v3438
        %v3440 = vadd.f32 %v3436, %v3439
        %vm3441 = vweird.f32 %v3435
        %vm3442 = vweird.f32 %v3436
        %vm3443 = vmor %vm3441, %vm3442
        %v3444 = vsel %vm3443, %v3436, %v3440
        %v3445 = vand.u32 2147483647, %v3435
        %vm3446 = vcmp.eq.f32.partialorder %v3445, 8.507059e+37
        %v3447 = vand.u32 %v3435, 2147483648
        %v3448 = vor.u32 1.1754944e-38, %v3447
        %v3449 = vsel %vm3446, %v3448, %v3444
        %v3450 = vmul.f32 %v3425, %v3449
        %v3451 = vmin.f32 %v3450, 1.0
        %v3452 = vmax.f32 %v3451, -1.0
        %v3453 = vmul.f32 %v2969, %v2969
        %v3454 = vmin.f32 16.0, %v3453
        %v3455 = vmul.f32 %v3454, 2.1237322e-06
        %v3456 = vadd.f32 %v3455, 0.00028619796
        %v3457 = vmul.f32 %v3454, %v3456
        %v3458 = vadd.f32 %v3457, 0.0036580483
        %v3459 = vmul.f32 %v3454, %v3458
        %v3460 = vadd.f32 %v3459, 0.05243302
        %v3461 = vmul.f32 %v3454, %v3460
        %v3462 = vadd.f32 %v3461, 0.18741608
        %v3463 = vmul.f32 %v3454, %v3462
        %v3464 = vadd.f32 %v3463, 1.1283791
        %v3465 = vmul.f32 %v2969, %v3464
        %v3466 = vmul.f32 %v3454, 3.8918573e-05
        %v3467 = vadd.f32 %v3466, 0.001143296
        %v3468 = vmul.f32 %v3454, %v3467
        %v3469 = vadd.f32 %v3468, 0.014752088
        %v3470 = vmul.f32 %v3454, %v3469
        %v3471 = vadd.f32 %v3470, 0.112945676
        %v3472 = vmul.f32 %v3454, %v3471
        %v3473 = vadd.f32 %v3472, 0.4994258
        %v3474 = vmul.f32 %v3454, %v3473
        %v3475 = vadd.f32 %v3474, 1.0
        %v3476 = vrcp.pop %v3475
        %v3477 = vmul.f32 %v3475, %v3476
        %v3478 = vsub.f32 1.0, %v3477
        %v3479 = vmul.f32 %v3476, %v3478
        %v3480 = vadd.f32 %v3476, %v3479
        %vm3481 = vweird.f32 %v3475
        %vm3482 = vweird.f32 %v3476
        %vm3483 = vmor %vm3481, %vm3482
        %v3484 = vsel %vm3483, %v3476, %v3480
        %v3485 = vand.u32 2147483647, %v3475
        %vm3486 = vcmp.eq.f32.partialorder %v3485, 8.507059e+37
        %v3487 = vand.u32 %v3475, 2147483648
        %v3488 = vor.u32 1.1754944e-38, %v3487
        %v3489 = vsel %vm3486, %v3488, %v3484
        %v3490 = vmul.f32 %v3465, %v3489
        %v3491 = vmin.f32 %v3490, 1.0
        %v3492 = vmax.f32 %v3491, -1.0
        %v3493 = vmul.f32 %v2970, %v2970
        %v3494 = vmin.f32 16.0, %v3493
        %v3495 = vmul.f32 %v3494, 2.1237322e-06
        %v3496 = vadd.f32 %v3495, 0.00028619796
        %v3497 = vmul.f32 %v3494, %v3496
        %v3498 = vadd.f32 %v3497, 0.0036580483
        %v3499 = vmul.f32 %v3494, %v3498
        %v3500 = vadd.f32 %v3499, 0.05243302
        %v3501 = vmul.f32 %v3494, %v3500
        %v3502 = vadd.f32 %v3501, 0.18741608
        %v3503 = vmul.f32 %v3494, %v3502
        %v3504 = vadd.f32 %v3503, 1.1283791
        %v3505 = vmul.f32 %v2970, %v3504
        %v3506 = vmul.f32 %v3494, 3.8918573e-05
        %v3507 = vadd.f32 %v3506, 0.001143296
        %v3508 = vmul.f32 %v3494, %v3507
        %v3509 = vadd.f32 %v3508, 0.014752088
        %v3510 = vmul.f32 %v3494, %v3509
        %v3511 = vadd.f32 %v3510, 0.112945676
        %v3512 = vmul.f32 %v3494, %v3511
        %v3513 = vadd.f32 %v3512, 0.4994258
        %v3514 = vmul.f32 %v3494, %v3513
        %v3515 = vadd.f32 %v3514, 1.0
        %v3516 = vrcp.pop %v3515
        %v3517 = vmul.f32 %v3515, %v3516
        %v3518 = vsub.f32 1.0, %v3517
        %v3519 = vmul.f32 %v3516, %v3518
        %v3520 = vadd.f32 %v3516, %v3519
        %vm3521 = vweird.f32 %v3515
        %vm3522 = vweird.f32 %v3516
        %vm3523 = vmor %vm3521, %vm3522
        %v3524 = vsel %vm3523, %v3516, %v3520
        %v3525 = vand.u32 2147483647, %v3515
        %vm3526 = vcmp.eq.f32.partialorder %v3525, 8.507059e+37
        %v3527 = vand.u32 %v3515, 2147483648
        %v3528 = vor.u32 1.1754944e-38, %v3527
        %v3529 = vsel %vm3526, %v3528, %v3524
        %v3530 = vmul.f32 %v3505, %v3529
        %v3531 = vmin.f32 %v3530, 1.0
        %v3532 = vmax.f32 %v3531, -1.0
        %v3533 = vmul.f32 %v2971, %v2971
        %v3534 = vmin.f32 16.0, %v3533
        %v3535 = vmul.f32 %v3534, 2.1237322e-06
        %v3536 = vadd.f32 %v3535, 0.00028619796
        %v3537 = vmul.f32 %v3534, %v3536
        %v3538 = vadd.f32 %v3537, 0.0036580483
        %v3539 = vmul.f32 %v3534, %v3538
        %v3540 = vadd.f32 %v3539, 0.05243302
        %v3541 = vmul.f32 %v3534, %v3540
        %v3542 = vadd.f32 %v3541, 0.18741608
        %v3543 = vmul.f32 %v3534, %v3542
        %v3544 = vadd.f32 %v3543, 1.1283791
        %v3545 = vmul.f32 %v2971, %v3544
        %v3546 = vmul.f32 %v3534, 3.8918573e-05
        %v3547 = vadd.f32 %v3546, 0.001143296
        %v3548 = vmul.f32 %v3534, %v3547
        %v3549 = vadd.f32 %v3548, 0.014752088
        %v3550 = vmul.f32 %v3534, %v3549
        %v3551 = vadd.f32 %v3550, 0.112945676
        %v3552 = vmul.f32 %v3534, %v3551
        %v3553 = vadd.f32 %v3552, 0.4994258
        %v3554 = vmul.f32 %v3534, %v3553
        %v3555 = vadd.f32 %v3554, 1.0
        %v3556 = vrcp.pop %v3555
        %v3557 = vmul.f32 %v3555, %v3556
        %v3558 = vsub.f32 1.0, %v3557
        %v3559 = vmul.f32 %v3556, %v3558
        %v3560 = vadd.f32 %v3556, %v3559
        %vm3561 = vweird.f32 %v3555
        %vm3562 = vweird.f32 %v3556
        %vm3563 = vmor %vm3561, %vm3562
        %v3564 = vsel %vm3563, %v3556, %v3560
        %v3565 = vand.u32 2147483647, %v3555
        %vm3566 = vcmp.eq.f32.partialorder %v3565, 8.507059e+37
        %v3567 = vand.u32 %v3555, 2147483648
        %v3568 = vor.u32 1.1754944e-38, %v3567
        %v3569 = vsel %vm3566, %v3568, %v3564
        %v3570 = vmul.f32 %v3545, %v3569
        %v3571 = vmin.f32 %v3570, 1.0
        %v3572 = vmax.f32 %v3571, -1.0
        %v3573 = vmul.f32 %v2972, %v2972
        %v3574 = vmin.f32 16.0, %v3573
        %v3575 = vmul.f32 %v3574, 2.1237322e-06
        %v3576 = vadd.f32 %v3575, 0.00028619796
        %v3577 = vmul.f32 %v3574, %v3576
        %v3578 = vadd.f32 %v3577, 0.0036580483
        %v3579 = vmul.f32 %v3574, %v3578
        %v3580 = vadd.f32 %v3579, 0.05243302
        %v3581 = vmul.f32 %v3574, %v3580
        %v3582 = vadd.f32 %v3581, 0.18741608
        %v3583 = vmul.f32 %v3574, %v3582
        %v3584 = vadd.f32 %v3583, 1.1283791
        %v3585 = vmul.f32 %v2972, %v3584
        %v3586 = vmul.f32 %v3574, 3.8918573e-05
        %v3587 = vadd.f32 %v3586, 0.001143296
        %v3588 = vmul.f32 %v3574, %v3587
        %v3589 = vadd.f32 %v3588, 0.014752088
        %v3590 = vmul.f32 %v3574, %v3589
        %v3591 = vadd.f32 %v3590, 0.112945676
        %v3592 = vmul.f32 %v3574, %v3591
        %v3593 = vadd.f32 %v3592, 0.4994258
        %v3594 = vmul.f32 %v3574, %v3593
        %v3595 = vadd.f32 %v3594, 1.0
        %v3596 = vrcp.pop %v3595
        %v3597 = vmul.f32 %v3595, %v3596
        %v3598 = vsub.f32 1.0, %v3597
        %v3599 = vmul.f32 %v3596, %v3598
        %v3600 = vadd.f32 %v3596, %v3599
        %vm3601 = vweird.f32 %v3595
        %vm3602 = vweird.f32 %v3596
        %vm3603 = vmor %vm3601, %vm3602
        %v3604 = vsel %vm3603, %v3596, %v3600
        %v3605 = vand.u32 2147483647, %v3595
        %vm3606 = vcmp.eq.f32.partialorder %v3605, 8.507059e+37
        %v3607 = vand.u32 %v3595, 2147483648
        %v3608 = vor.u32 1.1754944e-38, %v3607
        %v3609 = vsel %vm3606, %v3608, %v3604
        %v3610 = vmul.f32 %v3585, %v3609
        %v3611 = vmin.f32 %v3610, 1.0
        %v3612 = vmax.f32 %v3611, -1.0
        %v3613 = vadd.f32 %v3012, 1.0
        %v3614 = vadd.f32 %v3052, 1.0
        %v3615 = vadd.f32 %v3092, 1.0
        %v3616 = vadd.f32 %v3132, 1.0
        %v3617 = vadd.f32 %v3172, 1.0
        %v3618 = vadd.f32 %v3212, 1.0
        %v3619 = vadd.f32 %v3252, 1.0
        %v3620 = vadd.f32 %v3292, 1.0
        %v3621 = vadd.f32 %v3332, 1.0
        %v3622 = vadd.f32 %v3372, 1.0
        %v3623 = vadd.f32 %v3412, 1.0
        %v3624 = vadd.f32 %v3452, 1.0
        %v3625 = vadd.f32 %v3492, 1.0
        %v3626 = vadd.f32 %v3532, 1.0
        %v3627 = vadd.f32 %v3572, 1.0
        %v3628 = vadd.f32 %v3612, 1.0
        %v3629 = vmul.f32 %v2941, %v3613
        %v3630 = vmul.f32 %v2942, %v3614
        %v3631 = vmul.f32 %v2943, %v3615
        %v3632 = vmul.f32 %v2944, %v3616
        %v3633 = vmul.f32 %v2945, %v3617
        %v3634 = vmul.f32 %v2946, %v3618
        %v3635 = vmul.f32 %v2947, %v3619
        %v3636 = vmul.f32 %v2948, %v3620
        %v3637 = vmul.f32 %v2949, %v3621
        %v3638 = vmul.f32 %v2950, %v3622
        %v3639 = vmul.f32 %v2951, %v3623
        %v3640 = vmul.f32 %v2952, %v3624
        %v3641 = vmul.f32 %v2953, %v3625
        %v3642 = vmul.f32 %v2954, %v3626
        %v3643 = vmul.f32 %v2955, %v3627
        %v3644 = vmul.f32 %v2956, %v3628
        %s3645 = scalar_lea.vmem %s4, 64
        %v3646 = vld [vmem:[%s3645] sm:$0xff]
        %v3647 = vld [vmem:[%s3645 + $0x8] sm:$0xff]
        %v3648 = vld [vmem:[%s3645 + $0x10] sm:$0xff]
        %v3649 = vld [vmem:[%s3645 + $0x18] sm:$0xff]
        %v3650 = vld [vmem:[%s3645 + $0x20] sm:$0xff]
        %v3651 = vld [vmem:[%s3645 + $0x28] sm:$0xff]
        %v3652 = vld [vmem:[%s3645 + $0x30] sm:$0xff]
        %v3653 = vld [vmem:[%s3645 + $0x38] sm:$0xff]
        %v3654 = vperm.slane %v2298, 0
        %v3656 = vsel %vm1778, %v3629, 0
        %v3659 = vsel %vm1778, %v3630, 0
        %v3662 = vsel %vm1778, %v3631, 0
        %v3665 = vsel %vm1778, %v3632, 0
        %v3668 = vsel %vm1778, %v3633, 0
        %v3671 = vsel %vm1778, %v3634, 0
        %v3674 = vsel %vm1778, %v3635, 0
        %v3677 = vsel %vm1778, %v3636, 0
        %v3680 = vsel %vm1778, %v3637, 0
        %v3683 = vsel %vm1778, %v3638, 0
        %v3686 = vsel %vm1778, %v3639, 0
        %v3689 = vsel %vm1778, %v3640, 0
        %v3692 = vsel %vm1778, %v3641, 0
        %v3695 = vsel %vm1778, %v3642, 0
        %v3698 = vsel %vm1778, %v3643, 0
        %v3701 = vsel %vm1778, %v3644, 0
        %3703 = vmatpush.msra.mxu0 0.0
        %3704 = vmatpush.msra.mxu0 0.0
        %3705 = vmatpush.msra.mxu0 0.0
        %3706 = vmatpush.msra.mxu0 0.0
        %3707 = vmatpush.msra.mxu0 0.0
        %3708 = vmatpush.msra.mxu0 0.0
        %3709 = vmatpush.msra.mxu0 0.0
        %3710 = vmatpush.msra.mxu0 0.0
        %3711 = vmatpush.msra.mxu0 %v3653
        %3712 = vmatpush.msra.mxu0 %v3652
        %3713 = vmatpush.msra.mxu0 %v3651
        %3714 = vmatpush.msra.mxu0 %v3650
        %3715 = vmatpush.msra.mxu0 %v3649
        %3716 = vmatpush.msra.mxu0 %v3648
        %3717 = vmatpush.msra.mxu0 %v3647
        %3718 = vmatpush.msra.mxu0 %v3646
        %3719 = vmatmul.f32.gmra.mxu0 %v3656
        %v3720 = vpop.f32.mrf.mxu0
        %v3721 = vadd.f32 %v3654, %v3720
        %3722 = vmatmul.f32.gmra.mxu0 %v3659
        %v3723 = vpop.f32.mrf.mxu0
        %v3724 = vadd.f32 %v3654, %v3723
        %3725 = vmatmul.f32.gmra.mxu0 %v3662
        %v3726 = vpop.f32.mrf.mxu0
        %v3727 = vadd.f32 %v3654, %v3726
        %3728 = vmatmul.f32.gmra.mxu0 %v3665
        %v3729 = vpop.f32.mrf.mxu0
        %v3730 = vadd.f32 %v3654, %v3729
        %3731 = vmatmul.f32.gmra.mxu0 %v3668
        %v3732 = vpop.f32.mrf.mxu0
        %v3733 = vadd.f32 %v3654, %v3732
        %3734 = vmatmul.f32.gmra.mxu0 %v3671
        %v3735 = vpop.f32.mrf.mxu0
        %v3736 = vadd.f32 %v3654, %v3735
        %3737 = vmatmul.f32.gmra.mxu0 %v3674
        %v3738 = vpop.f32.mrf.mxu0
        %v3739 = vadd.f32 %v3654, %v3738
        %3740 = vmatmul.f32.gmra.mxu0 %v3677
        %v3741 = vpop.f32.mrf.mxu0
        %v3742 = vadd.f32 %v3654, %v3741
        %3743 = vmatmul.f32.gmra.mxu0 %v3680
        %v3744 = vpop.f32.mrf.mxu0
        %v3745 = vadd.f32 %v3654, %v3744
        %3746 = vmatmul.f32.gmra.mxu0 %v3683
        %v3747 = vpop.f32.mrf.mxu0
        %v3748 = vadd.f32 %v3654, %v3747
        %3749 = vmatmul.f32.gmra.mxu0 %v3686
        %v3750 = vpop.f32.mrf.mxu0
        %v3751 = vadd.f32 %v3654, %v3750
        %3752 = vmatmul.f32.gmra.mxu0 %v3689
        %v3753 = vpop.f32.mrf.mxu0
        %v3754 = vadd.f32 %v3654, %v3753
        %3755 = vmatmul.f32.gmra.mxu0 %v3692
        %v3756 = vpop.f32.mrf.mxu0
        %v3757 = vadd.f32 %v3654, %v3756
        %3758 = vmatmul.f32.gmra.mxu0 %v3695
        %v3759 = vpop.f32.mrf.mxu0
        %v3760 = vadd.f32 %v3654, %v3759
        %3761 = vmatmul.f32.gmra.mxu0 %v3698
        %v3762 = vpop.f32.mrf.mxu0
        %v3763 = vadd.f32 %v3654, %v3762
        %3764 = vmatmul.f32.gmra.mxu0 %v3701
        %v3765 = vpop.f32.mrf.mxu0
        %v3766 = vadd.f32 %v3654, %v3765
        %3767 = vdwg.mxu0
        %v3768 = vadd.f32 %v2806, %v3721
        %v3769 = vadd.f32 %v2807, %v3724
        %v3770 = vadd.f32 %v2808, %v3727
        %v3771 = vadd.f32 %v2809, %v3730
        %v3772 = vadd.f32 %v2810, %v3733
        %v3773 = vadd.f32 %v2811, %v3736
        %v3774 = vadd.f32 %v2812, %v3739
        %v3775 = vadd.f32 %v2813, %v3742
        %v3776 = vadd.f32 %v2814, %v3745
        %v3777 = vadd.f32 %v2815, %v3748
        %v3778 = vadd.f32 %v2816, %v3751
        %v3779 = vadd.f32 %v2817, %v3754
        %v3780 = vadd.f32 %v2818, %v3757
        %v3781 = vadd.f32 %v2819, %v3760
        %v3782 = vadd.f32 %v2820, %v3763
        %v3783 = vadd.f32 %v2821, %v3766
        %v3784 = vsel %vm424, %v3768, 0.0
        %3785 = vadd.xlane.f32.xlu0 %v3784
        %v3786 = vpop.xlane.xlu0 %3785
        %v3787 = vsel %vm424, %v3769, 0.0
        %3788 = vadd.xlane.f32.xlu0 %v3787
        %v3789 = vpop.xlane.xlu0 %3788
        %v3790 = vsel %vm424, %v3770, 0.0
        %3791 = vadd.xlane.f32.xlu0 %v3790
        %v3792 = vpop.xlane.xlu0 %3791
        %v3793 = vsel %vm424, %v3771, 0.0
        %3794 = vadd.xlane.f32.xlu0 %v3793
        %v3795 = vpop.xlane.xlu0 %3794
        %v3796 = vsel %vm424, %v3772, 0.0
        %3797 = vadd.xlane.f32.xlu0 %v3796
        %v3798 = vpop.xlane.xlu0 %3797
        %v3799 = vsel %vm424, %v3773, 0.0
        %3800 = vadd.xlane.f32.xlu0 %v3799
        %v3801 = vpop.xlane.xlu0 %3800
        %v3802 = vsel %vm424, %v3774, 0.0
        %3803 = vadd.xlane.f32.xlu0 %v3802
        %v3804 = vpop.xlane.xlu0 %3803
        %v3805 = vsel %vm424, %v3775, 0.0
        %3806 = vadd.xlane.f32.xlu0 %v3805
        %v3807 = vpop.xlane.xlu0 %3806
        %v3808 = vsel %vm424, %v3776, 0.0
        %3809 = vadd.xlane.f32.xlu0 %v3808
        %v3810 = vpop.xlane.xlu0 %3809
        %v3811 = vsel %vm424, %v3777, 0.0
        %3812 = vadd.xlane.f32.xlu0 %v3811
        %v3813 = vpop.xlane.xlu0 %3812
        %v3814 = vsel %vm424, %v3778, 0.0
        %3815 = vadd.xlane.f32.xlu0 %v3814
        %v3816 = vpop.xlane.xlu0 %3815
        %v3817 = vsel %vm424, %v3779, 0.0
        %3818 = vadd.xlane.f32.xlu0 %v3817
        %v3819 = vpop.xlane.xlu0 %3818
        %v3820 = vsel %vm424, %v3780, 0.0
        %3821 = vadd.xlane.f32.xlu0 %v3820
        %v3822 = vpop.xlane.xlu0 %3821
        %v3823 = vsel %vm424, %v3781, 0.0
        %3824 = vadd.xlane.f32.xlu0 %v3823
        %v3825 = vpop.xlane.xlu0 %3824
        %v3826 = vsel %vm424, %v3782, 0.0
        %3827 = vadd.xlane.f32.xlu0 %v3826
        %v3828 = vpop.xlane.xlu0 %3827
        %v3829 = vsel %vm424, %v3783, 0.0
        %3830 = vadd.xlane.f32.xlu0 %v3829
        %v3831 = vpop.xlane.xlu0 %3830
        %v3832 = vmul.f32 %v3786, %v608
        %v3833 = vmul.f32 %v3789, %v608
        %v3834 = vmul.f32 %v3792, %v608
        %v3835 = vmul.f32 %v3795, %v608
        %v3836 = vmul.f32 %v3798, %v608
        %v3837 = vmul.f32 %v3801, %v608
        %v3838 = vmul.f32 %v3804, %v608
        %v3839 = vmul.f32 %v3807, %v608
        %v3840 = vmul.f32 %v3810, %v608
        %v3841 = vmul.f32 %v3813, %v608
        %v3842 = vmul.f32 %v3816, %v608
        %v3843 = vmul.f32 %v3819, %v608
        %v3844 = vmul.f32 %v3822, %v608
        %v3845 = vmul.f32 %v3825, %v608
        %v3846 = vmul.f32 %v3828, %v608
        %v3847 = vmul.f32 %v3831, %v608
        %v3848 = vsub.f32 %v3768, %v3832
        %v3849 = vsub.f32 %v3769, %v3833
        %v3850 = vsub.f32 %v3770, %v3834
        %v3851 = vsub.f32 %v3771, %v3835
        %v3852 = vsub.f32 %v3772, %v3836
        %v3853 = vsub.f32 %v3773, %v3837
        %v3854 = vsub.f32 %v3774, %v3838
        %v3855 = vsub.f32 %v3775, %v3839
        %v3856 = vsub.f32 %v3776, %v3840
        %v3857 = vsub.f32 %v3777, %v3841
        %v3858 = vsub.f32 %v3778, %v3842
        %v3859 = vsub.f32 %v3779, %v3843
        %v3860 = vsub.f32 %v3780, %v3844
        %v3861 = vsub.f32 %v3781, %v3845
        %v3862 = vsub.f32 %v3782, %v3846
        %v3863 = vsub.f32 %v3783, %v3847
        %v3864 = vmul.f32 %v3848, %v3848
        %v3865 = vmul.f32 %v3849, %v3849
        %v3866 = vmul.f32 %v3850, %v3850
        %v3867 = vmul.f32 %v3851, %v3851
        %v3868 = vmul.f32 %v3852, %v3852
        %v3869 = vmul.f32 %v3853, %v3853
        %v3870 = vmul.f32 %v3854, %v3854
        %v3871 = vmul.f32 %v3855, %v3855
        %v3872 = vmul.f32 %v3856, %v3856
        %v3873 = vmul.f32 %v3857, %v3857
        %v3874 = vmul.f32 %v3858, %v3858
        %v3875 = vmul.f32 %v3859, %v3859
        %v3876 = vmul.f32 %v3860, %v3860
        %v3877 = vmul.f32 %v3861, %v3861
        %v3878 = vmul.f32 %v3862, %v3862
        %v3879 = vmul.f32 %v3863, %v3863
        %v3880 = vsel %vm424, %v3864, 0.0
        %3881 = vadd.xlane.f32.xlu0 %v3880
        %v3882 = vpop.xlane.xlu0 %3881
        %v3883 = vsel %vm424, %v3865, 0.0
        %3884 = vadd.xlane.f32.xlu0 %v3883
        %v3885 = vpop.xlane.xlu0 %3884
        %v3886 = vsel %vm424, %v3866, 0.0
        %3887 = vadd.xlane.f32.xlu0 %v3886
        %v3888 = vpop.xlane.xlu0 %3887
        %v3889 = vsel %vm424, %v3867, 0.0
        %3890 = vadd.xlane.f32.xlu0 %v3889
        %v3891 = vpop.xlane.xlu0 %3890
        %v3892 = vsel %vm424, %v3868, 0.0
        %3893 = vadd.xlane.f32.xlu0 %v3892
        %v3894 = vpop.xlane.xlu0 %3893
        %v3895 = vsel %vm424, %v3869, 0.0
        %3896 = vadd.xlane.f32.xlu0 %v3895
        %v3897 = vpop.xlane.xlu0 %3896
        %v3898 = vsel %vm424, %v3870, 0.0
        %3899 = vadd.xlane.f32.xlu0 %v3898
        %v3900 = vpop.xlane.xlu0 %3899
        %v3901 = vsel %vm424, %v3871, 0.0
        %3902 = vadd.xlane.f32.xlu0 %v3901
        %v3903 = vpop.xlane.xlu0 %3902
        %v3904 = vsel %vm424, %v3872, 0.0
        %3905 = vadd.xlane.f32.xlu0 %v3904
        %v3906 = vpop.xlane.xlu0 %3905
        %v3907 = vsel %vm424, %v3873, 0.0
        %3908 = vadd.xlane.f32.xlu0 %v3907
        %v3909 = vpop.xlane.xlu0 %3908
        %v3910 = vsel %vm424, %v3874, 0.0
        %3911 = vadd.xlane.f32.xlu0 %v3910
        %v3912 = vpop.xlane.xlu0 %3911
        %v3913 = vsel %vm424, %v3875, 0.0
        %3914 = vadd.xlane.f32.xlu0 %v3913
        %v3915 = vpop.xlane.xlu0 %3914
        %v3916 = vsel %vm424, %v3876, 0.0
        %3917 = vadd.xlane.f32.xlu0 %v3916
        %v3918 = vpop.xlane.xlu0 %3917
        %v3919 = vsel %vm424, %v3877, 0.0
        %3920 = vadd.xlane.f32.xlu0 %v3919
        %v3921 = vpop.xlane.xlu0 %3920
        %v3922 = vsel %vm424, %v3878, 0.0
        %3923 = vadd.xlane.f32.xlu0 %v3922
        %v3924 = vpop.xlane.xlu0 %3923
        %v3925 = vsel %vm424, %v3879, 0.0
        %3926 = vadd.xlane.f32.xlu0 %v3925
        %v3927 = vpop.xlane.xlu0 %3926
        %v3928 = vmul.f32 %v3882, %v608
        %v3929 = vmul.f32 %v3885, %v608
        %v3930 = vmul.f32 %v3888, %v608
        %v3931 = vmul.f32 %v3891, %v608
        %v3932 = vmul.f32 %v3894, %v608
        %v3933 = vmul.f32 %v3897, %v608
        %v3934 = vmul.f32 %v3900, %v608
        %v3935 = vmul.f32 %v3903, %v608
        %v3936 = vmul.f32 %v3906, %v608
        %v3937 = vmul.f32 %v3909, %v608
        %v3938 = vmul.f32 %v3912, %v608
        %v3939 = vmul.f32 %v3915, %v608
        %v3940 = vmul.f32 %v3918, %v608
        %v3941 = vmul.f32 %v3921, %v608
        %v3942 = vmul.f32 %v3924, %v608
        %v3943 = vmul.f32 %v3927, %v608
        %v3944 = vadd.f32 %v3928, 1e-05
        %v3945 = vadd.f32 %v3929, 1e-05
        %v3946 = vadd.f32 %v3930, 1e-05
        %v3947 = vadd.f32 %v3931, 1e-05
        %v3948 = vadd.f32 %v3932, 1e-05
        %v3949 = vadd.f32 %v3933, 1e-05
        %v3950 = vadd.f32 %v3934, 1e-05
        %v3951 = vadd.f32 %v3935, 1e-05
        %v3952 = vadd.f32 %v3936, 1e-05
        %v3953 = vadd.f32 %v3937, 1e-05
        %v3954 = vadd.f32 %v3938, 1e-05
        %v3955 = vadd.f32 %v3939, 1e-05
        %v3956 = vadd.f32 %v3940, 1e-05
        %v3957 = vadd.f32 %v3941, 1e-05
        %v3958 = vadd.f32 %v3942, 1e-05
        %v3959 = vadd.f32 %v3943, 1e-05
        %v3960 = vrsqrt.pop %v3944
        %v3961 = vmul.f32 %v3960, %v3944
        %v3962 = vmul.f32 %v3961, %v3960
        %v3963 = vmul.f32 0.5, %v3962
        %v3964 = vsub.f32 1.5, %v3963
        %v3965 = vmul.f32 %v3960, %v3964
        %vm3966 = vweird.f32 %v3944
        %vm3967 = vweird.f32 %v3960
        %vm3968 = vmor %vm3966, %vm3967
        %v3969 = vsel %vm3968, %v3960, %v3965
        %v3970 = vrsqrt.pop %v3945
        %v3971 = vmul.f32 %v3970, %v3945
        %v3972 = vmul.f32 %v3971, %v3970
        %v3973 = vmul.f32 0.5, %v3972
        %v3974 = vsub.f32 1.5, %v3973
        %v3975 = vmul.f32 %v3970, %v3974
        %vm3976 = vweird.f32 %v3945
        %vm3977 = vweird.f32 %v3970
        %vm3978 = vmor %vm3976, %vm3977
        %v3979 = vsel %vm3978, %v3970, %v3975
        %v3980 = vrsqrt.pop %v3946
        %v3981 = vmul.f32 %v3980, %v3946
        %v3982 = vmul.f32 %v3981, %v3980
        %v3983 = vmul.f32 0.5, %v3982
        %v3984 = vsub.f32 1.5, %v3983
        %v3985 = vmul.f32 %v3980, %v3984
        %vm3986 = vweird.f32 %v3946
        %vm3987 = vweird.f32 %v3980
        %vm3988 = vmor %vm3986, %vm3987
        %v3989 = vsel %vm3988, %v3980, %v3985
        %v3990 = vrsqrt.pop %v3947
        %v3991 = vmul.f32 %v3990, %v3947
        %v3992 = vmul.f32 %v3991, %v3990
        %v3993 = vmul.f32 0.5, %v3992
        %v3994 = vsub.f32 1.5, %v3993
        %v3995 = vmul.f32 %v3990, %v3994
        %vm3996 = vweird.f32 %v3947
        %vm3997 = vweird.f32 %v3990
        %vm3998 = vmor %vm3996, %vm3997
        %v3999 = vsel %vm3998, %v3990, %v3995
        %v4000 = vrsqrt.pop %v3948
        %v4001 = vmul.f32 %v4000, %v3948
        %v4002 = vmul.f32 %v4001, %v4000
        %v4003 = vmul.f32 0.5, %v4002
        %v4004 = vsub.f32 1.5, %v4003
        %v4005 = vmul.f32 %v4000, %v4004
        %vm4006 = vweird.f32 %v3948
        %vm4007 = vweird.f32 %v4000
        %vm4008 = vmor %vm4006, %vm4007
        %v4009 = vsel %vm4008, %v4000, %v4005
        %v4010 = vrsqrt.pop %v3949
        %v4011 = vmul.f32 %v4010, %v3949
        %v4012 = vmul.f32 %v4011, %v4010
        %v4013 = vmul.f32 0.5, %v4012
        %v4014 = vsub.f32 1.5, %v4013
        %v4015 = vmul.f32 %v4010, %v4014
        %vm4016 = vweird.f32 %v3949
        %vm4017 = vweird.f32 %v4010
        %vm4018 = vmor %vm4016, %vm4017
        %v4019 = vsel %vm4018, %v4010, %v4015
        %v4020 = vrsqrt.pop %v3950
        %v4021 = vmul.f32 %v4020, %v3950
        %v4022 = vmul.f32 %v4021, %v4020
        %v4023 = vmul.f32 0.5, %v4022
        %v4024 = vsub.f32 1.5, %v4023
        %v4025 = vmul.f32 %v4020, %v4024
        %vm4026 = vweird.f32 %v3950
        %vm4027 = vweird.f32 %v4020
        %vm4028 = vmor %vm4026, %vm4027
        %v4029 = vsel %vm4028, %v4020, %v4025
        %v4030 = vrsqrt.pop %v3951
        %v4031 = vmul.f32 %v4030, %v3951
        %v4032 = vmul.f32 %v4031, %v4030
        %v4033 = vmul.f32 0.5, %v4032
        %v4034 = vsub.f32 1.5, %v4033
        %v4035 = vmul.f32 %v4030, %v4034
        %vm4036 = vweird.f32 %v3951
        %vm4037 = vweird.f32 %v4030
        %vm4038 = vmor %vm4036, %vm4037
        %v4039 = vsel %vm4038, %v4030, %v4035
        %v4040 = vrsqrt.pop %v3952
        %v4041 = vmul.f32 %v4040, %v3952
        %v4042 = vmul.f32 %v4041, %v4040
        %v4043 = vmul.f32 0.5, %v4042
        %v4044 = vsub.f32 1.5, %v4043
        %v4045 = vmul.f32 %v4040, %v4044
        %vm4046 = vweird.f32 %v3952
        %vm4047 = vweird.f32 %v4040
        %vm4048 = vmor %vm4046, %vm4047
        %v4049 = vsel %vm4048, %v4040, %v4045
        %v4050 = vrsqrt.pop %v3953
        %v4051 = vmul.f32 %v4050, %v3953
        %v4052 = vmul.f32 %v4051, %v4050
        %v4053 = vmul.f32 0.5, %v4052
        %v4054 = vsub.f32 1.5, %v4053
        %v4055 = vmul.f32 %v4050, %v4054
        %vm4056 = vweird.f32 %v3953
        %vm4057 = vweird.f32 %v4050
        %vm4058 = vmor %vm4056, %vm4057
        %v4059 = vsel %vm4058, %v4050, %v4055
        %v4060 = vrsqrt.pop %v3954
        %v4061 = vmul.f32 %v4060, %v3954
        %v4062 = vmul.f32 %v4061, %v4060
        %v4063 = vmul.f32 0.5, %v4062
        %v4064 = vsub.f32 1.5, %v4063
        %v4065 = vmul.f32 %v4060, %v4064
        %vm4066 = vweird.f32 %v3954
        %vm4067 = vweird.f32 %v4060
        %vm4068 = vmor %vm4066, %vm4067
        %v4069 = vsel %vm4068, %v4060, %v4065
        %v4070 = vrsqrt.pop %v3955
        %v4071 = vmul.f32 %v4070, %v3955
        %v4072 = vmul.f32 %v4071, %v4070
        %v4073 = vmul.f32 0.5, %v4072
        %v4074 = vsub.f32 1.5, %v4073
        %v4075 = vmul.f32 %v4070, %v4074
        %vm4076 = vweird.f32 %v3955
        %vm4077 = vweird.f32 %v4070
        %vm4078 = vmor %vm4076, %vm4077
        %v4079 = vsel %vm4078, %v4070, %v4075
        %v4080 = vrsqrt.pop %v3956
        %v4081 = vmul.f32 %v4080, %v3956
        %v4082 = vmul.f32 %v4081, %v4080
        %v4083 = vmul.f32 0.5, %v4082
        %v4084 = vsub.f32 1.5, %v4083
        %v4085 = vmul.f32 %v4080, %v4084
        %vm4086 = vweird.f32 %v3956
        %vm4087 = vweird.f32 %v4080
        %vm4088 = vmor %vm4086, %vm4087
        %v4089 = vsel %vm4088, %v4080, %v4085
        %v4090 = vrsqrt.pop %v3957
        %v4091 = vmul.f32 %v4090, %v3957
        %v4092 = vmul.f32 %v4091, %v4090
        %v4093 = vmul.f32 0.5, %v4092
        %v4094 = vsub.f32 1.5, %v4093
        %v4095 = vmul.f32 %v4090, %v4094
        %vm4096 = vweird.f32 %v3957
        %vm4097 = vweird.f32 %v4090
        %vm4098 = vmor %vm4096, %vm4097
        %v4099 = vsel %vm4098, %v4090, %v4095
        %v4100 = vrsqrt.pop %v3958
        %v4101 = vmul.f32 %v4100, %v3958
        %v4102 = vmul.f32 %v4101, %v4100
        %v4103 = vmul.f32 0.5, %v4102
        %v4104 = vsub.f32 1.5, %v4103
        %v4105 = vmul.f32 %v4100, %v4104
        %vm4106 = vweird.f32 %v3958
        %vm4107 = vweird.f32 %v4100
        %vm4108 = vmor %vm4106, %vm4107
        %v4109 = vsel %vm4108, %v4100, %v4105
        %v4110 = vrsqrt.pop %v3959
        %v4111 = vmul.f32 %v4110, %v3959
        %v4112 = vmul.f32 %v4111, %v4110
        %v4113 = vmul.f32 0.5, %v4112
        %v4114 = vsub.f32 1.5, %v4113
        %v4115 = vmul.f32 %v4110, %v4114
        %vm4116 = vweird.f32 %v3959
        %vm4117 = vweird.f32 %v4110
        %vm4118 = vmor %vm4116, %vm4117
        %v4119 = vsel %vm4118, %v4110, %v4115
        %v4120 = vmul.f32 %v3848, %v3969
        %v4121 = vmul.f32 %v3849, %v3979
        %v4122 = vmul.f32 %v3850, %v3989
        %v4123 = vmul.f32 %v3851, %v3999
        %v4124 = vmul.f32 %v3852, %v4009
        %v4125 = vmul.f32 %v3853, %v4019
        %v4126 = vmul.f32 %v3854, %v4029
        %v4127 = vmul.f32 %v3855, %v4039
        %v4128 = vmul.f32 %v3856, %v4049
        %v4129 = vmul.f32 %v3857, %v4059
        %v4130 = vmul.f32 %v3858, %v4069
        %v4131 = vmul.f32 %v3859, %v4079
        %v4132 = vmul.f32 %v3860, %v4089
        %v4133 = vmul.f32 %v3861, %v4099
        %v4134 = vmul.f32 %v3862, %v4109
        %v4135 = vmul.f32 %v3863, %v4119
        %v4136 = vperm.slane %v2299, 0
        %v4137 = vmul.f32 %v4120, %v4136
        %v4138 = vmul.f32 %v4121, %v4136
        %v4139 = vmul.f32 %v4122, %v4136
        %v4140 = vmul.f32 %v4123, %v4136
        %v4141 = vmul.f32 %v4124, %v4136
        %v4142 = vmul.f32 %v4125, %v4136
        %v4143 = vmul.f32 %v4126, %v4136
        %v4144 = vmul.f32 %v4127, %v4136
        %v4145 = vmul.f32 %v4128, %v4136
        %v4146 = vmul.f32 %v4129, %v4136
        %v4147 = vmul.f32 %v4130, %v4136
        %v4148 = vmul.f32 %v4131, %v4136
        %v4149 = vmul.f32 %v4132, %v4136
        %v4150 = vmul.f32 %v4133, %v4136
        %v4151 = vmul.f32 %v4134, %v4136
        %v4152 = vmul.f32 %v4135, %v4136
        %v4153 = vperm.slane %v2300, 0
        %v4154 = vadd.f32 %v4137, %v4153
        %v4155 = vadd.f32 %v4138, %v4153
        %v4156 = vadd.f32 %v4139, %v4153
        %v4157 = vadd.f32 %v4140, %v4153
        %v4158 = vadd.f32 %v4141, %v4153
        %v4159 = vadd.f32 %v4142, %v4153
        %v4160 = vadd.f32 %v4143, %v4153
        %v4161 = vadd.f32 %v4144, %v4153
        %v4162 = vadd.f32 %v4145, %v4153
        %v4163 = vadd.f32 %v4146, %v4153
        %v4164 = vadd.f32 %v4147, %v4153
        %v4165 = vadd.f32 %v4148, %v4153
        %v4166 = vadd.f32 %v4149, %v4153
        %v4167 = vadd.f32 %v4150, %v4153
        %v4168 = vadd.f32 %v4151, %v4153
        %v4169 = vadd.f32 %v4152, %v4153
        %v4170 = vld [vmem:[%s6 + $0xf] sm:$0x1]
        %v4171 = vld [vmem:[%s6 + $0x10] sm:$0x1]
        %v4172 = vld [vmem:[%s6 + $0x11] sm:$0x1]
        %v4173 = vld [vmem:[%s5] sm:$0xff]
        %v4174 = vld [vmem:[%s5 + $0x8] sm:$0xff]
        %v4175 = vld [vmem:[%s5 + $0x10] sm:$0xff]
        %v4176 = vld [vmem:[%s5 + $0x18] sm:$0xff]
        %v4177 = vperm.slane %v4170, 0
        %v4179 = vsel %vm424, %v4154, 0
        %v4182 = vsel %vm424, %v4155, 0
        %v4185 = vsel %vm424, %v4156, 0
        %v4188 = vsel %vm424, %v4157, 0
        %v4191 = vsel %vm424, %v4158, 0
        %v4194 = vsel %vm424, %v4159, 0
        %v4197 = vsel %vm424, %v4160, 0
        %v4200 = vsel %vm424, %v4161, 0
        %v4203 = vsel %vm424, %v4162, 0
        %v4206 = vsel %vm424, %v4163, 0
        %v4209 = vsel %vm424, %v4164, 0
        %v4212 = vsel %vm424, %v4165, 0
        %v4215 = vsel %vm424, %v4166, 0
        %v4218 = vsel %vm424, %v4167, 0
        %v4221 = vsel %vm424, %v4168, 0
        %v4224 = vsel %vm424, %v4169, 0
        %4226 = vmatpush.msra.mxu0 0.0
        %4227 = vmatpush.msra.mxu0 0.0
        %4228 = vmatpush.msra.mxu0 0.0
        %4229 = vmatpush.msra.mxu0 0.0
        %4230 = vmatpush.msra.mxu0 0.0
        %4231 = vmatpush.msra.mxu0 0.0
        %4232 = vmatpush.msra.mxu0 0.0
        %4233 = vmatpush.msra.mxu0 0.0
        %4234 = vmatpush.msra.mxu0 0.0
        %4235 = vmatpush.msra.mxu0 0.0
        %4236 = vmatpush.msra.mxu0 0.0
        %4237 = vmatpush.msra.mxu0 0.0
        %4238 = vmatpush.msra.mxu0 %v4176
        %4239 = vmatpush.msra.mxu0 %v4175
        %4240 = vmatpush.msra.mxu0 %v4174
        %4241 = vmatpush.msra.mxu0 %v4173
        %4242 = vmatmul.f32.gmra.mxu0 %v4179
        %v4243 = vpop.f32.mrf.mxu0
        %v4244 = vadd.f32 %v4177, %v4243
        %4245 = vmatmul.f32.gmra.mxu0 %v4182
        %v4246 = vpop.f32.mrf.mxu0
        %v4247 = vadd.f32 %v4177, %v4246
        %4248 = vmatmul.f32.gmra.mxu0 %v4185
        %v4249 = vpop.f32.mrf.mxu0
        %v4250 = vadd.f32 %v4177, %v4249
        %4251 = vmatmul.f32.gmra.mxu0 %v4188
        %v4252 = vpop.f32.mrf.mxu0
        %v4253 = vadd.f32 %v4177, %v4252
        %4254 = vmatmul.f32.gmra.mxu0 %v4191
        %v4255 = vpop.f32.mrf.mxu0
        %v4256 = vadd.f32 %v4177, %v4255
        %4257 = vmatmul.f32.gmra.mxu0 %v4194
        %v4258 = vpop.f32.mrf.mxu0
        %v4259 = vadd.f32 %v4177, %v4258
        %4260 = vmatmul.f32.gmra.mxu0 %v4197
        %v4261 = vpop.f32.mrf.mxu0
        %v4262 = vadd.f32 %v4177, %v4261
        %4263 = vmatmul.f32.gmra.mxu0 %v4200
        %v4264 = vpop.f32.mrf.mxu0
        %v4265 = vadd.f32 %v4177, %v4264
        %4266 = vmatmul.f32.gmra.mxu0 %v4203
        %v4267 = vpop.f32.mrf.mxu0
        %v4268 = vadd.f32 %v4177, %v4267
        %4269 = vmatmul.f32.gmra.mxu0 %v4206
        %v4270 = vpop.f32.mrf.mxu0
        %v4271 = vadd.f32 %v4177, %v4270
        %4272 = vmatmul.f32.gmra.mxu0 %v4209
        %v4273 = vpop.f32.mrf.mxu0
        %v4274 = vadd.f32 %v4177, %v4273
        %4275 = vmatmul.f32.gmra.mxu0 %v4212
        %v4276 = vpop.f32.mrf.mxu0
        %v4277 = vadd.f32 %v4177, %v4276
        %4278 = vmatmul.f32.gmra.mxu0 %v4215
        %v4279 = vpop.f32.mrf.mxu0
        %v4280 = vadd.f32 %v4177, %v4279
        %4281 = vmatmul.f32.gmra.mxu0 %v4218
        %v4282 = vpop.f32.mrf.mxu0
        %v4283 = vadd.f32 %v4177, %v4282
        %4284 = vmatmul.f32.gmra.mxu0 %v4221
        %v4285 = vpop.f32.mrf.mxu0
        %v4286 = vadd.f32 %v4177, %v4285
        %4287 = vmatmul.f32.gmra.mxu0 %v4224
        %v4288 = vpop.f32.mrf.mxu0
        %v4289 = vadd.f32 %v4177, %v4288
        %4290 = vdwg.mxu0
        %v4291 = vmax.f32 %v4244, 0.0
        %v4292 = vmax.f32 %v4247, 0.0
        %v4293 = vmax.f32 %v4250, 0.0
        %v4294 = vmax.f32 %v4253, 0.0
        %v4295 = vmax.f32 %v4256, 0.0
        %v4296 = vmax.f32 %v4259, 0.0
        %v4297 = vmax.f32 %v4262, 0.0
        %v4298 = vmax.f32 %v4265, 0.0
        %v4299 = vmax.f32 %v4268, 0.0
        %v4300 = vmax.f32 %v4271, 0.0
        %v4301 = vmax.f32 %v4274, 0.0
        %v4302 = vmax.f32 %v4277, 0.0
        %v4303 = vmax.f32 %v4280, 0.0
        %v4304 = vmax.f32 %v4283, 0.0
        %v4305 = vmax.f32 %v4286, 0.0
        %v4306 = vmax.f32 %v4289, 0.0
        %4308 = vset.pattern.permute.xlu0 0
        %4309 = vperm.xlu0 %4308, %v4172
        %v4310 = vpop.permute.xlu0 %4309
        %v4313 = vsel %vm1778, %v4171, 0
        %v4316 = vsel %vm1778, %v4291, 0
        %v4319 = vsel %vm1778, %v4292, 0
        %v4322 = vsel %vm1778, %v4293, 0
        %v4325 = vsel %vm1778, %v4294, 0
        %v4328 = vsel %vm1778, %v4295, 0
        %v4331 = vsel %vm1778, %v4296, 0
        %v4334 = vsel %vm1778, %v4297, 0
        %v4337 = vsel %vm1778, %v4298, 0
        %v4340 = vsel %vm1778, %v4299, 0
        %v4343 = vsel %vm1778, %v4300, 0
        %v4346 = vsel %vm1778, %v4301, 0
        %v4349 = vsel %vm1778, %v4302, 0
        %v4352 = vsel %vm1778, %v4303, 0
        %v4355 = vsel %vm1778, %v4304, 0
        %v4358 = vsel %vm1778, %v4305, 0
        %v4361 = vsel %vm1778, %v4306, 0
        %4363 = vmatpush.xpose.msra.mxu0 %v4361
        %4364 = vmatpush.xpose.msra.mxu0 %v4358
        %4365 = vmatpush.xpose.msra.mxu0 %v4355
        %4366 = vmatpush.xpose.msra.mxu0 %v4352
        %4367 = vmatpush.xpose.msra.mxu0 %v4349
        %4368 = vmatpush.xpose.msra.mxu0 %v4346
        %4369 = vmatpush.xpose.msra.mxu0 %v4343
        %4370 = vmatpush.xpose.msra.mxu0 %v4340
        %4371 = vmatpush.xpose.msra.mxu0 %v4337
        %4372 = vmatpush.xpose.msra.mxu0 %v4334
        %4373 = vmatpush.xpose.msra.mxu0 %v4331
        %4374 = vmatpush.xpose.msra.mxu0 %v4328
        %4375 = vmatpush.xpose.msra.mxu0 %v4325
        %4376 = vmatpush.xpose.msra.mxu0 %v4322
        %4377 = vmatpush.xpose.msra.mxu0 %v4319
        %4378 = vmatpush.xpose.msra.mxu0 %v4316
        %4379 = vmatmul.f32.gmra.mxu0 %v4313
        %v4380 = vpop.f32.mrf.mxu0
        %v4381 = vadd.f32 %v4310, %v4380
        %4382 = vdwg.mxu0
        %4383 = vst [vmem:[%s271] sm:$0x1] %v4381
        %s4384 = sand.u32 %s181, 1
        %s4385 = scalar_lea.sflag [#allocation3], %s4384
        %s4386 = sand.u32 %s181, 1
        %s4387 = scalar_lea.vmem [#allocation2], %s4386
        // Predicated region
        $region49: #{tpu_custom_call.1} parent=47 // pred_check
          %p4388 = pneg %p191
        $region50: #{tpu_custom_call.1} parent=47 // pred_check_branch
          %4390 = sbr.rel (%p4388) target = $region52
        $region51: #{tpu_custom_call.1} parent=47 // pred_region
          %4392 = vsyncadd %s4385, 0
          %s4393 = scalar_lea.hbm %s7, %s21
          %s4395 = sshll.u32 %s4387, 4
          %s4396 = int_to_ptr.vmem [resolvable:$true] %s4395
          %s4397 = sshll.u32 %s4393, 4
          %s4398 = int_to_ptr.hbm [resolvable:$true] %s4397
          %4400 = dma.vmem_to_hbm [thread:$0]  %s4396, 16, %s4398, %s4385
        $region52: #{tpu_custom_call.1} parent=47 // pred_fallthru
          _
      $region48: #{tpu_custom_call.1} parent=5 // pred_fallthru
        _
      %p4401 = scmp.le.s32.totalorder 2, %s16
      // Predicated region
      $region53: #{tpu_custom_call.1} parent=5 // pred_check
        %p4402 = pneg %p4401
      $region54: #{tpu_custom_call.1} parent=5 // pred_check_branch
        %4404 = sbr.rel (%p4402) target = $region56
      $region55: #{tpu_custom_call.1} parent=5 // pred_region
        %s4405 = ssub.s32 %s16, 2
        // Predicated region
        $region57: #{tpu_custom_call.1} parent=55 // pred_check
          %p4406 = pneg %p197
        $region58: #{tpu_custom_call.1} parent=55 // pred_check_branch
          %4408 = sbr.rel (%p4406) target = $region60
        $region59: #{tpu_custom_call.1} parent=55 // pred_region
          %s4409 = sand.u32 %s182, 1
          %s4410 = scalar_lea.sflag [#allocation3], %s4409
          %s4411 = sand.u32 %s182, 1
          %s4412 = scalar_lea.vmem [#allocation2], %s4411
          %4414 = dma.done %s4410, 16
        $region60: #{tpu_custom_call.1} parent=55 // pred_fallthru
          _
      $region56: #{tpu_custom_call.1} parent=5 // pred_fallthru
        _
    $region6: #{tpu_custom_call.1} parent=1 // loop_footer
      %s20 = sadd.s32 1, %s16
    $region7: #{tpu_custom_call.1} parent=1 // loop_footer_branch
      %15 = sbr.rel target = $region3
    $region8: #{tpu_custom_call.1} parent=1 // loop_exit
      _
    %4415 = vsyncpa [#allocation3], 1
    %s4416 = scalar_lea.sflag [#allocation3], 1
    %4417 = vsyncpa %s4416, 1

</llo_original>
